<compile_context>
chip_gen: v6e
topology: v6e:2x2x1
jax: 0.10.0
libtpu: 0.0.40
codegen_flags: <defaults>
</compile_context>

<pallas_src>
import functools

import jax
import jax.numpy as jnp
from jax.experimental import pallas as pl
from jax.experimental.pallas import tpu as pltpu

LANE = 128


def _round_up(x, m):
    return ((x + m - 1) // m) * m


# -----------------------------------------------------------------------------
# Pallas kernel 1a: single-shot (X @ W) + b with fused ReLU (K fits one tile).
# -----------------------------------------------------------------------------
def _mm_bias_single_kernel(x_ref, w_ref, b_ref, o_ref, *, activation):
    out = jnp.dot(x_ref[...], w_ref[...],
                  preferred_element_type=jnp.float32) + b_ref[...]
    if activation == "relu":
        out = jnp.maximum(out, 0.0)
    o_ref[...] = out


# -----------------------------------------------------------------------------
# Pallas kernel 1b: tiled (X @ W) + b with K-accumulation and fused ReLU.
# X/W tiles are bf16 (MXU-native), accumulate in an f32 VMEM scratch.
# -----------------------------------------------------------------------------
def _mm_bias_acc_kernel(x_ref, w_ref, b_ref, o_ref, acc_ref, *, activation):
    @pl.when(pl.program_id(1) == 0)
    def _():
        acc_ref[...] = jnp.zeros_like(acc_ref)

    acc_ref[...] += jnp.dot(x_ref[...], w_ref[...],
                            preferred_element_type=jnp.float32)

    @pl.when(pl.program_id(1) == pl.num_programs(1) - 1)
    def _():
        out = acc_ref[...] + b_ref[...]
        if activation == "relu":
            out = jnp.maximum(out, 0.0)
        o_ref[...] = out


def pallas_linear(x, wp, bp, n_out, activation=None):
    """x: [M, K] float, wp: [Kp, Np] bf16 (pre-padded), bp: [1, Np] f32.

    Returns [M, n_out] f32. Weight padding is static (done at init); the
    activation is padded at most once here.
    """
    M, K = x.shape
    Kp, Np = wp.shape
    assert K <= Kp and n_out <= Np

    Mp = _round_up(M, 8)
    TM = next(t for t in (512, 256, 128, 64, 32, 16, 8) if Mp % t == 0)
    TK = next(t for t in (512, 384, 256, 128) if Kp % t == 0)

    xb = x.astype(jnp.bfloat16)
    if (Mp, Kp) != (M, K):
        xb = jnp.zeros((Mp, Kp), jnp.bfloat16).at[:M, :K].set(xb)

    if Kp // TK == 1:
        # Whole K fits one tile: no accumulator scratch, no pl.when.
        kernel = functools.partial(_mm_bias_single_kernel, activation=activation)
        out = pl.pallas_call(
            kernel,
            out_shape=jax.ShapeDtypeStruct((Mp, Np), jnp.float32),
            grid=(Mp // TM,),
            in_specs=[
                pl.BlockSpec((TM, Kp), lambda i: (i, 0)),
                pl.BlockSpec((Kp, Np), lambda i: (0, 0)),
                pl.BlockSpec((1, Np), lambda i: (0, 0)),
            ],
            out_specs=pl.BlockSpec((TM, Np), lambda i: (i, 0)),
            compiler_params=pltpu.CompilerParams(
                dimension_semantics=("parallel",)),
        )(xb, wp, bp)
    else:
        kernel = functools.partial(_mm_bias_acc_kernel, activation=activation)
        out = pl.pallas_call(
            kernel,
            out_shape=jax.ShapeDtypeStruct((Mp, Np), jnp.float32),
            grid=(Mp // TM, Kp // TK),
            in_specs=[
                pl.BlockSpec((TM, TK), lambda i, k: (i, k)),
                pl.BlockSpec((TK, Np), lambda i, k: (k, 0)),
                pl.BlockSpec((1, Np), lambda i, k: (0, 0)),
            ],
            out_specs=pl.BlockSpec((TM, Np), lambda i, k: (i, 0)),
            scratch_shapes=[pltpu.VMEM((TM, Np), jnp.float32)],
            compiler_params=pltpu.CompilerParams(
                dimension_semantics=("parallel", "arbitrary")),
        )(xb, wp, bp)

    if (Mp, Np) == (M, n_out):
        return out
    return out[:M, :n_out]


# -----------------------------------------------------------------------------
# Pallas kernel 2: fused RPN tower.  One call:
#   3x3 conv (as im2col matmul, K-accumulated) + bias + ReLU
#   -> fused 1x1 cls|bbox head matmul + bias.
# The intermediate tower activation stays in VMEM (never written to HBM).
# -----------------------------------------------------------------------------
def _rpn_fused_kernel(x_ref, wc_ref, bc_ref, wh_ref, bh_ref, o_ref, acc_ref):
    @pl.when(pl.program_id(1) == 0)
    def _():
        acc_ref[...] = jnp.zeros_like(acc_ref)

    acc_ref[...] += jnp.dot(x_ref[...], wc_ref[...],
                            preferred_element_type=jnp.float32)

    @pl.when(pl.program_id(1) == pl.num_programs(1) - 1)
    def _():
        t = jnp.maximum(acc_ref[...] + bc_ref[...], 0.0)        # [TM, C2p]
        o_ref[...] = jnp.dot(t.astype(jnp.bfloat16), wh_ref[...],
                             preferred_element_type=jnp.float32) + bh_ref[...]


def rpn_fused(patches_flat, wc, bc, wh, bh, n_out):
    """patches_flat: [M, K] im2col patches of the feature map."""
    M, K = patches_flat.shape
    Kp, C2p = wc.shape
    OUTp = wh.shape[1]
    assert K <= Kp and n_out <= OUTp

    Mp = _round_up(M, 8)
    TM = next(t for t in (512, 256, 128, 64, 32, 16, 8) if Mp % t == 0)
    TK = next(t for t in (512, 384, 256, 128) if Kp % t == 0)

    xb = patches_flat.astype(jnp.bfloat16)
    if (Mp, Kp) != (M, K):
        xb = jnp.zeros((Mp, Kp), jnp.bfloat16).at[:M, :K].set(xb)

    out = pl.pallas_call(
        _rpn_fused_kernel,
        out_shape=jax.ShapeDtypeStruct((Mp, OUTp), jnp.float32),
        grid=(Mp // TM, Kp // TK),
        in_specs=[
            pl.BlockSpec((TM, TK), lambda i, k: (i, k)),
            pl.BlockSpec((TK, C2p), lambda i, k: (k, 0)),
            pl.BlockSpec((1, C2p), lambda i, k: (0, 0)),
            pl.BlockSpec((C2p, OUTp), lambda i, k: (0, 0)),
            pl.BlockSpec((1, OUTp), lambda i, k: (0, 0)),
        ],
        out_specs=pl.BlockSpec((TM, OUTp), lambda i, k: (i, 0)),
        scratch_shapes=[pltpu.VMEM((TM, C2p), jnp.float32)],
        compiler_params=pltpu.CompilerParams(
            dimension_semantics=("parallel", "arbitrary")),
    )(xb, wc, bc, wh, bh)
    return out[:M, :n_out]


# -----------------------------------------------------------------------------
# Pallas kernel 3: fused ROI head.  Per image: box-mask average pool (as a
# matmul), fc1+ReLU, fc2+ReLU, concatenated cls/bbox head — one kernel call.
# -----------------------------------------------------------------------------
def _roi_head_kernel(mask_ref, feat_ref, w1_ref, b1_ref, w2_ref, b2_ref,
                     w3_ref, b3_ref, o_ref):
    pooled = jnp.dot(mask_ref[...], feat_ref[...],
                     preferred_element_type=jnp.float32)           # [R, Cp]
    h = jnp.dot(pooled.astype(jnp.bfloat16), w1_ref[...],
                preferred_element_type=jnp.float32) + b1_ref[...]
    h = jnp.maximum(h, 0.0)
    h = jnp.dot(h.astype(jnp.bfloat16), w2_ref[...],
                preferred_element_type=jnp.float32) + b2_ref[...]
    h = jnp.maximum(h, 0.0)
    o_ref[...] = jnp.dot(h.astype(jnp.bfloat16), w3_ref[...],
                         preferred_element_type=jnp.float32) + b3_ref[...]


# -----------------------------------------------------------------------------
# Parameter initialization (deterministic, synthetic) with static padding.
# -----------------------------------------------------------------------------
def _prep_linear(w, b):
    """w: [K, N], b: [N] -> (wp [Kp, Np] bf16, bp [1, Np] f32), padded once."""
    K, N = w.shape
    Kp, Np = _round_up(K, LANE), _round_up(N, LANE)
    wp = jnp.zeros((Kp, Np), jnp.bfloat16).at[:K, :N].set(w.astype(jnp.bfloat16))
    bp = jnp.zeros((1, Np), jnp.float32).at[0, :N].set(b.astype(jnp.float32))
    return wp, bp


def _prep_conv(w, b):
    """w: [Cout, Cin, kh, kw] -> matmul form [Cin*kh*kw, Cout], then pad."""
    cout = w.shape[0]
    return _prep_linear(w.reshape(cout, -1).T, b)


def init_params(key):
    def w_init(k, shape, scale=0.05):
        return scale * jax.random.normal(k, shape, dtype=jnp.float32)

    keys = jax.random.split(key, 16)
    C1, C2, HID, A, NCLS = 16, 32, 64, 3, 2

    bb1_w, bb1_b = w_init(keys[0], (C1, 3, 3, 3)), jnp.zeros((C1,), jnp.float32)
    bb2_w, bb2_b = w_init(keys[1], (C2, C1, 3, 3)), jnp.zeros((C2,), jnp.float32)
    rpn_conv_w = w_init(keys[2], (C2, C2, 3, 3))
    rpn_conv_b = jnp.zeros((C2,), jnp.float32)
    rpn_cls_w = w_init(keys[3], (A, C2, 1, 1))
    rpn_cls_b = jnp.zeros((A,), jnp.float32)
    rpn_bbox_w = w_init(keys[4], (4 * A, C2, 1, 1))
    rpn_bbox_b = jnp.zeros((4 * A,), jnp.float32)
    fc1_w, fc1_b = w_init(keys[5], (C2, HID)), jnp.zeros((HID,), jnp.float32)
    fc2_w, fc2_b = w_init(keys[6], (HID, HID)), jnp.zeros((HID,), jnp.float32)
    cls_w, cls_b = w_init(keys[7], (HID, NCLS)), jnp.zeros((NCLS,), jnp.float32)
    bbox_w = w_init(keys[8], (HID, 4 * NCLS))
    bbox_b = jnp.zeros((4 * NCLS,), jnp.float32)

    params = {
        "bb_conv1": _prep_conv(bb1_w, bb1_b),
        "bb_conv2": _prep_conv(bb2_w, bb2_b),
        "rpn_conv": _prep_conv(rpn_conv_w, rpn_conv_b),
        # RPN cls + bbox 1x1 heads fused into a single N-concatenated matmul.
        "rpn_head": _prep_linear(
            jnp.concatenate([rpn_cls_w.reshape(A, C2).T,
                             rpn_bbox_w.reshape(4 * A, C2).T], axis=1),
            jnp.concatenate([rpn_cls_b, rpn_bbox_b])),
        "roi_fc1": _prep_linear(fc1_w, fc1_b),
        "roi_fc2": _prep_linear(fc2_w, fc2_b),
        # ROI cls + bbox heads fused into one matmul.
        "roi_out": _prep_linear(jnp.concatenate([cls_w, bbox_w], axis=1),
                                jnp.concatenate([cls_b, bbox_b])),
    }
    meta = dict(C1=C1, C2=C2, HID=HID, A=A, NCLS=NCLS,
                anchor_sizes=(4.0, 8.0, 16.0), stride=2, post_topk=8)
    return params, meta


# -----------------------------------------------------------------------------
# Conv2d (NHWC, channel-last end-to-end) via im2col + Pallas matmul.
# -----------------------------------------------------------------------------
def _im2col(x, kh, kw, stride, padding):
    # TODO(synk): patch feature ordering assumed (c, kh, kw)-major to match
    # PyTorch weight.reshape(cout, -1); verify if real PyTorch weights are loaded.
    return jax.lax.conv_general_dilated_patches(
        x, filter_shape=(kh, kw), window_strides=(stride, stride),
        padding=((padding, padding), (padding, padding)),
        dimension_numbers=("NHWC", "HWIO", "NHWC"))     # [N, Ho, Wo, C*kh*kw]


def conv2d_nhwc(x, wp, bp, cout, stride=1, padding=1, activation=None, kh=3, kw=3):
    """x: [N,H,W,C] -> [N,Ho,Wo,cout]; wp/bp pre-padded matmul weights."""
    N = x.shape[0]
    patches = _im2col(x, kh, kw, stride, padding)
    _, Ho, Wo, CKK = patches.shape
    out = pallas_linear(patches.reshape(N * Ho * Wo, CKK), wp, bp, cout,
                        activation=activation)
    return out.reshape(N, Ho, Wo, cout)


# -----------------------------------------------------------------------------
# Backbone
# -----------------------------------------------------------------------------
def backbone(params, meta, images_nchw):
    # Single NCHW -> NHWC permute of the (tiny, 3-channel) input; everything
    # downstream stays channel-last / lane-dense.
    x = jnp.transpose(images_nchw, (0, 2, 3, 1))
    x = conv2d_nhwc(x, *params["bb_conv1"], cout=meta["C1"], stride=1,
                    padding=1, activation="relu")
    x = conv2d_nhwc(x, *params["bb_conv2"], cout=meta["C2"], stride=2,
                    padding=1, activation="relu")
    return x  # [N, H/2, W/2, C2] NHWC


# -----------------------------------------------------------------------------
# Proposal generator (RPN)
# -----------------------------------------------------------------------------
def make_anchors(Hf, Wf, stride, sizes):
    ys = (jnp.arange(Hf, dtype=jnp.float32) + 0.5) * stride
    xs = (jnp.arange(Wf, dtype=jnp.float32) + 0.5) * stride
    cy, cx = jnp.meshgrid(ys, xs, indexing="ij")              # [Hf, Wf]
    half = jnp.asarray(sizes, jnp.float32) / 2.0              # [A]
    x1 = cx[..., None] - half
    y1 = cy[..., None] - half
    x2 = cx[..., None] + half
    y2 = cy[..., None] + half
    return jnp.stack([x1, y1, x2, y2], axis=-1).reshape(-1, 4)   # [(Hf*Wf*A), 4]


def decode_boxes(anchors, deltas):
    wa = anchors[:, 2] - anchors[:, 0]
    ha = anchors[:, 3] - anchors[:, 1]
    cxa = anchors[:, 0] + 0.5 * wa
    cya = anchors[:, 1] + 0.5 * ha
    dx, dy, dw, dh = deltas[..., 0], deltas[..., 1], deltas[..., 2], deltas[..., 3]
    cx = dx * wa + cxa
    cy = dy * ha + cya
    w = jnp.exp(jnp.clip(dw, -4.0, 4.0)) * wa
    h = jnp.exp(jnp.clip(dh, -4.0, 4.0)) * ha
    return jnp.stack([cx - 0.5 * w, cy - 0.5 * h, cx + 0.5 * w, cy + 0.5 * h],
                     axis=-1)


def proposal_generator(params, meta, image_hw, features):
    N, Hf, Wf, _ = features.shape
    H_img, W_img = image_hw
    A = meta["A"]

    # Fused: 3x3 conv tower + ReLU + concatenated 1x1 cls/bbox heads in ONE
    # pallas_call; the tower activation never round-trips to HBM.
    patches = _im2col(features, 3, 3, stride=1, padding=1)     # [N,Hf,Wf,C2*9]
    wc, bc = params["rpn_conv"]
    wh, bh = params["rpn_head"]
    head = rpn_fused(patches.reshape(N * Hf * Wf, patches.shape[-1]),
                     wc, bc, wh, bh, n_out=5 * A)              # [N*Hf*Wf, 5A]
    logits = head[:, :A].reshape(N, Hf * Wf * A)
    deltas = head[:, A:5 * A].reshape(N, Hf * Wf * A, 4)

    anchors = make_anchors(Hf, Wf, meta["stride"], meta["anchor_sizes"])
    boxes = decode_boxes(anchors, deltas)
    boxes = jnp.stack([
        jnp.clip(boxes[..., 0], 0.0, W_img - 1.0),
        jnp.clip(boxes[..., 1], 0.0, H_img - 1.0),
        jnp.clip(boxes[..., 2], 0.0, W_img - 1.0),
        jnp.clip(boxes[..., 3], 0.0, H_img - 1.0),
    ], axis=-1)

    # TODO(synk): NMS has no clean Pallas equivalent; objectness top-k only.
    k = meta["post_topk"]
    top_scores, top_idx = jax.lax.top_k(logits, k)
    top_boxes = jnp.take_along_axis(boxes, top_idx[..., None], axis=1)  # [N,k,4]
    return {"boxes": top_boxes, "objectness": jax.nn.sigmoid(top_scores)}, None


# -----------------------------------------------------------------------------
# ROI heads (batched, single fused pallas_call)
# -----------------------------------------------------------------------------
def roi_box_masks(boxes, Hf, Wf, stride):
    """boxes [N,R,4] in image coords -> normalized membership mask [N,R,Hf*Wf]."""
    ys = (jnp.arange(Hf, dtype=jnp.float32) + 0.5) * stride
    xs = (jnp.arange(Wf, dtype=jnp.float32) + 0.5) * stride
    cy, cx = jnp.meshgrid(ys, xs, indexing="ij")
    cx = cx.reshape(-1)
    cy = cy.reshape(-1)
    x1, y1, x2, y2 = (boxes[..., i:i + 1] for i in range(4))   # [N,R,1]
    inside = ((cx >= x1) & (cx <= x2) &
              (cy >= y1) & (cy <= y2)).astype(jnp.float32)     # [N,R,HW]
    return inside / jnp.maximum(inside.sum(-1, keepdims=True), 1.0)


def roi_heads(params, meta, features, proposals):
    # TODO(synk): ROIAlign bilinear sampling has no clean Pallas equivalent;
    # approximated by a box-mask average pool fused into the head kernel.
    N, Hf, Wf, C = features.shape
    HW = Hf * Wf
    boxes = proposals["boxes"]                  # [N, R, 4]
    R = boxes.shape[1]
    Rp = _round_up(R, 8)
    NCLS = meta["NCLS"]

    w1, b1 = params["roi_fc1"]
    w2, b2 = params["roi_fc2"]
    w3, b3 = params["roi_out"]
    Cp, HIDp = w1.shape
    OUTp = w3.shape[1]
    HWp = _round_up(HW, LANE)

    masks = roi_box_masks(boxes, Hf, Wf, meta["stride"])       # [N,R,HW] f32
    masks_p = jnp.zeros((N, Rp, HWp), jnp.bfloat16).at[:, :R, :HW].set(
        masks.astype(jnp.bfloat16))
    feat_p = jnp.zeros((N, HWp, Cp), jnp.bfloat16).at[:, :HW, :C].set(
        features.reshape(N, HW, C).astype(jnp.bfloat16))

    out = pl.pallas_call(
        _roi_head_kernel,
        out_shape=jax.ShapeDtypeStruct((N, Rp, OUTp), jnp.float32),
        grid=(N,),
        in_specs=[
            pl.BlockSpec((None, Rp, HWp), lambda n: (n, 0, 0)),
            pl.BlockSpec((None, HWp, Cp), lambda n: (n, 0, 0)),
            pl.BlockSpec((Cp, HIDp), lambda n: (0, 0)),
            pl.BlockSpec((1, HIDp), lambda n: (0, 0)),
            pl.BlockSpec((HIDp, HIDp), lambda n: (0, 0)),
            pl.BlockSpec((1, HIDp), lambda n: (0, 0)),
            pl.BlockSpec((HIDp, OUTp), lambda n: (0, 0)),
            pl.BlockSpec((1, OUTp), lambda n: (0, 0)),
        ],
        out_specs=pl.BlockSpec((None, Rp, OUTp), lambda n: (n, 0, 0)),
        compiler_params=pltpu.CompilerParams(dimension_semantics=("parallel",)),
    )(masks_p, feat_p, w1, b1, w2, b2, w3, b3)

    out = out[:, :R, :]
    cls_logits = out[..., :NCLS]
    bbox_pred = out[..., NCLS:NCLS + 4 * NCLS]
    probs = jax.nn.softmax(cls_logits, axis=-1)
    return {
        "scores": jnp.max(probs, axis=-1),       # [N, R]
        "labels": jnp.argmax(probs, axis=-1),    # [N, R]
        "bbox_deltas": bbox_pred,                # [N, R, 4*NCLS]
    }


# -----------------------------------------------------------------------------
# GeneralizedRCNN forward (inference path)
# -----------------------------------------------------------------------------
def rcnn_infer(params, meta, images):
    """Device-side forward (jit-compiled): backbone -> RPN -> ROI heads."""
    features = backbone(params, meta, images)
    proposals, _proposal_losses = proposal_generator(
        params, meta, (images.shape[2], images.shape[3]), features)
    roi = roi_heads(params, meta, features, proposals)
    return proposals, roi


def generalized_rcnn_forward(params, meta, images):
    infer = jax.jit(functools.partial(rcnn_infer, meta=jax.tree_util.Partial))  # placeholder avoided
    # meta is a plain python dict of static config; close over it instead.
    infer = jax.jit(lambda p, im: rcnn_infer(p, meta, im))
    proposals, roi = infer(params, images)

    N, R = proposals["boxes"].shape[:2]
    result_global = []
    for n in range(N):
        result_global.append({
            "boxes": proposals["boxes"][n],
            "scores": roi["scores"][n],
            "labels": roi["labels"][n],
            "bbox_deltas": roi["bbox_deltas"][n],
        })
    # `.to(cpu_device)` analogue
    global_prediction = [jax.tree_util.tree_map(jax.device_get, obj)
                         for obj in result_global]
    word_result_list = [{"seq_word": ""} for _ in range(N * R)]
    return {"global_prediction": global_prediction,
            "word_result_list": word_result_list}


if __name__ == "__main__":
    key = jax.random.PRNGKey(0)
    k_param, k_img = jax.random.split(key)
    params, meta = init_params(k_param)

    # images: batch=2, channels=3 (RGB), spatial=16x16, NCHW (PyTorch layout)
    images = jax.random.normal(k_img, (2, 3, 16, 16), dtype=jnp.float32)

    prediction_dict = generalized_rcnn_forward(params, meta, images)

    # block on all device outputs
    for obj in prediction_dict["global_prediction"]:
        for v in obj.values():
            jax.block_until_ready(jnp.asarray(v))

    assert len(prediction_dict["global_prediction"]) == 2
    assert prediction_dict["global_prediction"][0]["boxes"].shape == (meta["post_topk"], 4)
    assert len(prediction_dict["word_result_list"]) == 2 * meta["post_topk"]
    print("KERNEL_OK")
</pallas_src>

<mosaic_0001>
module attributes {stable_mosaic.version = 11 : i64} {
  func.func @_mm_bias_single_kernel(%arg0: i32, %arg1: memref<512x128xbf16, #tpu.memory_space<vmem>>, %arg2: memref<128x128xbf16, #tpu.memory_space<vmem>>, %arg3: memref<1x128xf32, #tpu.memory_space<vmem>>, %arg4: memref<512x128xf32, #tpu.memory_space<vmem>>) attributes {dimension_semantics = [#tpu.dimension_semantics<parallel>], iteration_bounds = array<i64: 1>, scalar_prefetch = 0 : i64, scratch_operands = 0 : i64, tpu.core_type = #tpu.core_type<tc>, window_params = [{transform_indices = @transform_0, window_bounds = array<i64: 512, 128>}, {pipeline_mode = #tpu.pipeline_mode<synchronous>, transform_indices = @transform_1, window_bounds = array<i64: 128, 128>}, {pipeline_mode = #tpu.pipeline_mode<synchronous>, transform_indices = @transform_2, window_bounds = array<i64: 1, 128>}, {transform_indices = @transform_3, window_bounds = array<i64: 512, 128>}]} {
    %c0 = arith.constant 0 : index
    %c0_0 = arith.constant 0 : index
    %0 = vector.load %arg1[%c0, %c0_0] : memref<512x128xbf16, #tpu.memory_space<vmem>>, vector<512x128xbf16>
    %c0_1 = arith.constant 0 : index
    %c0_2 = arith.constant 0 : index
    %1 = vector.load %arg2[%c0_1, %c0_2] : memref<128x128xbf16, #tpu.memory_space<vmem>>, vector<128x128xbf16>
    %cst = arith.constant dense<0.000000e+00> : vector<512x128xf32>
    %2 = tpu.matmul %0, %1, %cst {dimension_numbers = #tpu.dot_dimension_numbers<[1], [0], [0], [1], [0, 0, 1, 1], [], []>} : vector<512x128xbf16>, vector<128x128xbf16>, vector<512x128xf32> -> vector<512x128xf32>
    %c0_3 = arith.constant 0 : index
    %c0_4 = arith.constant 0 : index
    %3 = vector.load %arg3[%c0_3, %c0_4] : memref<1x128xf32, #tpu.memory_space<vmem>>, vector<1x128xf32>
    %4 = vector.broadcast %3 : vector<1x128xf32> to vector<512x128xf32>
    %5 = arith.addf %2, %4 : vector<512x128xf32>
    %cst_5 = arith.constant 0.000000e+00 : f32
    %6 = vector.broadcast %cst_5 : f32 to vector<512x128xf32>
    %7 = arith.maximumf %5, %6 : vector<512x128xf32>
    %c0_6 = arith.constant 0 : index
    %c0_7 = arith.constant 0 : index
    %8 = vector.load %arg4[%c0_6, %c0_7] : memref<512x128xf32, #tpu.memory_space<vmem>>, vector<512x128xf32>
    tpu.vector_store %arg4[%c0_6, %c0_7], %7 {strides = array<i32>} : memref<512x128xf32, #tpu.memory_space<vmem>>, vector<512x128xf32>,
    return
  }
  func.func @transform_0(%arg0: i32) -> (i32, i32) {
    %c0_i32 = arith.constant 0 : i32
    %c0_i32_0 = arith.constant 0 : i32
    return %arg0, %c0_i32 : i32, i32
  }
  func.func @transform_1(%arg0: i32) -> (i32, i32) {
    %c0_i32 = arith.constant 0 : i32
    %c0_i32_0 = arith.constant 0 : i32
    %c0_i32_1 = arith.constant 0 : i32
    return %c0_i32, %c0_i32_0 : i32, i32
  }
  func.func @transform_2(%arg0: i32) -> (i32, i32) {
    %c0_i32 = arith.constant 0 : i32
    %c0_i32_0 = arith.constant 0 : i32
    %c0_i32_1 = arith.constant 0 : i32
    return %c0_i32, %c0_i32_0 : i32, i32
  }
  func.func @transform_3(%arg0: i32) -> (i32, i32) {
    %c0_i32 = arith.constant 0 : i32
    %c0_i32_0 = arith.constant 0 : i32
    return %arg0, %c0_i32 : i32, i32
  }
}

module attributes {stable_mosaic.version = 11 : i64} {
  func.func @_mm_bias_single_kernel(%arg0: i32, %arg1: memref<128x256xbf16, #tpu.memory_space<vmem>>, %arg2: memref<256x128xbf16, #tpu.memory_space<vmem>>, %arg3: memref<1x128xf32, #tpu.memory_space<vmem>>, %arg4: memref<128x128xf32, #tpu.memory_space<vmem>>) attributes {dimension_semantics = [#tpu.dimension_semantics<parallel>], iteration_bounds = array<i64: 1>, scalar_prefetch = 0 : i64, scratch_operands = 0 : i64, tpu.core_type = #tpu.core_type<tc>, window_params = [{transform_indices = @transform_0, window_bounds = array<i64: 128, 256>}, {pipeline_mode = #tpu.pipeline_mode<synchronous>, transform_indices = @transform_1, window_bounds = array<i64: 256, 128>}, {pipeline_mode = #tpu.pipeline_mode<synchronous>, transform_indices = @transform_2, window_bounds = array<i64: 1, 128>}, {transform_indices = @transform_3, window_bounds = array<i64: 128, 128>}]} {
    %c0 = arith.constant 0 : index
    %c0_0 = arith.constant 0 : index
    %0 = vector.load %arg1[%c0, %c0_0] : memref<128x256xbf16, #tpu.memory_space<vmem>>, vector<128x256xbf16>
    %c0_1 = arith.constant 0 : index
    %c0_2 = arith.constant 0 : index
    %1 = vector.load %arg2[%c0_1, %c0_2] : memref<256x128xbf16, #tpu.memory_space<vmem>>, vector<256x128xbf16>
    %cst = arith.constant dense<0.000000e+00> : vector<128x128xf32>
    %2 = tpu.matmul %0, %1, %cst {dimension_numbers = #tpu.dot_dimension_numbers<[1], [0], [0], [1], [0, 0, 1, 1], [], []>} : vector<128x256xbf16>, vector<256x128xbf16>, vector<128x128xf32> -> vector<128x128xf32>
    %c0_3 = arith.constant 0 : index
    %c0_4 = arith.constant 0 : index
    %3 = vector.load %arg3[%c0_3, %c0_4] : memref<1x128xf32, #tpu.memory_space<vmem>>, vector<1x128xf32>
    %4 = vector.broadcast %3 : vector<1x128xf32> to vector<128x128xf32>
    %5 = arith.addf %2, %4 : vector<128x128xf32>
    %cst_5 = arith.constant 0.000000e+00 : f32
    %6 = vector.broadcast %cst_5 : f32 to vector<128x128xf32>
    %7 = arith.maximumf %5, %6 : vector<128x128xf32>
    %c0_6 = arith.constant 0 : index
    %c0_7 = arith.constant 0 : index
    %8 = vector.load %arg4[%c0_6, %c0_7] : memref<128x128xf32, #tpu.memory_space<vmem>>, vector<128x128xf32>
    tpu.vector_store %arg4[%c0_6, %c0_7], %7 {strides = array<i32>} : memref<128x128xf32, #tpu.memory_space<vmem>>, vector<128x128xf32>,
    return
  }
  func.func @transform_0(%arg0: i32) -> (i32, i32) {
    %c0_i32 = arith.constant 0 : i32
    %c0_i32_0 = arith.constant 0 : i32
    return %arg0, %c0_i32 : i32, i32
  }
  func.func @transform_1(%arg0: i32) -> (i32, i32) {
    %c0_i32 = arith.constant 0 : i32
    %c0_i32_0 = arith.constant 0 : i32
    %c0_i32_1 = arith.constant 0 : i32
    return %c0_i32, %c0_i32_0 : i32, i32
  }
  func.func @transform_2(%arg0: i32) -> (i32, i32) {
    %c0_i32 = arith.constant 0 : i32
    %c0_i32_0 = arith.constant 0 : i32
    %c0_i32_1 = arith.constant 0 : i32
    return %c0_i32, %c0_i32_0 : i32, i32
  }
  func.func @transform_3(%arg0: i32) -> (i32, i32) {
    %c0_i32 = arith.constant 0 : i32
    %c0_i32_0 = arith.constant 0 : i32
    return %arg0, %c0_i32 : i32, i32
  }
}

module attributes {stable_mosaic.version = 11 : i64} {
  func.func @_rpn_fused_kernel(%arg0: i32, %arg1: i32, %arg2: memref<128x384xbf16, #tpu.memory_space<vmem>>, %arg3: memref<384x128xbf16, #tpu.memory_space<vmem>>, %arg4: memref<1x128xf32, #tpu.memory_space<vmem>>, %arg5: memref<128x128xbf16, #tpu.memory_space<vmem>>, %arg6: memref<1x128xf32, #tpu.memory_space<vmem>>, %arg7: memref<128x128xf32, #tpu.memory_space<vmem>>, %arg8: memref<128x128xf32, #tpu.memory_space<vmem>>) attributes {dimension_semantics = [#tpu.dimension_semantics<parallel>, #tpu.dimension_semantics<arbitrary>], iteration_bounds = array<i64: 1, 1>, scalar_prefetch = 0 : i64, scratch_operands = 1 : i64, tpu.core_type = #tpu.core_type<tc>, window_params = [{transform_indices = @transform_0, window_bounds = array<i64: 128, 384>}, {transform_indices = @transform_1, window_bounds = array<i64: 384, 128>}, {pipeline_mode = #tpu.pipeline_mode<synchronous>, transform_indices = @transform_2, window_bounds = array<i64: 1, 128>}, {pipeline_mode = #tpu.pipeline_mode<synchronous>, transform_indices = @transform_3, window_bounds = array<i64: 128, 128>}, {pipeline_mode = #tpu.pipeline_mode<synchronous>, transform_indices = @transform_4, window_bounds = array<i64: 1, 128>}, {transform_indices = @transform_5, window_bounds = array<i64: 128, 128>}]} {
    %c0_i32 = arith.constant 0 : i32
    %0 = arith.cmpi eq, %arg1, %c0_i32 : i32
    %1 = arith.extui %0 : i1 to i32
    %c0_i32_0 = arith.constant 0 : i32
    %2 = arith.cmpi ne, %1, %c0_i32_0 : i32
    scf.if %2 {
      %cst_10 = arith.constant 0.000000e+00 : f32
      %12 = vector.broadcast %cst_10 : f32 to vector<128x128xf32>
      %c0_11 = arith.constant 0 : index
      %c0_12 = arith.constant 0 : index
      %13 = vector.load %arg8[%c0_11, %c0_12] : memref<128x128xf32, #tpu.memory_space<vmem>>, vector<128x128xf32>
      tpu.vector_store %arg8[%c0_11, %c0_12], %12 {strides = array<i32>} : memref<128x128xf32, #tpu.memory_space<vmem>>, vector<128x128xf32>,
    } else {
    }
    %c0 = arith.constant 0 : index
    %c0_1 = arith.constant 0 : index
    %3 = vector.load %arg8[%c0, %c0_1] : memref<128x128xf32, #tpu.memory_space<vmem>>, vector<128x128xf32>
    %c0_2 = arith.constant 0 : index
    %c0_3 = arith.constant 0 : index
    %4 = vector.load %arg2[%c0_2, %c0_3] : memref<128x384xbf16, #tpu.memory_space<vmem>>, vector<128x384xbf16>
    %c0_4 = arith.constant 0 : index
    %c0_5 = arith.constant 0 : index
    %5 = vector.load %arg3[%c0_4, %c0_5] : memref<384x128xbf16, #tpu.memory_space<vmem>>, vector<384x128xbf16>
    %cst = arith.constant dense<0.000000e+00> : vector<128x128xf32>
    %6 = tpu.matmul %4, %5, %cst {dimension_numbers = #tpu.dot_dimension_numbers<[1], [0], [0], [1], [0, 0, 1, 1], [], []>} : vector<128x384xbf16>, vector<384x128xbf16>, vector<128x128xf32> -> vector<128x128xf32>
    %7 = arith.addf %3, %6 : vector<128x128xf32>
    %c0_6 = arith.constant 0 : index
    %c0_7 = arith.constant 0 : index
    %8 = vector.load %arg8[%c0_6, %c0_7] : memref<128x128xf32, #tpu.memory_space<vmem>>, vector<128x128xf32>
    tpu.vector_store %arg8[%c0_6, %c0_7], %7 {strides = array<i32>} : memref<128x128xf32, #tpu.memory_space<vmem>>, vector<128x128xf32>,
    %c0_i32_8 = arith.constant 0 : i32
    %9 = arith.cmpi eq, %arg1, %c0_i32_8 : i32
    %10 = arith.extui %9 : i1 to i32
    %c0_i32_9 = arith.constant 0 : i32
    %11 = arith.cmpi ne, %10, %c0_i32_9 : i32
    scf.if %11 {
      %c0_10 = arith.constant 0 : index
      %c0_11 = arith.constant 0 : index
      %12 = vector.load %arg8[%c0_10, %c0_11] : memref<128x128xf32, #tpu.memory_space<vmem>>, vector<128x128xf32>
      %c0_12 = arith.constant 0 : index
      %c0_13 = arith.constant 0 : index
      %13 = vector.load %arg4[%c0_12, %c0_13] : memref<1x128xf32, #tpu.memory_space<vmem>>, vector<1x128xf32>
      %14 = vector.broadcast %13 : vector<1x128xf32> to vector<128x128xf32>
      %15 = arith.addf %12, %14 : vector<128x128xf32>
      %cst_14 = arith.constant 0.000000e+00 : f32
      %16 = vector.broadcast %cst_14 : f32 to vector<128x128xf32>
      %17 = arith.maximumf %15, %16 : vector<128x128xf32>
      %18 = arith.truncf %17 : vector<128x128xf32> to vector<128x128xbf16>
      %c0_15 = arith.constant 0 : index
      %c0_16 = arith.constant 0 : index
      %19 = vector.load %arg5[%c0_15, %c0_16] : memref<128x128xbf16, #tpu.memory_space<vmem>>, vector<128x128xbf16>
      %cst_17 = arith.constant dense<0.000000e+00> : vector<128x128xf32>
      %20 = tpu.matmul %18, %19, %cst_17 {dimension_numbers = #tpu.dot_dimension_numbers<[1], [0], [0], [1], [0, 0, 1, 1], [], []>} : vector<128x128xbf16>, vector<128x128xbf16>, vector<128x128xf32> -> vector<128x128xf32>
      %c0_18 = arith.constant 0 : index
      %c0_19 = arith.constant 0 : index
      %21 = vector.load %arg6[%c0_18, %c0_19] : memref<1x128xf32, #tpu.memory_space<vmem>>, vector<1x128xf32>
      %22 = vector.broadcast %21 : vector<1x128xf32> to vector<128x128xf32>
      %23 = arith.addf %20, %22 : vector<128x128xf32>
      %c0_20 = arith.constant 0 : index
      %c0_21 = arith.constant 0 : index
      %24 = vector.load %arg7[%c0_20, %c0_21] : memref<128x128xf32, #tpu.memory_space<vmem>>, vector<128x128xf32>
      tpu.vector_store %arg7[%c0_20, %c0_21], %23 {strides = array<i32>} : memref<128x128xf32, #tpu.memory_space<vmem>>, vector<128x128xf32>,
    } else {
    }
    return
  }
  func.func @transform_0(%arg0: i32, %arg1: i32) -> (i32, i32) {
    %c0_i32 = arith.constant 0 : i32
    return %arg0, %arg1 : i32, i32
  }
  func.func @transform_1(%arg0: i32, %arg1: i32) -> (i32, i32) {
    %c0_i32 = arith.constant 0 : i32
    %c0_i32_0 = arith.constant 0 : i32
    return %arg1, %c0_i32 : i32, i32
  }
  func.func @transform_2(%arg0: i32, %arg1: i32) -> (i32, i32) {
    %c0_i32 = arith.constant 0 : i32
    %c0_i32_0 = arith.constant 0 : i32
    %c0_i32_1 = arith.constant 0 : i32
    return %c0_i32, %c0_i32_0 : i32, i32
  }
  func.func @transform_3(%arg0: i32, %arg1: i32) -> (i32, i32) {
    %c0_i32 = arith.constant 0 : i32
    %c0_i32_0 = arith.constant 0 : i32
    %c0_i32_1 = arith.constant 0 : i32
    return %c0_i32, %c0_i32_0 : i32, i32
  }
  func.func @transform_4(%arg0: i32, %arg1: i32) -> (i32, i32) {
    %c0_i32 = arith.constant 0 : i32
    %c0_i32_0 = arith.constant 0 : i32
    %c0_i32_1 = arith.constant 0 : i32
    return %c0_i32, %c0_i32_0 : i32, i32
  }
  func.func @transform_5(%arg0: i32, %arg1: i32) -> (i32, i32) {
    %c0_i32 = arith.constant 0 : i32
    %c0_i32_0 = arith.constant 0 : i32
    return %arg0, %c0_i32 : i32, i32
  }
}

module attributes {stable_mosaic.version = 11 : i64} {
  func.func @_roi_head_kernel(%arg0: i32, %arg1: memref<1x8x128xbf16, #tpu.memory_space<vmem>>, %arg2: memref<1x128x128xbf16, #tpu.memory_space<vmem>>, %arg3: memref<128x128xbf16, #tpu.memory_space<vmem>>, %arg4: memref<1x128xf32, #tpu.memory_space<vmem>>, %arg5: memref<128x128xbf16, #tpu.memory_space<vmem>>, %arg6: memref<1x128xf32, #tpu.memory_space<vmem>>, %arg7: memref<128x128xbf16, #tpu.memory_space<vmem>>, %arg8: memref<1x128xf32, #tpu.memory_space<vmem>>, %arg9: memref<1x8x128xf32, #tpu.memory_space<vmem>>) attributes {dimension_semantics = [#tpu.dimension_semantics<parallel>], iteration_bounds = array<i64: 2>, scalar_prefetch = 0 : i64, scratch_operands = 0 : i64, tpu.core_type = #tpu.core_type<tc>, window_params = [{transform_indices = @transform_0, window_bounds = array<i64: 1, 8, 128>}, {transform_indices = @transform_1, window_bounds = array<i64: 1, 128, 128>}, {pipeline_mode = #tpu.pipeline_mode<synchronous>, transform_indices = @transform_2, window_bounds = array<i64: 128, 128>}, {pipeline_mode = #tpu.pipeline_mode<synchronous>, transform_indices = @transform_3, window_bounds = array<i64: 1, 128>}, {pipeline_mode = #tpu.pipeline_mode<synchronous>, transform_indices = @transform_4, window_bounds = array<i64: 128, 128>}, {pipeline_mode = #tpu.pipeline_mode<synchronous>, transform_indices = @transform_5, window_bounds = array<i64: 1, 128>}, {pipeline_mode = #tpu.pipeline_mode<synchronous>, transform_indices = @transform_6, window_bounds = array<i64: 128, 128>}, {pipeline_mode = #tpu.pipeline_mode<synchronous>, transform_indices = @transform_7, window_bounds = array<i64: 1, 128>}, {transform_indices = @transform_8, window_bounds = array<i64: 1, 8, 128>}]} {
    %c0 = arith.constant 0 : index
    %c0_0 = arith.constant 0 : index
    %c0_1 = arith.constant 0 : index
    %0 = vector.load %arg1[%c0, %c0_0, %c0_1] : memref<1x8x128xbf16, #tpu.memory_space<vmem>>, vector<1x8x128xbf16>
    %1 = vector.shape_cast %0 : vector<1x8x128xbf16> to vector<8x128xbf16>
    %c0_2 = arith.constant 0 : index
    %c0_3 = arith.constant 0 : index
    %c0_4 = arith.constant 0 : index
    %2 = vector.load %arg2[%c0_2, %c0_3, %c0_4] : memref<1x128x128xbf16, #tpu.memory_space<vmem>>, vector<1x128x128xbf16>
    %3 = vector.shape_cast %2 : vector<1x128x128xbf16> to vector<128x128xbf16>
    %cst = arith.constant dense<0.000000e+00> : vector<8x128xf32>
    %4 = tpu.matmul %1, %3, %cst {dimension_numbers = #tpu.dot_dimension_numbers<[1], [0], [0], [1], [0, 0, 1, 1], [], []>} : vector<8x128xbf16>, vector<128x128xbf16>, vector<8x128xf32> -> vector<8x128xf32>
    %5 = arith.truncf %4 : vector<8x128xf32> to vector<8x128xbf16>
    %c0_5 = arith.constant 0 : index
    %c0_6 = arith.constant 0 : index
    %6 = vector.load %arg3[%c0_5, %c0_6] : memref<128x128xbf16, #tpu.memory_space<vmem>>, vector<128x128xbf16>
    %cst_7 = arith.constant dense<0.000000e+00> : vector<8x128xf32>
    %7 = tpu.matmul %5, %6, %cst_7 {dimension_numbers = #tpu.dot_dimension_numbers<[1], [0], [0], [1], [0, 0, 1, 1], [], []>} : vector<8x128xbf16>, vector<128x128xbf16>, vector<8x128xf32> -> vector<8x128xf32>
    %c0_8 = arith.constant 0 : index
    %c0_9 = arith.constant 0 : index
    %8 = vector.load %arg4[%c0_8, %c0_9] : memref<1x128xf32, #tpu.memory_space<vmem>>, vector<1x128xf32>
    %9 = vector.broadcast %8 : vector<1x128xf32> to vector<8x128xf32>
    %10 = arith.addf %7, %9 : vector<8x128xf32>
    %cst_10 = arith.constant 0.000000e+00 : f32
    %11 = vector.broadcast %cst_10 : f32 to vector<8x128xf32>
    %12 = arith.maximumf %10, %11 : vector<8x128xf32>
    %13 = arith.truncf %12 : vector<8x128xf32> to vector<8x128xbf16>
    %c0_11 = arith.constant 0 : index
    %c0_12 = arith.constant 0 : index
    %14 = vector.load %arg5[%c0_11, %c0_12] : memref<128x128xbf16, #tpu.memory_space<vmem>>, vector<128x128xbf16>
    %cst_13 = arith.constant dense<0.000000e+00> : vector<8x128xf32>
    %15 = tpu.matmul %13, %14, %cst_13 {dimension_numbers = #tpu.dot_dimension_numbers<[1], [0], [0], [1], [0, 0, 1, 1], [], []>} : vector<8x128xbf16>, vector<128x128xbf16>, vector<8x128xf32> -> vector<8x128xf32>
    %c0_14 = arith.constant 0 : index
    %c0_15 = arith.constant 0 : index
    %16 = vector.load %arg6[%c0_14, %c0_15] : memref<1x128xf32, #tpu.memory_space<vmem>>, vector<1x128xf32>
    %17 = vector.broadcast %16 : vector<1x128xf32> to vector<8x128xf32>
    %18 = arith.addf %15, %17 : vector<8x128xf32>
    %cst_16 = arith.constant 0.000000e+00 : f32
    %19 = vector.broadcast %cst_16 : f32 to vector<8x128xf32>
    %20 = arith.maximumf %18, %19 : vector<8x128xf32>
    %21 = arith.truncf %20 : vector<8x128xf32> to vector<8x128xbf16>
    %c0_17 = arith.constant 0 : index
    %c0_18 = arith.constant 0 : index
    %22 = vector.load %arg7[%c0_17, %c0_18] : memref<128x128xbf16, #tpu.memory_space<vmem>>, vector<128x128xbf16>
    %cst_19 = arith.constant dense<0.000000e+00> : vector<8x128xf32>
    %23 = tpu.matmul %21, %22, %cst_19 {dimension_numbers = #tpu.dot_dimension_numbers<[1], [0], [0], [1], [0, 0, 1, 1], [], []>} : vector<8x128xbf16>, vector<128x128xbf16>, vector<8x128xf32> -> vector<8x128xf32>
    %c0_20 = arith.constant 0 : index
    %c0_21 = arith.constant 0 : index
    %24 = vector.load %arg8[%c0_20, %c0_21] : memref<1x128xf32, #tpu.memory_space<vmem>>, vector<1x128xf32>
    %25 = vector.broadcast %24 : vector<1x128xf32> to vector<8x128xf32>
    %26 = arith.addf %23, %25 : vector<8x128xf32>
    %c0_22 = arith.constant 0 : index
    %c0_23 = arith.constant 0 : index
    %c0_24 = arith.constant 0 : index
    %27 = vector.load %arg9[%c0_22, %c0_23, %c0_24] : memref<1x8x128xf32, #tpu.memory_space<vmem>>, vector<1x8x128xf32>
    %28 = vector.shape_cast %27 : vector<1x8x128xf32> to vector<8x128xf32>
    %29 = vector.shape_cast %26 : vector<8x128xf32> to vector<1x8x128xf32>
    tpu.vector_store %arg9[%c0_22, %c0_23, %c0_24], %29 {strides = array<i32>} : memref<1x8x128xf32, #tpu.memory_space<vmem>>, vector<1x8x128xf32>,
    return
  }
  func.func @transform_0(%arg0: i32) -> (i32, i32, i32) {
    %c0_i32 = arith.constant 0 : i32
    %c0_i32_0 = arith.constant 0 : i32
    %c0_i32_1 = arith.constant 0 : i32
    return %arg0, %c0_i32, %c0_i32_0 : i32, i32, i32
  }
  func.func @transform_1(%arg0: i32) -> (i32, i32, i32) {
    %c0_i32 = arith.constant 0 : i32
    %c0_i32_0 = arith.constant 0 : i32
    %c0_i32_1 = arith.constant 0 : i32
    return %arg0, %c0_i32, %c0_i32_0 : i32, i32, i32
  }
  func.func @transform_2(%arg0: i32) -> (i32, i32) {
    %c0_i32 = arith.constant 0 : i32
    %c0_i32_0 = arith.constant 0 : i32
    %c0_i32_1 = arith.constant 0 : i32
    return %c0_i32, %c0_i32_0 : i32, i32
  }
  func.func @transform_3(%arg0: i32) -> (i32, i32) {
    %c0_i32 = arith.constant 0 : i32
    %c0_i32_0 = arith.constant 0 : i32
    %c0_i32_1 = arith.constant 0 : i32
    return %c0_i32, %c0_i32_0 : i32, i32
  }
  func.func @transform_4(%arg0: i32) -> (i32, i32) {
    %c0_i32 = arith.constant 0 : i32
    %c0_i32_0 = arith.constant 0 : i32
    %c0_i32_1 = arith.constant 0 : i32
    return %c0_i32, %c0_i32_0 : i32, i32
  }
  func.func @transform_5(%arg0: i32) -> (i32, i32) {
    %c0_i32 = arith.constant 0 : i32
    %c0_i32_0 = arith.constant 0 : i32
    %c0_i32_1 = arith.constant 0 : i32
    return %c0_i32, %c0_i32_0 : i32, i32
  }
  func.func @transform_6(%arg0: i32) -> (i32, i32) {
    %c0_i32 = arith.constant 0 : i32
    %c0_i32_0 = arith.constant 0 : i32
    %c0_i32_1 = arith.constant 0 : i32
    return %c0_i32, %c0_i32_0 : i32, i32
  }
  func.func @transform_7(%arg0: i32) -> (i32, i32) {
    %c0_i32 = arith.constant 0 : i32
    %c0_i32_0 = arith.constant 0 : i32
    %c0_i32_1 = arith.constant 0 : i32
    return %c0_i32, %c0_i32_0 : i32, i32
  }
  func.func @transform_8(%arg0: i32) -> (i32, i32, i32) {
    %c0_i32 = arith.constant 0 : i32
    %c0_i32_0 = arith.constant 0 : i32
    %c0_i32_1 = arith.constant 0 : i32
    return %arg0, %c0_i32, %c0_i32_0 : i32, i32, i32
  }
}

</mosaic_0001>

<llo_original>
// kernel: ge.17
$region0: #{ge.17}
  %s0 = inlined_call_operand.vmem [shape: f32[8,8], index: 0, kind: input, shape index: {}]
  %s1 = inlined_call_operand.vmem [shape: f32[64], index: 1, kind: output, shape index: {}]
  $region1: #{ge.17} parent=0
    #allocation0 [shape = 'u8[4096]{0}', space=vmem, size = 0x1000, scoped, tag = 'scoped mem for output reshape']
    %v2 = vld [vmem:[%s0] sm:$0x1]
    %vm3 = vcmask 64512
    %4 = vst.msk [vmem:[#allocation0] sm:$0x1] %vm3, %v2
    %s5 = scalar_lea.vmem %s0, 7
    %v6 = vld [vmem:[%s5] sm:$0x1]
    %7 = vrot.lane.b32.xlu0 %v6, 56
    %v8 = vpop.permute.xlu0 %7
    %vm9 = vcmask 523712
    %10 = vst.msk [vmem:[#allocation0] sm:$0x1] %vm9, %v8
    %s11 = scalar_lea.vmem %s0, 6
    %v12 = vld [vmem:[%s11] sm:$0x1]
    %13 = vrot.lane.b32.xlu0 %v12, 48
    %v14 = vpop.permute.xlu0 %13
    %vm15 = vcmask 458112
    %16 = vst.msk [vmem:[#allocation0] sm:$0x1] %vm15, %v14
    %s17 = scalar_lea.vmem %s0, 5
    %v18 = vld [vmem:[%s17] sm:$0x1]
    %19 = vrot.lane.b32.xlu0 %v18, 40
    %v20 = vpop.permute.xlu0 %19
    %vm21 = vcmask 392512
    %22 = vst.msk [vmem:[#allocation0] sm:$0x1] %vm21, %v20
    %s23 = scalar_lea.vmem %s0, 4
    %v24 = vld [vmem:[%s23] sm:$0x1]
    %25 = vrot.lane.b32.xlu0 %v24, 32
    %v26 = vpop.permute.xlu0 %25
    %vm27 = vcmask 326912
    %28 = vst.msk [vmem:[#allocation0] sm:$0x1] %vm27, %v26
    %s29 = scalar_lea.vmem %s0, 3
    %v30 = vld [vmem:[%s29] sm:$0x1]
    %31 = vrot.lane.b32.xlu0 %v30, 24
    %v32 = vpop.permute.xlu0 %31
    %vm33 = vcmask 261312
    %34 = vst.msk [vmem:[#allocation0] sm:$0x1] %vm33, %v32
    %s35 = scalar_lea.vmem %s0, 2
    %v36 = vld [vmem:[%s35] sm:$0x1]
    %37 = vrot.lane.b32.xlu0 %v36, 16
    %v38 = vpop.permute.xlu0 %37
    %vm39 = vcmask 195712
    %40 = vst.msk [vmem:[#allocation0] sm:$0x1] %vm39, %v38
    %s41 = scalar_lea.vmem %s0, 1
    %v42 = vld [vmem:[%s41] sm:$0x1]
    %43 = vrot.lane.b32.xlu0 %v42, 8
    %v44 = vpop.permute.xlu0 %43
    %vm45 = vcmask 130112
    %46 = vst.msk [vmem:[#allocation0] sm:$0x1] %vm45, %v44
    %s48 = sshll.u32 1, 1
    %s49 = ssub.s32 %s48, 1
    %v51 = vld [vmem:[#allocation0] sm:%s49]
    %s52 = sshll.u32 1, 1
    %s53 = ssub.s32 %s52, 1
    %54 = vst [vmem:[%s1] sm:%s53] %v51

// kernel: _lambda_.4
$region0: #{_lambda_.4}
  #allocation0 [shape = 'u32[]', space=smem, size = 0x4, offset = 0x4, fixed_abs, tag = 'smem constant byte address 0x4 - core index']
  #allocation1 [shape = 'u32[144,128]{1,0:T(1,128)}', space=vmem, size = 0x12000, scoped, tag = 'internal scratch']
  %s0 = inlined_call_operand.vmem [shape: bf16[512,128], index: 0, kind: input, shape index: {}]
  %s1 = inlined_call_operand.vmem [shape: bf16[128,128], index: 1, kind: input, shape index: {}]
  %s2 = inlined_call_operand.vmem [shape: f32[1,128], index: 2, kind: input, shape index: {}]
  %s3 = inlined_call_operand.vmem [shape: f32[512,128], index: 3, kind: output, shape index: {}]
  %s4 = sld [smem:[#allocation0]]
  $region22: #{_lambda_.4} parent=0
    _
  %s6 = ssub.s32 1, %s4
  %s7 = scalar_select 0, %s6, %s4
  // Predicated region
  $region2: #{_lambda_.4} parent=0 // pred_check
    _
  $region3: #{_lambda_.4} parent=0 // pred_check_branch
    %9 = sbr.rel (0) target = $region5
  $region4: #{_lambda_.4} parent=0 // pred_region
    _
  $region5: #{_lambda_.4} parent=0 // pred_fallthru
    _
  // Predicated region
  $region6: #{_lambda_.4} parent=0 // pred_check
    _
  $region7: #{_lambda_.4} parent=0 // pred_check_branch
    %11 = sbr.rel (0) target = $region9
  $region8: #{_lambda_.4} parent=0 // pred_region
    _
  $region9: #{_lambda_.4} parent=0 // pred_fallthru
    _
  // Predicated region
  $region10: #{_lambda_.4} parent=0 // pred_check
    _
  $region11: #{_lambda_.4} parent=0 // pred_check_branch
    %13 = sbr.rel (0) target = $region13
  $region12: #{_lambda_.4} parent=0 // pred_region
    _
  $region13: #{_lambda_.4} parent=0 // pred_fallthru
    _
  %v15 = vld [vmem:[%s0] sm:$0xf]
  %v16 = vld [vmem:[%s0 + $0x4] sm:$0xf]
  %v17 = vld [vmem:[%s0 + $0x8] sm:$0xf]
  %v18 = vld [vmem:[%s0 + $0xc] sm:$0xf]
  %v19 = vld [vmem:[%s0 + $0x10] sm:$0xf]
  %v20 = vld [vmem:[%s0 + $0x14] sm:$0xf]
  %v21 = vld [vmem:[%s0 + $0x18] sm:$0xf]
  %v22 = vld [vmem:[%s0 + $0x1c] sm:$0xf]
  %v23 = vld [vmem:[%s0 + $0x20] sm:$0xf]
  %v24 = vld [vmem:[%s0 + $0x24] sm:$0xf]
  %v25 = vld [vmem:[%s0 + $0x28] sm:$0xf]
  %v26 = vld [vmem:[%s0 + $0x2c] sm:$0xf]
  %v27 = vld [vmem:[%s0 + $0x30] sm:$0xf]
  %v28 = vld [vmem:[%s0 + $0x34] sm:$0xf]
  %v29 = vld [vmem:[%s0 + $0x38] sm:$0xf]
  %v30 = vld [vmem:[%s0 + $0x3c] sm:$0xf]
  %v31 = vld [vmem:[%s0 + $0x40] sm:$0xf]
  %v32 = vld [vmem:[%s0 + $0x44] sm:$0xf]
  %v33 = vld [vmem:[%s0 + $0x48] sm:$0xf]
  %v34 = vld [vmem:[%s0 + $0x4c] sm:$0xf]
  %v35 = vld [vmem:[%s0 + $0x50] sm:$0xf]
  %v36 = vld [vmem:[%s0 + $0x54] sm:$0xf]
  %v37 = vld [vmem:[%s0 + $0x58] sm:$0xf]
  %v38 = vld [vmem:[%s0 + $0x5c] sm:$0xf]
  %v39 = vld [vmem:[%s0 + $0x60] sm:$0xf]
  %v40 = vld [vmem:[%s0 + $0x64] sm:$0xf]
  %v41 = vld [vmem:[%s0 + $0x68] sm:$0xf]
  %v42 = vld [vmem:[%s0 + $0x6c] sm:$0xf]
  %v43 = vld [vmem:[%s0 + $0x70] sm:$0xf]
  %v44 = vld [vmem:[%s0 + $0x74] sm:$0xf]
  %v45 = vld [vmem:[%s0 + $0x78] sm:$0xf]
  %v46 = vld [vmem:[%s0 + $0x7c] sm:$0xf]
  %v47 = vld [vmem:[%s0 + $0x80] sm:$0xf]
  %v48 = vld [vmem:[%s0 + $0x84] sm:$0xf]
  %v49 = vld [vmem:[%s0 + $0x88] sm:$0xf]
  %v50 = vld [vmem:[%s0 + $0x8c] sm:$0xf]
  %v51 = vld [vmem:[%s0 + $0x90] sm:$0xf]
  %v52 = vld [vmem:[%s0 + $0x94] sm:$0xf]
  %v53 = vld [vmem:[%s0 + $0x98] sm:$0xf]
  %v54 = vld [vmem:[%s0 + $0x9c] sm:$0xf]
  %v55 = vld [vmem:[%s0 + $0xa0] sm:$0xf]
  %v56 = vld [vmem:[%s0 + $0xa4] sm:$0xf]
  %v57 = vld [vmem:[%s0 + $0xa8] sm:$0xf]
  %v58 = vld [vmem:[%s0 + $0xac] sm:$0xf]
  %v59 = vld [vmem:[%s0 + $0xb0] sm:$0xf]
  %v60 = vld [vmem:[%s0 + $0xb4] sm:$0xf]
  %v61 = vld [vmem:[%s0 + $0xb8] sm:$0xf]
  %v62 = vld [vmem:[%s0 + $0xbc] sm:$0xf]
  %v63 = vld [vmem:[%s0 + $0xc0] sm:$0xf]
  %v64 = vld [vmem:[%s0 + $0xc4] sm:$0xf]
  %v65 = vld [vmem:[%s0 + $0xc8] sm:$0xf]
  %v66 = vld [vmem:[%s0 + $0xcc] sm:$0xf]
  %v67 = vld [vmem:[%s0 + $0xd0] sm:$0xf]
  %v68 = vld [vmem:[%s0 + $0xd4] sm:$0xf]
  %v69 = vld [vmem:[%s0 + $0xd8] sm:$0xf]
  %v70 = vld [vmem:[%s0 + $0xdc] sm:$0xf]
  %v71 = vld [vmem:[%s0 + $0xe0] sm:$0xf]
  %v72 = vld [vmem:[%s0 + $0xe4] sm:$0xf]
  %v73 = vld [vmem:[%s0 + $0xe8] sm:$0xf]
  %v74 = vld [vmem:[%s0 + $0xec] sm:$0xf]
  %v75 = vld [vmem:[%s0 + $0xf0] sm:$0xf]
  %v76 = vld [vmem:[%s0 + $0xf4] sm:$0xf]
  %v77 = vld [vmem:[%s0 + $0xf8] sm:$0xf]
  %v78 = vld [vmem:[%s0 + $0xfc] sm:$0xf]
  %v79 = vld [vmem:[%s1] sm:$0xf]
  %v80 = vld [vmem:[%s1 + $0x4] sm:$0xf]
  %v81 = vld [vmem:[%s1 + $0x8] sm:$0xf]
  %v82 = vld [vmem:[%s1 + $0xc] sm:$0xf]
  %v83 = vld [vmem:[%s1 + $0x10] sm:$0xf]
  %v84 = vld [vmem:[%s1 + $0x14] sm:$0xf]
  %v85 = vld [vmem:[%s1 + $0x18] sm:$0xf]
  %v86 = vld [vmem:[%s1 + $0x1c] sm:$0xf]
  %v87 = vld [vmem:[%s1 + $0x20] sm:$0xf]
  %v88 = vld [vmem:[%s1 + $0x24] sm:$0xf]
  %v89 = vld [vmem:[%s1 + $0x28] sm:$0xf]
  %v90 = vld [vmem:[%s1 + $0x2c] sm:$0xf]
  %v91 = vld [vmem:[%s1 + $0x30] sm:$0xf]
  %v92 = vld [vmem:[%s1 + $0x34] sm:$0xf]
  %v93 = vld [vmem:[%s1 + $0x38] sm:$0xf]
  %v94 = vld [vmem:[%s1 + $0x3c] sm:$0xf]
  %v95 = vld [vmem:[%s2] sm:$0x1]
  %v97 = vlaneseq
  %v98 = vshrl.u32 %v97, 7
  %v99 = vsub.s32 0, %v98
  %v100 = vrot.slane %v95, %v99
  %v166 = vunpack.c.l.b16 %v15
  %v167 = vunpack.c.l.b16 %v16
  %v168 = vunpack.c.l.b16 %v17
  %v169 = vunpack.c.l.b16 %v18
  %v170 = vunpack.c.l.b16 %v19
  %v171 = vunpack.c.l.b16 %v20
  %v172 = vunpack.c.l.b16 %v21
  %v173 = vunpack.c.l.b16 %v22
  %v174 = vunpack.c.l.b16 %v23
  %v175 = vunpack.c.l.b16 %v24
  %v176 = vunpack.c.l.b16 %v25
  %v177 = vunpack.c.l.b16 %v26
  %v178 = vunpack.c.l.b16 %v27
  %v179 = vunpack.c.l.b16 %v28
  %v180 = vunpack.c.l.b16 %v29
  %v181 = vunpack.c.l.b16 %v30
  %v182 = vunpack.c.l.b16 %v31
  %v183 = vunpack.c.l.b16 %v32
  %v184 = vunpack.c.l.b16 %v33
  %v185 = vunpack.c.l.b16 %v34
  %v186 = vunpack.c.l.b16 %v35
  %v187 = vunpack.c.l.b16 %v36
  %v188 = vunpack.c.l.b16 %v37
  %v189 = vunpack.c.l.b16 %v38
  %v190 = vunpack.c.l.b16 %v39
  %v191 = vunpack.c.l.b16 %v40
  %v192 = vunpack.c.l.b16 %v41
  %v193 = vunpack.c.l.b16 %v42
  %v194 = vunpack.c.l.b16 %v43
  %v195 = vunpack.c.l.b16 %v44
  %v196 = vunpack.c.l.b16 %v45
  %v197 = vunpack.c.l.b16 %v46
  %v198 = vunpack.c.l.b16 %v47
  %v199 = vunpack.c.l.b16 %v48
  %v200 = vunpack.c.l.b16 %v49
  %v201 = vunpack.c.l.b16 %v50
  %v202 = vunpack.c.l.b16 %v51
  %v203 = vunpack.c.l.b16 %v52
  %v204 = vunpack.c.l.b16 %v53
  %v205 = vunpack.c.l.b16 %v54
  %v206 = vunpack.c.l.b16 %v55
  %v207 = vunpack.c.l.b16 %v56
  %v208 = vunpack.c.l.b16 %v57
  %v209 = vunpack.c.l.b16 %v58
  %v210 = vunpack.c.l.b16 %v59
  %v211 = vunpack.c.l.b16 %v60
  %v212 = vunpack.c.l.b16 %v61
  %v213 = vunpack.c.l.b16 %v62
  %v214 = vunpack.c.l.b16 %v63
  %v215 = vunpack.c.l.b16 %v64
  %v216 = vunpack.c.l.b16 %v65
  %v217 = vunpack.c.l.b16 %v66
  %v218 = vunpack.c.l.b16 %v67
  %v219 = vunpack.c.l.b16 %v68
  %v220 = vunpack.c.l.b16 %v69
  %v221 = vunpack.c.l.b16 %v70
  %v222 = vunpack.c.l.b16 %v71
  %v223 = vunpack.c.l.b16 %v72
  %v224 = vunpack.c.l.b16 %v73
  %v225 = vunpack.c.l.b16 %v74
  %v226 = vunpack.c.l.b16 %v75
  %v227 = vunpack.c.l.b16 %v76
  %v228 = vunpack.c.l.b16 %v77
  %v229 = vunpack.c.l.b16 %v78
  %v230 = vpack.c.b16 %v167, %v166
  %v231 = vpack.c.b16 %v169, %v168
  %v232 = vpack.c.b16 %v171, %v170
  %v233 = vpack.c.b16 %v173, %v172
  %v234 = vpack.c.b16 %v175, %v174
  %v235 = vpack.c.b16 %v177, %v176
  %v236 = vpack.c.b16 %v179, %v178
  %v237 = vpack.c.b16 %v181, %v180
  %v238 = vpack.c.b16 %v183, %v182
  %v239 = vpack.c.b16 %v185, %v184
  %v240 = vpack.c.b16 %v187, %v186
  %v241 = vpack.c.b16 %v189, %v188
  %v242 = vpack.c.b16 %v191, %v190
  %v243 = vpack.c.b16 %v193, %v192
  %v244 = vpack.c.b16 %v195, %v194
  %v245 = vpack.c.b16 %v197, %v196
  %v246 = vpack.c.b16 %v199, %v198
  %v247 = vpack.c.b16 %v201, %v200
  %v248 = vpack.c.b16 %v203, %v202
  %v249 = vpack.c.b16 %v205, %v204
  %v250 = vpack.c.b16 %v207, %v206
  %v251 = vpack.c.b16 %v209, %v208
  %v252 = vpack.c.b16 %v211, %v210
  %v253 = vpack.c.b16 %v213, %v212
  %v254 = vpack.c.b16 %v215, %v214
  %v255 = vpack.c.b16 %v217, %v216
  %v256 = vpack.c.b16 %v219, %v218
  %v257 = vpack.c.b16 %v221, %v220
  %v258 = vpack.c.b16 %v223, %v222
  %v259 = vpack.c.b16 %v225, %v224
  %v260 = vpack.c.b16 %v227, %v226
  %v261 = vpack.c.b16 %v229, %v228
  %v310 = vunpack.c.l.b16 %v79
  %v311 = vunpack.c.l.b16 %v80
  %v312 = vunpack.c.l.b16 %v81
  %v313 = vunpack.c.l.b16 %v82
  %v314 = vunpack.c.l.b16 %v83
  %v315 = vunpack.c.l.b16 %v84
  %v316 = vunpack.c.l.b16 %v85
  %v317 = vunpack.c.l.b16 %v86
  %v318 = vunpack.c.l.b16 %v87
  %v319 = vunpack.c.l.b16 %v88
  %v320 = vunpack.c.l.b16 %v89
  %v321 = vunpack.c.l.b16 %v90
  %v322 = vunpack.c.l.b16 %v91
  %v323 = vunpack.c.l.b16 %v92
  %v324 = vunpack.c.l.b16 %v93
  %v325 = vunpack.c.l.b16 %v94
  %v326 = vpack.c.b16 %v311, %v310
  %v327 = vpack.c.b16 %v313, %v312
  %v328 = vpack.c.b16 %v315, %v314
  %v329 = vpack.c.b16 %v317, %v316
  %v330 = vpack.c.b16 %v319, %v318
  %v331 = vpack.c.b16 %v321, %v320
  %v332 = vpack.c.b16 %v323, %v322
  %v333 = vpack.c.b16 %v325, %v324
  %342 = vmatprep.subr.bf16.mxu0 0
  %343 = vmatpush1.bf16.msra.mxu0 %v333
  %344 = vmatprep.subr.bf16.mxu0 0
  %345 = vmatpush1.bf16.msra.mxu0 %v332
  %346 = vmatprep.subr.bf16.mxu0 0
  %347 = vmatpush1.bf16.msra.mxu0 %v331
  %348 = vmatprep.subr.bf16.mxu0 0
  %349 = vmatpush1.bf16.msra.mxu0 %v330
  %350 = vmatprep.subr.bf16.mxu0 0
  %351 = vmatpush1.bf16.msra.mxu0 %v329
  %352 = vmatprep.subr.bf16.mxu0 0
  %353 = vmatpush1.bf16.msra.mxu0 %v328
  %354 = vmatprep.subr.bf16.mxu0 0
  %355 = vmatpush1.bf16.msra.mxu0 %v327
  %356 = vmatprep.subr.bf16.mxu0 0
  %357 = vmatpush1.bf16.msra.mxu0 %v326
  %358 = vmatprep.subr.bf16.mxu0 0
  %359 = vmatpush2.bf16.msra.mxu0 0
  %360 = vmatprep.subr.bf16.mxu0 0
  %361 = vmatpush2.bf16.msra.mxu0 0
  %362 = vmatprep.subr.bf16.mxu0 0
  %363 = vmatpush2.bf16.msra.mxu0 0
  %364 = vmatprep.subr.bf16.mxu0 0
  %365 = vmatpush2.bf16.msra.mxu0 0
  %366 = vmatprep.subr.bf16.mxu0 0
  %367 = vmatpush2.bf16.msra.mxu0 0
  %368 = vmatprep.subr.bf16.mxu0 0
  %369 = vmatpush2.bf16.msra.mxu0 0
  %370 = vmatprep.subr.bf16.mxu0 0
  %371 = vmatpush2.bf16.msra.mxu0 0
  %372 = vmatprep.subr.bf16.mxu0 0
  %373 = vmatpush2.bf16.msra.mxu0 0
  %374 = vmatprep.mubr.bf16.mxu0 0
  %375 = vmatmul.mubr.bf16.gmra.mxu0 %v230
  %v376 = vpop.f32.mrf.mxu0
  %v377 = vadd.f32 %v100, %v376
  %v378 = vpop.f32.mrf.mxu0
  %v379 = vpop.f32.mrf.mxu0
  %v380 = vadd.f32 %v100, %v379
  %v381 = vpop.f32.mrf.mxu0
  %382 = vmatprep.mubr.bf16.mxu0 0
  %383 = vmatmul.mubr.bf16.gmra.mxu0 %v231
  %v384 = vpop.f32.mrf.mxu0
  %v385 = vadd.f32 %v100, %v384
  %v386 = vpop.f32.mrf.mxu0
  %v387 = vpop.f32.mrf.mxu0
  %v388 = vadd.f32 %v100, %v387
  %v389 = vpop.f32.mrf.mxu0
  %390 = vmatprep.mubr.bf16.mxu0 0
  %391 = vmatmul.mubr.bf16.gmra.mxu0 %v232
  %v392 = vpop.f32.mrf.mxu0
  %v393 = vadd.f32 %v100, %v392
  %v394 = vpop.f32.mrf.mxu0
  %v395 = vpop.f32.mrf.mxu0
  %v396 = vadd.f32 %v100, %v395
  %v397 = vpop.f32.mrf.mxu0
  %398 = vmatprep.mubr.bf16.mxu0 0
  %399 = vmatmul.mubr.bf16.gmra.mxu0 %v233
  %v400 = vpop.f32.mrf.mxu0
  %v401 = vadd.f32 %v100, %v400
  %v402 = vpop.f32.mrf.mxu0
  %v403 = vpop.f32.mrf.mxu0
  %v404 = vadd.f32 %v100, %v403
  %v405 = vpop.f32.mrf.mxu0
  %406 = vmatprep.mubr.bf16.mxu0 0
  %407 = vmatmul.mubr.bf16.gmra.mxu0 %v234
  %v408 = vpop.f32.mrf.mxu0
  %v409 = vadd.f32 %v100, %v408
  %v410 = vpop.f32.mrf.mxu0
  %v411 = vpop.f32.mrf.mxu0
  %v412 = vadd.f32 %v100, %v411
  %v413 = vpop.f32.mrf.mxu0
  %414 = vmatprep.mubr.bf16.mxu0 0
  %415 = vmatmul.mubr.bf16.gmra.mxu0 %v235
  %v416 = vpop.f32.mrf.mxu0
  %v417 = vadd.f32 %v100, %v416
  %v418 = vpop.f32.mrf.mxu0
  %v419 = vpop.f32.mrf.mxu0
  %v420 = vadd.f32 %v100, %v419
  %v421 = vpop.f32.mrf.mxu0
  %422 = vmatprep.mubr.bf16.mxu0 0
  %423 = vmatmul.mubr.bf16.gmra.mxu0 %v236
  %v424 = vpop.f32.mrf.mxu0
  %v425 = vadd.f32 %v100, %v424
  %v426 = vpop.f32.mrf.mxu0
  %v427 = vpop.f32.mrf.mxu0
  %v428 = vadd.f32 %v100, %v427
  %v429 = vpop.f32.mrf.mxu0
  %430 = vmatprep.mubr.bf16.mxu0 0
  %431 = vmatmul.mubr.bf16.gmra.mxu0 %v237
  %v432 = vpop.f32.mrf.mxu0
  %v433 = vadd.f32 %v100, %v432
  %v434 = vpop.f32.mrf.mxu0
  %v435 = vpop.f32.mrf.mxu0
  %v436 = vadd.f32 %v100, %v435
  %v437 = vpop.f32.mrf.mxu0
  %438 = vmatprep.mubr.bf16.mxu0 0
  %439 = vmatmul.mubr.bf16.gmra.mxu0 %v238
  %v440 = vpop.f32.mrf.mxu0
  %v441 = vadd.f32 %v100, %v440
  %v442 = vpop.f32.mrf.mxu0
  %v443 = vpop.f32.mrf.mxu0
  %v444 = vadd.f32 %v100, %v443
  %v445 = vpop.f32.mrf.mxu0
  %446 = vmatprep.mubr.bf16.mxu0 0
  %447 = vmatmul.mubr.bf16.gmra.mxu0 %v239
  %v448 = vpop.f32.mrf.mxu0
  %v449 = vadd.f32 %v100, %v448
  %v450 = vpop.f32.mrf.mxu0
  %v451 = vpop.f32.mrf.mxu0
  %v452 = vadd.f32 %v100, %v451
  %v453 = vpop.f32.mrf.mxu0
  %454 = vmatprep.mubr.bf16.mxu0 0
  %455 = vmatmul.mubr.bf16.gmra.mxu0 %v240
  %v456 = vpop.f32.mrf.mxu0
  %v457 = vadd.f32 %v100, %v456
  %v458 = vpop.f32.mrf.mxu0
  %v459 = vpop.f32.mrf.mxu0
  %v460 = vadd.f32 %v100, %v459
  %v461 = vpop.f32.mrf.mxu0
  %462 = vmatprep.mubr.bf16.mxu0 0
  %463 = vmatmul.mubr.bf16.gmra.mxu0 %v241
  %v464 = vpop.f32.mrf.mxu0
  %v465 = vadd.f32 %v100, %v464
  %v466 = vpop.f32.mrf.mxu0
  %v467 = vpop.f32.mrf.mxu0
  %v468 = vadd.f32 %v100, %v467
  %v469 = vpop.f32.mrf.mxu0
  %470 = vmatprep.mubr.bf16.mxu0 0
  %471 = vmatmul.mubr.bf16.gmra.mxu0 %v242
  %v472 = vpop.f32.mrf.mxu0
  %v473 = vadd.f32 %v100, %v472
  %v474 = vpop.f32.mrf.mxu0
  %v475 = vpop.f32.mrf.mxu0
  %v476 = vadd.f32 %v100, %v475
  %v477 = vpop.f32.mrf.mxu0
  %478 = vmatprep.mubr.bf16.mxu0 0
  %479 = vmatmul.mubr.bf16.gmra.mxu0 %v243
  %v480 = vpop.f32.mrf.mxu0
  %v481 = vadd.f32 %v100, %v480
  %v482 = vpop.f32.mrf.mxu0
  %v483 = vpop.f32.mrf.mxu0
  %v484 = vadd.f32 %v100, %v483
  %v485 = vpop.f32.mrf.mxu0
  %486 = vmatprep.mubr.bf16.mxu0 0
  %487 = vmatmul.mubr.bf16.gmra.mxu0 %v244
  %v488 = vpop.f32.mrf.mxu0
  %v489 = vadd.f32 %v100, %v488
  %v490 = vpop.f32.mrf.mxu0
  %v491 = vpop.f32.mrf.mxu0
  %v492 = vadd.f32 %v100, %v491
  %v493 = vpop.f32.mrf.mxu0
  %494 = vmatprep.mubr.bf16.mxu0 0
  %495 = vmatmul.mubr.bf16.gmra.mxu0 %v245
  %v496 = vpop.f32.mrf.mxu0
  %v497 = vadd.f32 %v100, %v496
  %v498 = vpop.f32.mrf.mxu0
  %v499 = vpop.f32.mrf.mxu0
  %v500 = vadd.f32 %v100, %v499
  %v501 = vpop.f32.mrf.mxu0
  %502 = vmatprep.mubr.bf16.mxu0 0
  %503 = vmatmul.mubr.bf16.gmra.mxu0 %v246
  %v504 = vpop.f32.mrf.mxu0
  %v505 = vadd.f32 %v100, %v504
  %v506 = vpop.f32.mrf.mxu0
  %v507 = vpop.f32.mrf.mxu0
  %v508 = vadd.f32 %v100, %v507
  %v509 = vpop.f32.mrf.mxu0
  %510 = vmatprep.mubr.bf16.mxu0 0
  %511 = vmatmul.mubr.bf16.gmra.mxu0 %v247
  %v512 = vpop.f32.mrf.mxu0
  %v513 = vadd.f32 %v100, %v512
  %v514 = vpop.f32.mrf.mxu0
  %v515 = vpop.f32.mrf.mxu0
  %v516 = vadd.f32 %v100, %v515
  %v517 = vpop.f32.mrf.mxu0
  %518 = vmatprep.mubr.bf16.mxu0 0
  %519 = vmatmul.mubr.bf16.gmra.mxu0 %v248
  %v520 = vpop.f32.mrf.mxu0
  %v521 = vadd.f32 %v100, %v520
  %v522 = vpop.f32.mrf.mxu0
  %v523 = vpop.f32.mrf.mxu0
  %v524 = vadd.f32 %v100, %v523
  %v525 = vpop.f32.mrf.mxu0
  %526 = vmatprep.mubr.bf16.mxu0 0
  %527 = vmatmul.mubr.bf16.gmra.mxu0 %v249
  %v528 = vpop.f32.mrf.mxu0
  %v529 = vadd.f32 %v100, %v528
  %v530 = vpop.f32.mrf.mxu0
  %v531 = vpop.f32.mrf.mxu0
  %v532 = vadd.f32 %v100, %v531
  %v533 = vpop.f32.mrf.mxu0
  %534 = vmatprep.mubr.bf16.mxu0 0
  %535 = vmatmul.mubr.bf16.gmra.mxu0 %v250
  %v536 = vpop.f32.mrf.mxu0
  %v537 = vadd.f32 %v100, %v536
  %v538 = vpop.f32.mrf.mxu0
  %v539 = vpop.f32.mrf.mxu0
  %v540 = vadd.f32 %v100, %v539
  %v541 = vpop.f32.mrf.mxu0
  %542 = vmatprep.mubr.bf16.mxu0 0
  %543 = vmatmul.mubr.bf16.gmra.mxu0 %v251
  %v544 = vpop.f32.mrf.mxu0
  %v545 = vadd.f32 %v100, %v544
  %v546 = vpop.f32.mrf.mxu0
  %v547 = vpop.f32.mrf.mxu0
  %v548 = vadd.f32 %v100, %v547
  %v549 = vpop.f32.mrf.mxu0
  %550 = vmatprep.mubr.bf16.mxu0 0
  %551 = vmatmul.mubr.bf16.gmra.mxu0 %v252
  %v552 = vpop.f32.mrf.mxu0
  %v553 = vadd.f32 %v100, %v552
  %v554 = vpop.f32.mrf.mxu0
  %v555 = vpop.f32.mrf.mxu0
  %v556 = vadd.f32 %v100, %v555
  %v557 = vpop.f32.mrf.mxu0
  %558 = vmatprep.mubr.bf16.mxu0 0
  %559 = vmatmul.mubr.bf16.gmra.mxu0 %v253
  %v560 = vpop.f32.mrf.mxu0
  %v561 = vadd.f32 %v100, %v560
  %v562 = vpop.f32.mrf.mxu0
  %v563 = vpop.f32.mrf.mxu0
  %v564 = vadd.f32 %v100, %v563
  %v565 = vpop.f32.mrf.mxu0
  %566 = vmatprep.mubr.bf16.mxu0 0
  %567 = vmatmul.mubr.bf16.gmra.mxu0 %v254
  %v568 = vpop.f32.mrf.mxu0
  %v569 = vadd.f32 %v100, %v568
  %v570 = vpop.f32.mrf.mxu0
  %v571 = vpop.f32.mrf.mxu0
  %v572 = vadd.f32 %v100, %v571
  %v573 = vpop.f32.mrf.mxu0
  %574 = vmatprep.mubr.bf16.mxu0 0
  %575 = vmatmul.mubr.bf16.gmra.mxu0 %v255
  %v576 = vpop.f32.mrf.mxu0
  %v577 = vadd.f32 %v100, %v576
  %v578 = vpop.f32.mrf.mxu0
  %v579 = vpop.f32.mrf.mxu0
  %v580 = vadd.f32 %v100, %v579
  %v581 = vpop.f32.mrf.mxu0
  %582 = vmatprep.mubr.bf16.mxu0 0
  %583 = vmatmul.mubr.bf16.gmra.mxu0 %v256
  %v584 = vpop.f32.mrf.mxu0
  %v585 = vadd.f32 %v100, %v584
  %v586 = vpop.f32.mrf.mxu0
  %v587 = vpop.f32.mrf.mxu0
  %v588 = vadd.f32 %v100, %v587
  %v589 = vpop.f32.mrf.mxu0
  %590 = vmatprep.mubr.bf16.mxu0 0
  %591 = vmatmul.mubr.bf16.gmra.mxu0 %v257
  %v592 = vpop.f32.mrf.mxu0
  %v593 = vadd.f32 %v100, %v592
  %v594 = vpop.f32.mrf.mxu0
  %v595 = vpop.f32.mrf.mxu0
  %v596 = vadd.f32 %v100, %v595
  %v597 = vpop.f32.mrf.mxu0
  %598 = vmatprep.mubr.bf16.mxu0 0
  %599 = vmatmul.mubr.bf16.gmra.mxu0 %v258
  %v600 = vpop.f32.mrf.mxu0
  %v601 = vadd.f32 %v100, %v600
  %v602 = vpop.f32.mrf.mxu0
  %v603 = vpop.f32.mrf.mxu0
  %v604 = vadd.f32 %v100, %v603
  %v605 = vpop.f32.mrf.mxu0
  %606 = vmatprep.mubr.bf16.mxu0 0
  %607 = vmatmul.mubr.bf16.gmra.mxu0 %v259
  %v608 = vpop.f32.mrf.mxu0
  %v609 = vadd.f32 %v100, %v608
  %v610 = vpop.f32.mrf.mxu0
  %v611 = vpop.f32.mrf.mxu0
  %v612 = vadd.f32 %v100, %v611
  %v613 = vpop.f32.mrf.mxu0
  %614 = vmatprep.mubr.bf16.mxu0 0
  %615 = vmatmul.mubr.bf16.gmra.mxu0 %v260
  %v616 = vpop.f32.mrf.mxu0
  %v617 = vadd.f32 %v100, %v616
  %v618 = vpop.f32.mrf.mxu0
  %v619 = vpop.f32.mrf.mxu0
  %v620 = vadd.f32 %v100, %v619
  %v621 = vpop.f32.mrf.mxu0
  %622 = vmatprep.mubr.bf16.mxu0 0
  %623 = vmatmul.mubr.bf16.gmra.mxu0 %v261
  %v624 = vpop.f32.mrf.mxu0
  %v625 = vadd.f32 %v100, %v624
  %v626 = vpop.f32.mrf.mxu0
  %v627 = vpop.f32.mrf.mxu0
  %v628 = vadd.f32 %v100, %v627
  %v629 = vpop.f32.mrf.mxu0
  %630 = vdwg.mxu0
  %v631 = vmax.f32 %v377, 0.0
  %v632 = vmax.f32 %v380, 0.0
  %v633 = vmax.f32 %v385, 0.0
  %v634 = vmax.f32 %v388, 0.0
  %v635 = vmax.f32 %v393, 0.0
  %v636 = vmax.f32 %v396, 0.0
  %v637 = vmax.f32 %v401, 0.0
  %v638 = vmax.f32 %v404, 0.0
  %v639 = vmax.f32 %v409, 0.0
  %v640 = vmax.f32 %v412, 0.0
  %v641 = vmax.f32 %v417, 0.0
  %v642 = vmax.f32 %v420, 0.0
  %v643 = vmax.f32 %v425, 0.0
  %v644 = vmax.f32 %v428, 0.0
  %v645 = vmax.f32 %v433, 0.0
  %v646 = vmax.f32 %v436, 0.0
  %v647 = vmax.f32 %v441, 0.0
  %v648 = vmax.f32 %v444, 0.0
  %v649 = vmax.f32 %v449, 0.0
  %v650 = vmax.f32 %v452, 0.0
  %v651 = vmax.f32 %v457, 0.0
  %v652 = vmax.f32 %v460, 0.0
  %v653 = vmax.f32 %v465, 0.0
  %v654 = vmax.f32 %v468, 0.0
  %v655 = vmax.f32 %v473, 0.0
  %v656 = vmax.f32 %v476, 0.0
  %v657 = vmax.f32 %v481, 0.0
  %v658 = vmax.f32 %v484, 0.0
  %v659 = vmax.f32 %v489, 0.0
  %v660 = vmax.f32 %v492, 0.0
  %v661 = vmax.f32 %v497, 0.0
  %v662 = vmax.f32 %v500, 0.0
  %v663 = vmax.f32 %v505, 0.0
  %v664 = vmax.f32 %v508, 0.0
  %v665 = vmax.f32 %v513, 0.0
  %v666 = vmax.f32 %v516, 0.0
  %v667 = vmax.f32 %v521, 0.0
  %v668 = vmax.f32 %v524, 0.0
  %v669 = vmax.f32 %v529, 0.0
  %v670 = vmax.f32 %v532, 0.0
  %v671 = vmax.f32 %v537, 0.0
  %v672 = vmax.f32 %v540, 0.0
  %v673 = vmax.f32 %v545, 0.0
  %v674 = vmax.f32 %v548, 0.0
  %v675 = vmax.f32 %v553, 0.0
  %v676 = vmax.f32 %v556, 0.0
  %v677 = vmax.f32 %v561, 0.0
  %v678 = vmax.f32 %v564, 0.0
  %v679 = vmax.f32 %v569, 0.0
  %v680 = vmax.f32 %v572, 0.0
  %v681 = vmax.f32 %v577, 0.0
  %v682 = vmax.f32 %v580, 0.0
  %v683 = vmax.f32 %v585, 0.0
  %v684 = vmax.f32 %v588, 0.0
  %v685 = vmax.f32 %v593, 0.0
  %v686 = vmax.f32 %v596, 0.0
  %v687 = vmax.f32 %v601, 0.0
  %v688 = vmax.f32 %v604, 0.0
  %v689 = vmax.f32 %v609, 0.0
  %v690 = vmax.f32 %v612, 0.0
  %v691 = vmax.f32 %v617, 0.0
  %v692 = vmax.f32 %v620, 0.0
  %v693 = vmax.f32 %v625, 0.0
  %v694 = vmax.f32 %v628, 0.0
  %695 = vst [vmem:[%s3] sm:$0xff] %v631
  %696 = vst [vmem:[%s3 + $0x8] sm:$0xff] %v632
  %697 = vst [vmem:[%s3 + $0x10] sm:$0xff] %v633
  %698 = vst [vmem:[%s3 + $0x18] sm:$0xff] %v634
  %699 = vst [vmem:[%s3 + $0x20] sm:$0xff] %v635
  %700 = vst [vmem:[%s3 + $0x28] sm:$0xff] %v636
  %701 = vst [vmem:[%s3 + $0x30] sm:$0xff] %v637
  %702 = vst [vmem:[%s3 + $0x38] sm:$0xff] %v638
  %703 = vst [vmem:[%s3 + $0x40] sm:$0xff] %v639
  %704 = vst [vmem:[%s3 + $0x48] sm:$0xff] %v640
  %705 = vst [vmem:[%s3 + $0x50] sm:$0xff] %v641
  %706 = vst [vmem:[%s3 + $0x58] sm:$0xff] %v642
  %707 = vst [vmem:[%s3 + $0x60] sm:$0xff] %v643
  %708 = vst [vmem:[%s3 + $0x68] sm:$0xff] %v644
  %709 = vst [vmem:[%s3 + $0x70] sm:$0xff] %v645
  %710 = vst [vmem:[%s3 + $0x78] sm:$0xff] %v646
  %711 = vst [vmem:[%s3 + $0x80] sm:$0xff] %v647
  %712 = vst [vmem:[%s3 + $0x88] sm:$0xff] %v648
  %713 = vst [vmem:[%s3 + $0x90] sm:$0xff] %v649
  %714 = vst [vmem:[%s3 + $0x98] sm:$0xff] %v650
  %715 = vst [vmem:[%s3 + $0xa0] sm:$0xff] %v651
  %716 = vst [vmem:[%s3 + $0xa8] sm:$0xff] %v652
  %717 = vst [vmem:[%s3 + $0xb0] sm:$0xff] %v653
  %718 = vst [vmem:[%s3 + $0xb8] sm:$0xff] %v654
  %719 = vst [vmem:[%s3 + $0xc0] sm:$0xff] %v655
  %720 = vst [vmem:[%s3 + $0xc8] sm:$0xff] %v656
  %721 = vst [vmem:[%s3 + $0xd0] sm:$0xff] %v657
  %722 = vst [vmem:[%s3 + $0xd8] sm:$0xff] %v658
  %723 = vst [vmem:[%s3 + $0xe0] sm:$0xff] %v659
  %724 = vst [vmem:[%s3 + $0xe8] sm:$0xff] %v660
  %725 = vst [vmem:[%s3 + $0xf0] sm:$0xff] %v661
  %726 = vst [vmem:[%s3 + $0xf8] sm:$0xff] %v662
  %727 = vst [vmem:[%s3 + $0x100] sm:$0xff] %v663
  %728 = vst [vmem:[%s3 + $0x108] sm:$0xff] %v664
  %729 = vst [vmem:[%s3 + $0x110] sm:$0xff] %v665
  %730 = vst [vmem:[%s3 + $0x118] sm:$0xff] %v666
  %731 = vst [vmem:[%s3 + $0x120] sm:$0xff] %v667
  %732 = vst [vmem:[%s3 + $0x128] sm:$0xff] %v668
  %733 = vst [vmem:[%s3 + $0x130] sm:$0xff] %v669
  %734 = vst [vmem:[%s3 + $0x138] sm:$0xff] %v670
  %735 = vst [vmem:[%s3 + $0x140] sm:$0xff] %v671
  %736 = vst [vmem:[%s3 + $0x148] sm:$0xff] %v672
  %737 = vst [vmem:[%s3 + $0x150] sm:$0xff] %v673
  %738 = vst [vmem:[%s3 + $0x158] sm:$0xff] %v674
  %739 = vst [vmem:[%s3 + $0x160] sm:$0xff] %v675
  %740 = vst [vmem:[%s3 + $0x168] sm:$0xff] %v676
  %741 = vst [vmem:[%s3 + $0x170] sm:$0xff] %v677
  %742 = vst [vmem:[%s3 + $0x178] sm:$0xff] %v678
  %743 = vst [vmem:[%s3 + $0x180] sm:$0xff] %v679
  %744 = vst [vmem:[%s3 + $0x188] sm:$0xff] %v680
  %745 = vst [vmem:[%s3 + $0x190] sm:$0xff] %v681
  %746 = vst [vmem:[%s3 + $0x198] sm:$0xff] %v682
  %747 = vst [vmem:[%s3 + $0x1a0] sm:$0xff] %v683
  %748 = vst [vmem:[%s3 + $0x1a8] sm:$0xff] %v684
  %749 = vst [vmem:[%s3 + $0x1b0] sm:$0xff] %v685
  %750 = vst [vmem:[%s3 + $0x1b8] sm:$0xff] %v686
  %751 = vst [vmem:[%s3 + $0x1c0] sm:$0xff] %v687
  %752 = vst [vmem:[%s3 + $0x1c8] sm:$0xff] %v688
  %753 = vst [vmem:[%s3 + $0x1d0] sm:$0xff] %v689
  %754 = vst [vmem:[%s3 + $0x1d8] sm:$0xff] %v690
  %755 = vst [vmem:[%s3 + $0x1e0] sm:$0xff] %v691
  %756 = vst [vmem:[%s3 + $0x1e8] sm:$0xff] %v692
  %757 = vst [vmem:[%s3 + $0x1f0] sm:$0xff] %v693
  %758 = vst [vmem:[%s3 + $0x1f8] sm:$0xff] %v694
  // Predicated region
  $region14: #{_lambda_.4} parent=0 // pred_check
    _
  $region15: #{_lambda_.4} parent=0 // pred_check_branch
    %760 = sbr.rel (0) target = $region17
  $region16: #{_lambda_.4} parent=0 // pred_region
    _
  $region17: #{_lambda_.4} parent=0 // pred_fallthru
    _
  // Predicated region
  $region18: #{_lambda_.4} parent=0 // pred_check
    _
  $region19: #{_lambda_.4} parent=0 // pred_check_branch
    %762 = sbr.rel (0) target = $region21
  $region20: #{_lambda_.4} parent=0 // pred_region
    _
  $region21: #{_lambda_.4} parent=0 // pred_fallthru
    _

// kernel: _lambda_.5
$region0: #{_lambda_.5}
  #allocation0 [shape = 'u32[]', space=smem, size = 0x4, offset = 0x4, fixed_abs, tag = 'smem constant byte address 0x4 - core index']
  #allocation1 [shape = 'u32[144,128]{1,0:T(1,128)}', space=vmem, size = 0x12000, scoped, tag = 'internal scratch']
  %s0 = inlined_call_operand.vmem [shape: bf16[128,256], index: 0, kind: input, shape index: {}]
  %s1 = inlined_call_operand.vmem [shape: bf16[256,128], index: 1, kind: input, shape index: {}]
  %s2 = inlined_call_operand.vmem [shape: f32[1,128], index: 2, kind: input, shape index: {}]
  %s3 = inlined_call_operand.vmem [shape: f32[128,128], index: 3, kind: output, shape index: {}]
  %s4 = sld [smem:[#allocation0]]
  $region22: #{_lambda_.5} parent=0
    _
  %s6 = ssub.s32 1, %s4
  %s7 = scalar_select 0, %s6, %s4
  // Predicated region
  $region2: #{_lambda_.5} parent=0 // pred_check
    _
  $region3: #{_lambda_.5} parent=0 // pred_check_branch
    %9 = sbr.rel (0) target = $region5
  $region4: #{_lambda_.5} parent=0 // pred_region
    _
  $region5: #{_lambda_.5} parent=0 // pred_fallthru
    _
  // Predicated region
  $region6: #{_lambda_.5} parent=0 // pred_check
    _
  $region7: #{_lambda_.5} parent=0 // pred_check_branch
    %11 = sbr.rel (0) target = $region9
  $region8: #{_lambda_.5} parent=0 // pred_region
    _
  $region9: #{_lambda_.5} parent=0 // pred_fallthru
    _
  // Predicated region
  $region10: #{_lambda_.5} parent=0 // pred_check
    _
  $region11: #{_lambda_.5} parent=0 // pred_check_branch
    %13 = sbr.rel (0) target = $region13
  $region12: #{_lambda_.5} parent=0 // pred_region
    _
  $region13: #{_lambda_.5} parent=0 // pred_fallthru
    _
  %v15 = vld [vmem:[%s0] sm:$0xff]
  %v16 = vld [vmem:[%s0 + $0x8] sm:$0xff]
  %v17 = vld [vmem:[%s0 + $0x10] sm:$0xff]
  %v18 = vld [vmem:[%s0 + $0x18] sm:$0xff]
  %v19 = vld [vmem:[%s0 + $0x20] sm:$0xff]
  %v20 = vld [vmem:[%s0 + $0x28] sm:$0xff]
  %v21 = vld [vmem:[%s0 + $0x30] sm:$0xff]
  %v22 = vld [vmem:[%s0 + $0x38] sm:$0xff]
  %v23 = vld [vmem:[%s0 + $0x40] sm:$0xff]
  %v24 = vld [vmem:[%s0 + $0x48] sm:$0xff]
  %v25 = vld [vmem:[%s0 + $0x50] sm:$0xff]
  %v26 = vld [vmem:[%s0 + $0x58] sm:$0xff]
  %v27 = vld [vmem:[%s0 + $0x60] sm:$0xff]
  %v28 = vld [vmem:[%s0 + $0x68] sm:$0xff]
  %v29 = vld [vmem:[%s0 + $0x70] sm:$0xff]
  %v30 = vld [vmem:[%s0 + $0x78] sm:$0xff]
  %v31 = vld [vmem:[%s1] sm:$0xf]
  %v32 = vld [vmem:[%s1 + $0x4] sm:$0xf]
  %v33 = vld [vmem:[%s1 + $0x8] sm:$0xf]
  %v34 = vld [vmem:[%s1 + $0xc] sm:$0xf]
  %v35 = vld [vmem:[%s1 + $0x10] sm:$0xf]
  %v36 = vld [vmem:[%s1 + $0x14] sm:$0xf]
  %v37 = vld [vmem:[%s1 + $0x18] sm:$0xf]
  %v38 = vld [vmem:[%s1 + $0x1c] sm:$0xf]
  %v39 = vld [vmem:[%s1 + $0x20] sm:$0xf]
  %v40 = vld [vmem:[%s1 + $0x24] sm:$0xf]
  %v41 = vld [vmem:[%s1 + $0x28] sm:$0xf]
  %v42 = vld [vmem:[%s1 + $0x2c] sm:$0xf]
  %v43 = vld [vmem:[%s1 + $0x30] sm:$0xf]
  %v44 = vld [vmem:[%s1 + $0x34] sm:$0xf]
  %v45 = vld [vmem:[%s1 + $0x38] sm:$0xf]
  %v46 = vld [vmem:[%s1 + $0x3c] sm:$0xf]
  %v47 = vld [vmem:[%s1 + $0x40] sm:$0xf]
  %v48 = vld [vmem:[%s1 + $0x44] sm:$0xf]
  %v49 = vld [vmem:[%s1 + $0x48] sm:$0xf]
  %v50 = vld [vmem:[%s1 + $0x4c] sm:$0xf]
  %v51 = vld [vmem:[%s1 + $0x50] sm:$0xf]
  %v52 = vld [vmem:[%s1 + $0x54] sm:$0xf]
  %v53 = vld [vmem:[%s1 + $0x58] sm:$0xf]
  %v54 = vld [vmem:[%s1 + $0x5c] sm:$0xf]
  %v55 = vld [vmem:[%s1 + $0x60] sm:$0xf]
  %v56 = vld [vmem:[%s1 + $0x64] sm:$0xf]
  %v57 = vld [vmem:[%s1 + $0x68] sm:$0xf]
  %v58 = vld [vmem:[%s1 + $0x6c] sm:$0xf]
  %v59 = vld [vmem:[%s1 + $0x70] sm:$0xf]
  %v60 = vld [vmem:[%s1 + $0x74] sm:$0xf]
  %v61 = vld [vmem:[%s1 + $0x78] sm:$0xf]
  %v62 = vld [vmem:[%s1 + $0x7c] sm:$0xf]
  %v63 = vld [vmem:[%s2] sm:$0x1]
  %v65 = vlaneseq
  %v66 = vshrl.u32 %v65, 7
  %v67 = vsub.s32 0, %v66
  %v68 = vrot.slane %v63, %v67
  %v86 = vunpack.c.l.b16 %v15
  %v87 = vunpack.c.h.b16 %v15
  %v88 = vunpack.c.l.b16 %v16
  %v89 = vunpack.c.h.b16 %v16
  %v90 = vunpack.c.l.b16 %v17
  %v91 = vunpack.c.h.b16 %v17
  %v92 = vunpack.c.l.b16 %v18
  %v93 = vunpack.c.h.b16 %v18
  %v94 = vunpack.c.l.b16 %v19
  %v95 = vunpack.c.h.b16 %v19
  %v96 = vunpack.c.l.b16 %v20
  %v97 = vunpack.c.h.b16 %v20
  %v98 = vunpack.c.l.b16 %v21
  %v99 = vunpack.c.h.b16 %v21
  %v100 = vunpack.c.l.b16 %v22
  %v101 = vunpack.c.h.b16 %v22
  %v102 = vunpack.c.l.b16 %v23
  %v103 = vunpack.c.h.b16 %v23
  %v104 = vunpack.c.l.b16 %v24
  %v105 = vunpack.c.h.b16 %v24
  %v106 = vunpack.c.l.b16 %v25
  %v107 = vunpack.c.h.b16 %v25
  %v108 = vunpack.c.l.b16 %v26
  %v109 = vunpack.c.h.b16 %v26
  %v110 = vunpack.c.l.b16 %v27
  %v111 = vunpack.c.h.b16 %v27
  %v112 = vunpack.c.l.b16 %v28
  %v113 = vunpack.c.h.b16 %v28
  %v114 = vunpack.c.l.b16 %v29
  %v115 = vunpack.c.h.b16 %v29
  %v116 = vunpack.c.l.b16 %v30
  %v117 = vunpack.c.h.b16 %v30
  %v118 = vpack.c.b16 %v88, %v86
  %v119 = vpack.c.b16 %v89, %v87
  %v120 = vpack.c.b16 %v92, %v90
  %v121 = vpack.c.b16 %v93, %v91
  %v122 = vpack.c.b16 %v96, %v94
  %v123 = vpack.c.b16 %v97, %v95
  %v124 = vpack.c.b16 %v100, %v98
  %v125 = vpack.c.b16 %v101, %v99
  %v126 = vpack.c.b16 %v104, %v102
  %v127 = vpack.c.b16 %v105, %v103
  %v128 = vpack.c.b16 %v108, %v106
  %v129 = vpack.c.b16 %v109, %v107
  %v130 = vpack.c.b16 %v112, %v110
  %v131 = vpack.c.b16 %v113, %v111
  %v132 = vpack.c.b16 %v116, %v114
  %v133 = vpack.c.b16 %v117, %v115
  %v182 = vunpack.c.l.b16 %v31
  %v183 = vunpack.c.l.b16 %v32
  %v184 = vunpack.c.l.b16 %v33
  %v185 = vunpack.c.l.b16 %v34
  %v186 = vunpack.c.l.b16 %v35
  %v187 = vunpack.c.l.b16 %v36
  %v188 = vunpack.c.l.b16 %v37
  %v189 = vunpack.c.l.b16 %v38
  %v190 = vunpack.c.l.b16 %v39
  %v191 = vunpack.c.l.b16 %v40
  %v192 = vunpack.c.l.b16 %v41
  %v193 = vunpack.c.l.b16 %v42
  %v194 = vunpack.c.l.b16 %v43
  %v195 = vunpack.c.l.b16 %v44
  %v196 = vunpack.c.l.b16 %v45
  %v197 = vunpack.c.l.b16 %v46
  %v198 = vunpack.c.l.b16 %v47
  %v199 = vunpack.c.l.b16 %v48
  %v200 = vunpack.c.l.b16 %v49
  %v201 = vunpack.c.l.b16 %v50
  %v202 = vunpack.c.l.b16 %v51
  %v203 = vunpack.c.l.b16 %v52
  %v204 = vunpack.c.l.b16 %v53
  %v205 = vunpack.c.l.b16 %v54
  %v206 = vunpack.c.l.b16 %v55
  %v207 = vunpack.c.l.b16 %v56
  %v208 = vunpack.c.l.b16 %v57
  %v209 = vunpack.c.l.b16 %v58
  %v210 = vunpack.c.l.b16 %v59
  %v211 = vunpack.c.l.b16 %v60
  %v212 = vunpack.c.l.b16 %v61
  %v213 = vunpack.c.l.b16 %v62
  %v214 = vpack.c.b16 %v183, %v182
  %v215 = vpack.c.b16 %v185, %v184
  %v216 = vpack.c.b16 %v187, %v186
  %v217 = vpack.c.b16 %v189, %v188
  %v218 = vpack.c.b16 %v191, %v190
  %v219 = vpack.c.b16 %v193, %v192
  %v220 = vpack.c.b16 %v195, %v194
  %v221 = vpack.c.b16 %v197, %v196
  %v222 = vpack.c.b16 %v199, %v198
  %v223 = vpack.c.b16 %v201, %v200
  %v224 = vpack.c.b16 %v203, %v202
  %v225 = vpack.c.b16 %v205, %v204
  %v226 = vpack.c.b16 %v207, %v206
  %v227 = vpack.c.b16 %v209, %v208
  %v228 = vpack.c.b16 %v211, %v210
  %v229 = vpack.c.b16 %v213, %v212
  %246 = vmatprep.subr.bf16.mxu0 0
  %247 = vmatpush1.bf16.msra.mxu0 %v221
  %248 = vmatprep.subr.bf16.mxu0 0
  %249 = vmatpush1.bf16.msra.mxu0 %v220
  %250 = vmatprep.subr.bf16.mxu0 0
  %251 = vmatpush1.bf16.msra.mxu0 %v219
  %252 = vmatprep.subr.bf16.mxu0 0
  %253 = vmatpush1.bf16.msra.mxu0 %v218
  %254 = vmatprep.subr.bf16.mxu0 0
  %255 = vmatpush1.bf16.msra.mxu0 %v217
  %256 = vmatprep.subr.bf16.mxu0 0
  %257 = vmatpush1.bf16.msra.mxu0 %v216
  %258 = vmatprep.subr.bf16.mxu0 0
  %259 = vmatpush1.bf16.msra.mxu0 %v215
  %260 = vmatprep.subr.bf16.mxu0 0
  %261 = vmatpush1.bf16.msra.mxu0 %v214
  %262 = vmatprep.subr.bf16.mxu0 0
  %263 = vmatpush2.bf16.msra.mxu0 %v229
  %264 = vmatprep.subr.bf16.mxu0 0
  %265 = vmatpush2.bf16.msra.mxu0 %v228
  %266 = vmatprep.subr.bf16.mxu0 0
  %267 = vmatpush2.bf16.msra.mxu0 %v227
  %268 = vmatprep.subr.bf16.mxu0 0
  %269 = vmatpush2.bf16.msra.mxu0 %v226
  %270 = vmatprep.subr.bf16.mxu0 0
  %271 = vmatpush2.bf16.msra.mxu0 %v225
  %272 = vmatprep.subr.bf16.mxu0 0
  %273 = vmatpush2.bf16.msra.mxu0 %v224
  %274 = vmatprep.subr.bf16.mxu0 0
  %275 = vmatpush2.bf16.msra.mxu0 %v223
  %276 = vmatprep.subr.bf16.mxu0 0
  %277 = vmatpush2.bf16.msra.mxu0 %v222
  %278 = vmatprep.mubr.bf16.mxu0 %v119
  %279 = vmatmul.mubr.bf16.gmra.mxu0 %v118
  %v280 = vpop.f32.mrf.mxu0
  %v281 = vadd.f32 %v68, %v280
  %v282 = vpop.f32.mrf.mxu0
  %v283 = vpop.f32.mrf.mxu0
  %v284 = vadd.f32 %v68, %v283
  %v285 = vpop.f32.mrf.mxu0
  %286 = vmatprep.mubr.bf16.mxu0 %v121
  %287 = vmatmul.mubr.bf16.gmra.mxu0 %v120
  %v288 = vpop.f32.mrf.mxu0
  %v289 = vadd.f32 %v68, %v288
  %v290 = vpop.f32.mrf.mxu0
  %v291 = vpop.f32.mrf.mxu0
  %v292 = vadd.f32 %v68, %v291
  %v293 = vpop.f32.mrf.mxu0
  %294 = vmatprep.mubr.bf16.mxu0 %v123
  %295 = vmatmul.mubr.bf16.gmra.mxu0 %v122
  %v296 = vpop.f32.mrf.mxu0
  %v297 = vadd.f32 %v68, %v296
  %v298 = vpop.f32.mrf.mxu0
  %v299 = vpop.f32.mrf.mxu0
  %v300 = vadd.f32 %v68, %v299
  %v301 = vpop.f32.mrf.mxu0
  %302 = vmatprep.mubr.bf16.mxu0 %v125
  %303 = vmatmul.mubr.bf16.gmra.mxu0 %v124
  %v304 = vpop.f32.mrf.mxu0
  %v305 = vadd.f32 %v68, %v304
  %v306 = vpop.f32.mrf.mxu0
  %v307 = vpop.f32.mrf.mxu0
  %v308 = vadd.f32 %v68, %v307
  %v309 = vpop.f32.mrf.mxu0
  %310 = vmatprep.mubr.bf16.mxu0 %v127
  %311 = vmatmul.mubr.bf16.gmra.mxu0 %v126
  %v312 = vpop.f32.mrf.mxu0
  %v313 = vadd.f32 %v68, %v312
  %v314 = vpop.f32.mrf.mxu0
  %v315 = vpop.f32.mrf.mxu0
  %v316 = vadd.f32 %v68, %v315
  %v317 = vpop.f32.mrf.mxu0
  %318 = vmatprep.mubr.bf16.mxu0 %v129
  %319 = vmatmul.mubr.bf16.gmra.mxu0 %v128
  %v320 = vpop.f32.mrf.mxu0
  %v321 = vadd.f32 %v68, %v320
  %v322 = vpop.f32.mrf.mxu0
  %v323 = vpop.f32.mrf.mxu0
  %v324 = vadd.f32 %v68, %v323
  %v325 = vpop.f32.mrf.mxu0
  %326 = vmatprep.mubr.bf16.mxu0 %v131
  %327 = vmatmul.mubr.bf16.gmra.mxu0 %v130
  %v328 = vpop.f32.mrf.mxu0
  %v329 = vadd.f32 %v68, %v328
  %v330 = vpop.f32.mrf.mxu0
  %v331 = vpop.f32.mrf.mxu0
  %v332 = vadd.f32 %v68, %v331
  %v333 = vpop.f32.mrf.mxu0
  %334 = vmatprep.mubr.bf16.mxu0 %v133
  %335 = vmatmul.mubr.bf16.gmra.mxu0 %v132
  %v336 = vpop.f32.mrf.mxu0
  %v337 = vadd.f32 %v68, %v336
  %v338 = vpop.f32.mrf.mxu0
  %v339 = vpop.f32.mrf.mxu0
  %v340 = vadd.f32 %v68, %v339
  %v341 = vpop.f32.mrf.mxu0
  %342 = vdwg.mxu0
  %v343 = vmax.f32 %v281, 0.0
  %v344 = vmax.f32 %v284, 0.0
  %v345 = vmax.f32 %v289, 0.0
  %v346 = vmax.f32 %v292, 0.0
  %v347 = vmax.f32 %v297, 0.0
  %v348 = vmax.f32 %v300, 0.0
  %v349 = vmax.f32 %v305, 0.0
  %v350 = vmax.f32 %v308, 0.0
  %v351 = vmax.f32 %v313, 0.0
  %v352 = vmax.f32 %v316, 0.0
  %v353 = vmax.f32 %v321, 0.0
  %v354 = vmax.f32 %v324, 0.0
  %v355 = vmax.f32 %v329, 0.0
  %v356 = vmax.f32 %v332, 0.0
  %v357 = vmax.f32 %v337, 0.0
  %v358 = vmax.f32 %v340, 0.0
  %359 = vst [vmem:[%s3] sm:$0xff] %v343
  %360 = vst [vmem:[%s3 + $0x8] sm:$0xff] %v344
  %361 = vst [vmem:[%s3 + $0x10] sm:$0xff] %v345
  %362 = vst [vmem:[%s3 + $0x18] sm:$0xff] %v346
  %363 = vst [vmem:[%s3 + $0x20] sm:$0xff] %v347
  %364 = vst [vmem:[%s3 + $0x28] sm:$0xff] %v348
  %365 = vst [vmem:[%s3 + $0x30] sm:$0xff] %v349
  %366 = vst [vmem:[%s3 + $0x38] sm:$0xff] %v350
  %367 = vst [vmem:[%s3 + $0x40] sm:$0xff] %v351
  %368 = vst [vmem:[%s3 + $0x48] sm:$0xff] %v352
  %369 = vst [vmem:[%s3 + $0x50] sm:$0xff] %v353
  %370 = vst [vmem:[%s3 + $0x58] sm:$0xff] %v354
  %371 = vst [vmem:[%s3 + $0x60] sm:$0xff] %v355
  %372 = vst [vmem:[%s3 + $0x68] sm:$0xff] %v356
  %373 = vst [vmem:[%s3 + $0x70] sm:$0xff] %v357
  %374 = vst [vmem:[%s3 + $0x78] sm:$0xff] %v358
  // Predicated region
  $region14: #{_lambda_.5} parent=0 // pred_check
    _
  $region15: #{_lambda_.5} parent=0 // pred_check_branch
    %376 = sbr.rel (0) target = $region17
  $region16: #{_lambda_.5} parent=0 // pred_region
    _
  $region17: #{_lambda_.5} parent=0 // pred_fallthru
    _
  // Predicated region
  $region18: #{_lambda_.5} parent=0 // pred_check
    _
  $region19: #{_lambda_.5} parent=0 // pred_check_branch
    %378 = sbr.rel (0) target = $region21
  $region20: #{_lambda_.5} parent=0 // pred_region
    _
  $region21: #{_lambda_.5} parent=0 // pred_fallthru
    _

// kernel: _lambda_.6
$region0: #{_lambda_.6}
  #allocation0 [shape = 'u32[]', space=smem, size = 0x4, offset = 0x4, fixed_abs, tag = 'smem constant byte address 0x4 - core index']
  #allocation1 [shape = 'u32[144,128]{1,0:T(1,128)}', space=vmem, size = 0x12000, scoped, tag = 'internal scratch']
  #allocation2 [shape = 'f32[128,128]{1,0:T(8,128)}', space=vmem, size = 0x10000, scoped, tag = 'scratch operand']
  %s0 = inlined_call_operand.vmem [shape: bf16[128,384], index: 0, kind: input, shape index: {}]
  %s1 = inlined_call_operand.vmem [shape: bf16[384,128], index: 1, kind: input, shape index: {}]
  %s2 = inlined_call_operand.vmem [shape: f32[1,128], index: 2, kind: input, shape index: {}]
  %s3 = inlined_call_operand.vmem [shape: bf16[128,128], index: 3, kind: input, shape index: {}]
  %s4 = inlined_call_operand.vmem [shape: f32[1,128], index: 4, kind: input, shape index: {}]
  %s5 = inlined_call_operand.vmem [shape: f32[128,128], index: 5, kind: output, shape index: {}]
  %s6 = sld [smem:[#allocation0]]
  $region38: #{_lambda_.6} parent=0
    _
  %s8 = ssub.s32 1, %s6
  %s9 = scalar_select 0, %s8, %s6
  // Predicated region
  $region2: #{_lambda_.6} parent=0 // pred_check
    _
  $region3: #{_lambda_.6} parent=0 // pred_check_branch
    %11 = sbr.rel (0) target = $region5
  $region4: #{_lambda_.6} parent=0 // pred_region
    _
  $region5: #{_lambda_.6} parent=0 // pred_fallthru
    _
  // Predicated region
  $region6: #{_lambda_.6} parent=0 // pred_check
    _
  $region7: #{_lambda_.6} parent=0 // pred_check_branch
    %13 = sbr.rel (0) target = $region9
  $region8: #{_lambda_.6} parent=0 // pred_region
    _
  $region9: #{_lambda_.6} parent=0 // pred_fallthru
    _
  // Predicated region
  $region10: #{_lambda_.6} parent=0 // pred_check
    _
  $region11: #{_lambda_.6} parent=0 // pred_check_branch
    %15 = sbr.rel (0) target = $region13
  $region12: #{_lambda_.6} parent=0 // pred_region
    _
  $region13: #{_lambda_.6} parent=0 // pred_fallthru
    _
  // Predicated region
  $region14: #{_lambda_.6} parent=0 // pred_check
    _
  $region15: #{_lambda_.6} parent=0 // pred_check_branch
    %17 = sbr.rel (0) target = $region17
  $region16: #{_lambda_.6} parent=0 // pred_region
    _
  $region17: #{_lambda_.6} parent=0 // pred_fallthru
    _
  // Predicated region
  $region18: #{_lambda_.6} parent=0 // pred_check
    _
  $region19: #{_lambda_.6} parent=0 // pred_check_branch
    %19 = sbr.rel (0) target = $region21
  $region20: #{_lambda_.6} parent=0 // pred_region
    _
  $region21: #{_lambda_.6} parent=0 // pred_fallthru
    _
  %p21 = scmp.eq.s32.totalorder 0, 0
  // Predicated region
  $region22: #{_lambda_.6} parent=0 // pred_check
    %p22 = pneg %p21
  $region23: #{_lambda_.6} parent=0 // pred_check_branch
    %24 = sbr.rel (%p22) target = $region25
  $region24: #{_lambda_.6} parent=0 // pred_region
    %25 = vst [vmem:[#allocation2] sm:$0xff] 0.0
    %26 = vst [vmem:[#allocation2 + $0x8] sm:$0xff] 0.0
    %27 = vst [vmem:[#allocation2 + $0x10] sm:$0xff] 0.0
    %28 = vst [vmem:[#allocation2 + $0x18] sm:$0xff] 0.0
    %29 = vst [vmem:[#allocation2 + $0x20] sm:$0xff] 0.0
    %30 = vst [vmem:[#allocation2 + $0x28] sm:$0xff] 0.0
    %31 = vst [vmem:[#allocation2 + $0x30] sm:$0xff] 0.0
    %32 = vst [vmem:[#allocation2 + $0x38] sm:$0xff] 0.0
    %33 = vst [vmem:[#allocation2 + $0x40] sm:$0xff] 0.0
    %34 = vst [vmem:[#allocation2 + $0x48] sm:$0xff] 0.0
    %35 = vst [vmem:[#allocation2 + $0x50] sm:$0xff] 0.0
    %36 = vst [vmem:[#allocation2 + $0x58] sm:$0xff] 0.0
    %37 = vst [vmem:[#allocation2 + $0x60] sm:$0xff] 0.0
    %38 = vst [vmem:[#allocation2 + $0x68] sm:$0xff] 0.0
    %39 = vst [vmem:[#allocation2 + $0x70] sm:$0xff] 0.0
    %40 = vst [vmem:[#allocation2 + $0x78] sm:$0xff] 0.0
  $region25: #{_lambda_.6} parent=0 // pred_fallthru
    _
  %v41 = vld [vmem:[#allocation2] sm:$0xff]
  %v42 = vld [vmem:[#allocation2 + $0x8] sm:$0xff]
  %v43 = vld [vmem:[#allocation2 + $0x10] sm:$0xff]
  %v44 = vld [vmem:[#allocation2 + $0x18] sm:$0xff]
  %v45 = vld [vmem:[#allocation2 + $0x20] sm:$0xff]
  %v46 = vld [vmem:[#allocation2 + $0x28] sm:$0xff]
  %v47 = vld [vmem:[#allocation2 + $0x30] sm:$0xff]
  %v48 = vld [vmem:[#allocation2 + $0x38] sm:$0xff]
  %v49 = vld [vmem:[#allocation2 + $0x40] sm:$0xff]
  %v50 = vld [vmem:[#allocation2 + $0x48] sm:$0xff]
  %v51 = vld [vmem:[#allocation2 + $0x50] sm:$0xff]
  %v52 = vld [vmem:[#allocation2 + $0x58] sm:$0xff]
  %v53 = vld [vmem:[#allocation2 + $0x60] sm:$0xff]
  %v54 = vld [vmem:[#allocation2 + $0x68] sm:$0xff]
  %v55 = vld [vmem:[#allocation2 + $0x70] sm:$0xff]
  %v56 = vld [vmem:[#allocation2 + $0x78] sm:$0xff]
  %v57 = vld [vmem:[%s0] sm:$0xff]
  %v58 = vld [vmem:[%s0 + $0x8] sm:$0xf]
  %v59 = vld [vmem:[%s0 + $0xc] sm:$0xff]
  %v60 = vld [vmem:[%s0 + $0x14] sm:$0xf]
  %v61 = vld [vmem:[%s0 + $0x18] sm:$0xff]
  %v62 = vld [vmem:[%s0 + $0x20] sm:$0xf]
  %v63 = vld [vmem:[%s0 + $0x24] sm:$0xff]
  %v64 = vld [vmem:[%s0 + $0x2c] sm:$0xf]
  %v65 = vld [vmem:[%s0 + $0x30] sm:$0xff]
  %v66 = vld [vmem:[%s0 + $0x38] sm:$0xf]
  %v67 = vld [vmem:[%s0 + $0x3c] sm:$0xff]
  %v68 = vld [vmem:[%s0 + $0x44] sm:$0xf]
  %v69 = vld [vmem:[%s0 + $0x48] sm:$0xff]
  %v70 = vld [vmem:[%s0 + $0x50] sm:$0xf]
  %v71 = vld [vmem:[%s0 + $0x54] sm:$0xff]
  %v72 = vld [vmem:[%s0 + $0x5c] sm:$0xf]
  %v73 = vld [vmem:[%s0 + $0x60] sm:$0xff]
  %v74 = vld [vmem:[%s0 + $0x68] sm:$0xf]
  %v75 = vld [vmem:[%s0 + $0x6c] sm:$0xff]
  %v76 = vld [vmem:[%s0 + $0x74] sm:$0xf]
  %v77 = vld [vmem:[%s0 + $0x78] sm:$0xff]
  %v78 = vld [vmem:[%s0 + $0x80] sm:$0xf]
  %v79 = vld [vmem:[%s0 + $0x84] sm:$0xff]
  %v80 = vld [vmem:[%s0 + $0x8c] sm:$0xf]
  %v81 = vld [vmem:[%s0 + $0x90] sm:$0xff]
  %v82 = vld [vmem:[%s0 + $0x98] sm:$0xf]
  %v83 = vld [vmem:[%s0 + $0x9c] sm:$0xff]
  %v84 = vld [vmem:[%s0 + $0xa4] sm:$0xf]
  %v85 = vld [vmem:[%s0 + $0xa8] sm:$0xff]
  %v86 = vld [vmem:[%s0 + $0xb0] sm:$0xf]
  %v87 = vld [vmem:[%s0 + $0xb4] sm:$0xff]
  %v88 = vld [vmem:[%s0 + $0xbc] sm:$0xf]
  %v89 = vld [vmem:[%s1] sm:$0xf]
  %v90 = vld [vmem:[%s1 + $0x4] sm:$0xf]
  %v91 = vld [vmem:[%s1 + $0x8] sm:$0xf]
  %v92 = vld [vmem:[%s1 + $0xc] sm:$0xf]
  %v93 = vld [vmem:[%s1 + $0x10] sm:$0xf]
  %v94 = vld [vmem:[%s1 + $0x14] sm:$0xf]
  %v95 = vld [vmem:[%s1 + $0x18] sm:$0xf]
  %v96 = vld [vmem:[%s1 + $0x1c] sm:$0xf]
  %v97 = vld [vmem:[%s1 + $0x20] sm:$0xf]
  %v98 = vld [vmem:[%s1 + $0x24] sm:$0xf]
  %v99 = vld [vmem:[%s1 + $0x28] sm:$0xf]
  %v100 = vld [vmem:[%s1 + $0x2c] sm:$0xf]
  %v101 = vld [vmem:[%s1 + $0x30] sm:$0xf]
  %v102 = vld [vmem:[%s1 + $0x34] sm:$0xf]
  %v103 = vld [vmem:[%s1 + $0x38] sm:$0xf]
  %v104 = vld [vmem:[%s1 + $0x3c] sm:$0xf]
  %v105 = vld [vmem:[%s1 + $0x40] sm:$0xf]
  %v106 = vld [vmem:[%s1 + $0x44] sm:$0xf]
  %v107 = vld [vmem:[%s1 + $0x48] sm:$0xf]
  %v108 = vld [vmem:[%s1 + $0x4c] sm:$0xf]
  %v109 = vld [vmem:[%s1 + $0x50] sm:$0xf]
  %v110 = vld [vmem:[%s1 + $0x54] sm:$0xf]
  %v111 = vld [vmem:[%s1 + $0x58] sm:$0xf]
  %v112 = vld [vmem:[%s1 + $0x5c] sm:$0xf]
  %v113 = vld [vmem:[%s1 + $0x60] sm:$0xf]
  %v114 = vld [vmem:[%s1 + $0x64] sm:$0xf]
  %v115 = vld [vmem:[%s1 + $0x68] sm:$0xf]
  %v116 = vld [vmem:[%s1 + $0x6c] sm:$0xf]
  %v117 = vld [vmem:[%s1 + $0x70] sm:$0xf]
  %v118 = vld [vmem:[%s1 + $0x74] sm:$0xf]
  %v119 = vld [vmem:[%s1 + $0x78] sm:$0xf]
  %v120 = vld [vmem:[%s1 + $0x7c] sm:$0xf]
  %v121 = vld [vmem:[%s1 + $0x80] sm:$0xf]
  %v122 = vld [vmem:[%s1 + $0x84] sm:$0xf]
  %v123 = vld [vmem:[%s1 + $0x88] sm:$0xf]
  %v124 = vld [vmem:[%s1 + $0x8c] sm:$0xf]
  %v125 = vld [vmem:[%s1 + $0x90] sm:$0xf]
  %v126 = vld [vmem:[%s1 + $0x94] sm:$0xf]
  %v127 = vld [vmem:[%s1 + $0x98] sm:$0xf]
  %v128 = vld [vmem:[%s1 + $0x9c] sm:$0xf]
  %v129 = vld [vmem:[%s1 + $0xa0] sm:$0xf]
  %v130 = vld [vmem:[%s1 + $0xa4] sm:$0xf]
  %v131 = vld [vmem:[%s1 + $0xa8] sm:$0xf]
  %v132 = vld [vmem:[%s1 + $0xac] sm:$0xf]
  %v133 = vld [vmem:[%s1 + $0xb0] sm:$0xf]
  %v134 = vld [vmem:[%s1 + $0xb4] sm:$0xf]
  %v135 = vld [vmem:[%s1 + $0xb8] sm:$0xf]
  %v136 = vld [vmem:[%s1 + $0xbc] sm:$0xf]
  %v169 = vunpack.c.l.b16 %v57
  %v170 = vunpack.c.h.b16 %v57
  %v171 = vunpack.c.l.b16 %v58
  %v172 = vunpack.c.l.b16 %v59
  %v173 = vunpack.c.h.b16 %v59
  %v174 = vunpack.c.l.b16 %v60
  %v175 = vunpack.c.l.b16 %v61
  %v176 = vunpack.c.h.b16 %v61
  %v177 = vunpack.c.l.b16 %v62
  %v178 = vunpack.c.l.b16 %v63
  %v179 = vunpack.c.h.b16 %v63
  %v180 = vunpack.c.l.b16 %v64
  %v181 = vunpack.c.l.b16 %v65
  %v182 = vunpack.c.h.b16 %v65
  %v183 = vunpack.c.l.b16 %v66
  %v184 = vunpack.c.l.b16 %v67
  %v185 = vunpack.c.h.b16 %v67
  %v186 = vunpack.c.l.b16 %v68
  %v187 = vunpack.c.l.b16 %v69
  %v188 = vunpack.c.h.b16 %v69
  %v189 = vunpack.c.l.b16 %v70
  %v190 = vunpack.c.l.b16 %v71
  %v191 = vunpack.c.h.b16 %v71
  %v192 = vunpack.c.l.b16 %v72
  %v193 = vunpack.c.l.b16 %v73
  %v194 = vunpack.c.h.b16 %v73
  %v195 = vunpack.c.l.b16 %v74
  %v196 = vunpack.c.l.b16 %v75
  %v197 = vunpack.c.h.b16 %v75
  %v198 = vunpack.c.l.b16 %v76
  %v199 = vunpack.c.l.b16 %v77
  %v200 = vunpack.c.h.b16 %v77
  %v201 = vunpack.c.l.b16 %v78
  %v202 = vunpack.c.l.b16 %v79
  %v203 = vunpack.c.h.b16 %v79
  %v204 = vunpack.c.l.b16 %v80
  %v205 = vunpack.c.l.b16 %v81
  %v206 = vunpack.c.h.b16 %v81
  %v207 = vunpack.c.l.b16 %v82
  %v208 = vunpack.c.l.b16 %v83
  %v209 = vunpack.c.h.b16 %v83
  %v210 = vunpack.c.l.b16 %v84
  %v211 = vunpack.c.l.b16 %v85
  %v212 = vunpack.c.h.b16 %v85
  %v213 = vunpack.c.l.b16 %v86
  %v214 = vunpack.c.l.b16 %v87
  %v215 = vunpack.c.h.b16 %v87
  %v216 = vunpack.c.l.b16 %v88
  %v217 = vpack.c.b16 %v172, %v169
  %v218 = vpack.c.b16 %v173, %v170
  %v219 = vpack.c.b16 %v174, %v171
  %v220 = vpack.c.b16 %v178, %v175
  %v221 = vpack.c.b16 %v179, %v176
  %v222 = vpack.c.b16 %v180, %v177
  %v223 = vpack.c.b16 %v184, %v181
  %v224 = vpack.c.b16 %v185, %v182
  %v225 = vpack.c.b16 %v186, %v183
  %v226 = vpack.c.b16 %v190, %v187
  %v227 = vpack.c.b16 %v191, %v188
  %v228 = vpack.c.b16 %v192, %v189
  %v229 = vpack.c.b16 %v196, %v193
  %v230 = vpack.c.b16 %v197, %v194
  %v231 = vpack.c.b16 %v198, %v195
  %v232 = vpack.c.b16 %v202, %v199
  %v233 = vpack.c.b16 %v203, %v200
  %v234 = vpack.c.b16 %v204, %v201
  %v235 = vpack.c.b16 %v208, %v205
  %v236 = vpack.c.b16 %v209, %v206
  %v237 = vpack.c.b16 %v210, %v207
  %v238 = vpack.c.b16 %v214, %v211
  %v239 = vpack.c.b16 %v215, %v212
  %v240 = vpack.c.b16 %v216, %v213
  %v313 = vunpack.c.l.b16 %v89
  %v314 = vunpack.c.l.b16 %v90
  %v315 = vunpack.c.l.b16 %v91
  %v316 = vunpack.c.l.b16 %v92
  %v317 = vunpack.c.l.b16 %v93
  %v318 = vunpack.c.l.b16 %v94
  %v319 = vunpack.c.l.b16 %v95
  %v320 = vunpack.c.l.b16 %v96
  %v321 = vunpack.c.l.b16 %v97
  %v322 = vunpack.c.l.b16 %v98
  %v323 = vunpack.c.l.b16 %v99
  %v324 = vunpack.c.l.b16 %v100
  %v325 = vunpack.c.l.b16 %v101
  %v326 = vunpack.c.l.b16 %v102
  %v327 = vunpack.c.l.b16 %v103
  %v328 = vunpack.c.l.b16 %v104
  %v329 = vunpack.c.l.b16 %v105
  %v330 = vunpack.c.l.b16 %v106
  %v331 = vunpack.c.l.b16 %v107
  %v332 = vunpack.c.l.b16 %v108
  %v333 = vunpack.c.l.b16 %v109
  %v334 = vunpack.c.l.b16 %v110
  %v335 = vunpack.c.l.b16 %v111
  %v336 = vunpack.c.l.b16 %v112
  %v337 = vunpack.c.l.b16 %v113
  %v338 = vunpack.c.l.b16 %v114
  %v339 = vunpack.c.l.b16 %v115
  %v340 = vunpack.c.l.b16 %v116
  %v341 = vunpack.c.l.b16 %v117
  %v342 = vunpack.c.l.b16 %v118
  %v343 = vunpack.c.l.b16 %v119
  %v344 = vunpack.c.l.b16 %v120
  %v345 = vunpack.c.l.b16 %v121
  %v346 = vunpack.c.l.b16 %v122
  %v347 = vunpack.c.l.b16 %v123
  %v348 = vunpack.c.l.b16 %v124
  %v349 = vunpack.c.l.b16 %v125
  %v350 = vunpack.c.l.b16 %v126
  %v351 = vunpack.c.l.b16 %v127
  %v352 = vunpack.c.l.b16 %v128
  %v353 = vunpack.c.l.b16 %v129
  %v354 = vunpack.c.l.b16 %v130
  %v355 = vunpack.c.l.b16 %v131
  %v356 = vunpack.c.l.b16 %v132
  %v357 = vunpack.c.l.b16 %v133
  %v358 = vunpack.c.l.b16 %v134
  %v359 = vunpack.c.l.b16 %v135
  %v360 = vunpack.c.l.b16 %v136
  %v361 = vpack.c.b16 %v314, %v313
  %v362 = vpack.c.b16 %v316, %v315
  %v363 = vpack.c.b16 %v318, %v317
  %v364 = vpack.c.b16 %v320, %v319
  %v365 = vpack.c.b16 %v322, %v321
  %v366 = vpack.c.b16 %v324, %v323
  %v367 = vpack.c.b16 %v326, %v325
  %v368 = vpack.c.b16 %v328, %v327
  %v369 = vpack.c.b16 %v330, %v329
  %v370 = vpack.c.b16 %v332, %v331
  %v371 = vpack.c.b16 %v334, %v333
  %v372 = vpack.c.b16 %v336, %v335
  %v373 = vpack.c.b16 %v338, %v337
  %v374 = vpack.c.b16 %v340, %v339
  %v375 = vpack.c.b16 %v342, %v341
  %v376 = vpack.c.b16 %v344, %v343
  %v377 = vpack.c.b16 %v346, %v345
  %v378 = vpack.c.b16 %v348, %v347
  %v379 = vpack.c.b16 %v350, %v349
  %v380 = vpack.c.b16 %v352, %v351
  %v381 = vpack.c.b16 %v354, %v353
  %v382 = vpack.c.b16 %v356, %v355
  %v383 = vpack.c.b16 %v358, %v357
  %v384 = vpack.c.b16 %v360, %v359
  %409 = vmatprep.subr.bf16.mxu0 0
  %410 = vmatpush1.bf16.msra.mxu0 %v368
  %411 = vmatprep.subr.bf16.mxu0 0
  %412 = vmatpush1.bf16.msra.mxu0 %v367
  %413 = vmatprep.subr.bf16.mxu0 0
  %414 = vmatpush1.bf16.msra.mxu0 %v366
  %415 = vmatprep.subr.bf16.mxu0 0
  %416 = vmatpush1.bf16.msra.mxu0 %v365
  %417 = vmatprep.subr.bf16.mxu0 0
  %418 = vmatpush1.bf16.msra.mxu0 %v364
  %419 = vmatprep.subr.bf16.mxu0 0
  %420 = vmatpush1.bf16.msra.mxu0 %v363
  %421 = vmatprep.subr.bf16.mxu0 0
  %422 = vmatpush1.bf16.msra.mxu0 %v362
  %423 = vmatprep.subr.bf16.mxu0 0
  %424 = vmatpush1.bf16.msra.mxu0 %v361
  %425 = vmatprep.subr.bf16.mxu0 0
  %426 = vmatpush2.bf16.msra.mxu0 %v376
  %427 = vmatprep.subr.bf16.mxu0 0
  %428 = vmatpush2.bf16.msra.mxu0 %v375
  %429 = vmatprep.subr.bf16.mxu0 0
  %430 = vmatpush2.bf16.msra.mxu0 %v374
  %431 = vmatprep.subr.bf16.mxu0 0
  %432 = vmatpush2.bf16.msra.mxu0 %v373
  %433 = vmatprep.subr.bf16.mxu0 0
  %434 = vmatpush2.bf16.msra.mxu0 %v372
  %435 = vmatprep.subr.bf16.mxu0 0
  %436 = vmatpush2.bf16.msra.mxu0 %v371
  %437 = vmatprep.subr.bf16.mxu0 0
  %438 = vmatpush2.bf16.msra.mxu0 %v370
  %439 = vmatprep.subr.bf16.mxu0 0
  %440 = vmatpush2.bf16.msra.mxu0 %v369
  %441 = vmatprep.mubr.bf16.mxu0 %v218
  %442 = vmatmul.mubr.bf16.gmra.mxu0 %v217
  %v443 = vpop.f32.mrf.mxu0
  %v444 = vadd.f32 0.0, %v443
  %v445 = vpop.f32.mrf.mxu0
  %v446 = vpop.f32.mrf.mxu0
  %v447 = vadd.f32 0.0, %v446
  %v448 = vpop.f32.mrf.mxu0
  %449 = vmatprep.mubr.bf16.mxu0 %v221
  %450 = vmatmul.mubr.bf16.gmra.mxu0 %v220
  %v451 = vpop.f32.mrf.mxu0
  %v452 = vadd.f32 0.0, %v451
  %v453 = vpop.f32.mrf.mxu0
  %v454 = vpop.f32.mrf.mxu0
  %v455 = vadd.f32 0.0, %v454
  %v456 = vpop.f32.mrf.mxu0
  %457 = vmatprep.mubr.bf16.mxu0 %v224
  %458 = vmatmul.mubr.bf16.gmra.mxu0 %v223
  %v459 = vpop.f32.mrf.mxu0
  %v460 = vadd.f32 0.0, %v459
  %v461 = vpop.f32.mrf.mxu0
  %v462 = vpop.f32.mrf.mxu0
  %v463 = vadd.f32 0.0, %v462
  %v464 = vpop.f32.mrf.mxu0
  %465 = vmatprep.mubr.bf16.mxu0 %v227
  %466 = vmatmul.mubr.bf16.gmra.mxu0 %v226
  %v467 = vpop.f32.mrf.mxu0
  %v468 = vadd.f32 0.0, %v467
  %v469 = vpop.f32.mrf.mxu0
  %v470 = vpop.f32.mrf.mxu0
  %v471 = vadd.f32 0.0, %v470
  %v472 = vpop.f32.mrf.mxu0
  %473 = vmatprep.mubr.bf16.mxu0 %v230
  %474 = vmatmul.mubr.bf16.gmra.mxu0 %v229
  %v475 = vpop.f32.mrf.mxu0
  %v476 = vadd.f32 0.0, %v475
  %v477 = vpop.f32.mrf.mxu0
  %v478 = vpop.f32.mrf.mxu0
  %v479 = vadd.f32 0.0, %v478
  %v480 = vpop.f32.mrf.mxu0
  %481 = vmatprep.mubr.bf16.mxu0 %v233
  %482 = vmatmul.mubr.bf16.gmra.mxu0 %v232
  %v483 = vpop.f32.mrf.mxu0
  %v484 = vadd.f32 0.0, %v483
  %v485 = vpop.f32.mrf.mxu0
  %v486 = vpop.f32.mrf.mxu0
  %v487 = vadd.f32 0.0, %v486
  %v488 = vpop.f32.mrf.mxu0
  %489 = vmatprep.mubr.bf16.mxu0 %v236
  %490 = vmatmul.mubr.bf16.gmra.mxu0 %v235
  %v491 = vpop.f32.mrf.mxu0
  %v492 = vadd.f32 0.0, %v491
  %v493 = vpop.f32.mrf.mxu0
  %v494 = vpop.f32.mrf.mxu0
  %v495 = vadd.f32 0.0, %v494
  %v496 = vpop.f32.mrf.mxu0
  %497 = vmatprep.mubr.bf16.mxu0 %v239
  %498 = vmatmul.mubr.bf16.gmra.mxu0 %v238
  %v499 = vpop.f32.mrf.mxu0
  %v500 = vadd.f32 0.0, %v499
  %v501 = vpop.f32.mrf.mxu0
  %v502 = vpop.f32.mrf.mxu0
  %v503 = vadd.f32 0.0, %v502
  %v504 = vpop.f32.mrf.mxu0
  %505 = vdwg.mxu0
  %506 = vmatprep.subr.bf16.mxu0 0
  %507 = vmatpush1.bf16.msra.mxu0 %v384
  %508 = vmatprep.subr.bf16.mxu0 0
  %509 = vmatpush1.bf16.msra.mxu0 %v383
  %510 = vmatprep.subr.bf16.mxu0 0
  %511 = vmatpush1.bf16.msra.mxu0 %v382
  %512 = vmatprep.subr.bf16.mxu0 0
  %513 = vmatpush1.bf16.msra.mxu0 %v381
  %514 = vmatprep.subr.bf16.mxu0 0
  %515 = vmatpush1.bf16.msra.mxu0 %v380
  %516 = vmatprep.subr.bf16.mxu0 0
  %517 = vmatpush1.bf16.msra.mxu0 %v379
  %518 = vmatprep.subr.bf16.mxu0 0
  %519 = vmatpush1.bf16.msra.mxu0 %v378
  %520 = vmatprep.subr.bf16.mxu0 0
  %521 = vmatpush1.bf16.msra.mxu0 %v377
  %522 = vmatprep.subr.bf16.mxu0 0
  %523 = vmatpush2.bf16.msra.mxu0 0
  %524 = vmatprep.subr.bf16.mxu0 0
  %525 = vmatpush2.bf16.msra.mxu0 0
  %526 = vmatprep.subr.bf16.mxu0 0
  %527 = vmatpush2.bf16.msra.mxu0 0
  %528 = vmatprep.subr.bf16.mxu0 0
  %529 = vmatpush2.bf16.msra.mxu0 0
  %530 = vmatprep.subr.bf16.mxu0 0
  %531 = vmatpush2.bf16.msra.mxu0 0
  %532 = vmatprep.subr.bf16.mxu0 0
  %533 = vmatpush2.bf16.msra.mxu0 0
  %534 = vmatprep.subr.bf16.mxu0 0
  %535 = vmatpush2.bf16.msra.mxu0 0
  %536 = vmatprep.subr.bf16.mxu0 0
  %537 = vmatpush2.bf16.msra.mxu0 0
  %538 = vmatprep.mubr.bf16.mxu0 0
  %539 = vmatmul.mubr.bf16.gmra.mxu0 %v219
  %v540 = vpop.f32.mrf.mxu0
  %v541 = vadd.f32 %v444, %v540
  %v542 = vpop.f32.mrf.mxu0
  %v543 = vpop.f32.mrf.mxu0
  %v544 = vadd.f32 %v447, %v543
  %v545 = vpop.f32.mrf.mxu0
  %546 = vmatprep.mubr.bf16.mxu0 0
  %547 = vmatmul.mubr.bf16.gmra.mxu0 %v222
  %v548 = vpop.f32.mrf.mxu0
  %v549 = vadd.f32 %v452, %v548
  %v550 = vpop.f32.mrf.mxu0
  %v551 = vpop.f32.mrf.mxu0
  %v552 = vadd.f32 %v455, %v551
  %v553 = vpop.f32.mrf.mxu0
  %554 = vmatprep.mubr.bf16.mxu0 0
  %555 = vmatmul.mubr.bf16.gmra.mxu0 %v225
  %v556 = vpop.f32.mrf.mxu0
  %v557 = vadd.f32 %v460, %v556
  %v558 = vpop.f32.mrf.mxu0
  %v559 = vpop.f32.mrf.mxu0
  %v560 = vadd.f32 %v463, %v559
  %v561 = vpop.f32.mrf.mxu0
  %562 = vmatprep.mubr.bf16.mxu0 0
  %563 = vmatmul.mubr.bf16.gmra.mxu0 %v228
  %v564 = vpop.f32.mrf.mxu0
  %v565 = vadd.f32 %v468, %v564
  %v566 = vpop.f32.mrf.mxu0
  %v567 = vpop.f32.mrf.mxu0
  %v568 = vadd.f32 %v471, %v567
  %v569 = vpop.f32.mrf.mxu0
  %570 = vmatprep.mubr.bf16.mxu0 0
  %571 = vmatmul.mubr.bf16.gmra.mxu0 %v231
  %v572 = vpop.f32.mrf.mxu0
  %v573 = vadd.f32 %v476, %v572
  %v574 = vpop.f32.mrf.mxu0
  %v575 = vpop.f32.mrf.mxu0
  %v576 = vadd.f32 %v479, %v575
  %v577 = vpop.f32.mrf.mxu0
  %578 = vmatprep.mubr.bf16.mxu0 0
  %579 = vmatmul.mubr.bf16.gmra.mxu0 %v234
  %v580 = vpop.f32.mrf.mxu0
  %v581 = vadd.f32 %v484, %v580
  %v582 = vpop.f32.mrf.mxu0
  %v583 = vpop.f32.mrf.mxu0
  %v584 = vadd.f32 %v487, %v583
  %v585 = vpop.f32.mrf.mxu0
  %586 = vmatprep.mubr.bf16.mxu0 0
  %587 = vmatmul.mubr.bf16.gmra.mxu0 %v237
  %v588 = vpop.f32.mrf.mxu0
  %v589 = vadd.f32 %v492, %v588
  %v590 = vpop.f32.mrf.mxu0
  %v591 = vpop.f32.mrf.mxu0
  %v592 = vadd.f32 %v495, %v591
  %v593 = vpop.f32.mrf.mxu0
  %594 = vmatprep.mubr.bf16.mxu0 0
  %595 = vmatmul.mubr.bf16.gmra.mxu0 %v240
  %v596 = vpop.f32.mrf.mxu0
  %v597 = vadd.f32 %v500, %v596
  %v598 = vpop.f32.mrf.mxu0
  %v599 = vpop.f32.mrf.mxu0
  %v600 = vadd.f32 %v503, %v599
  %v601 = vpop.f32.mrf.mxu0
  %602 = vdwg.mxu0
  %v603 = vadd.f32 %v41, %v541
  %v604 = vadd.f32 %v42, %v544
  %v605 = vadd.f32 %v43, %v549
  %v606 = vadd.f32 %v44, %v552
  %v607 = vadd.f32 %v45, %v557
  %v608 = vadd.f32 %v46, %v560
  %v609 = vadd.f32 %v47, %v565
  %v610 = vadd.f32 %v48, %v568
  %v611 = vadd.f32 %v49, %v573
  %v612 = vadd.f32 %v50, %v576
  %v613 = vadd.f32 %v51, %v581
  %v614 = vadd.f32 %v52, %v584
  %v615 = vadd.f32 %v53, %v589
  %v616 = vadd.f32 %v54, %v592
  %v617 = vadd.f32 %v55, %v597
  %v618 = vadd.f32 %v56, %v600
  %619 = vst [vmem:[#allocation2] sm:$0xff] %v603
  %620 = vst [vmem:[#allocation2 + $0x8] sm:$0xff] %v604
  %621 = vst [vmem:[#allocation2 + $0x10] sm:$0xff] %v605
  %622 = vst [vmem:[#allocation2 + $0x18] sm:$0xff] %v606
  %623 = vst [vmem:[#allocation2 + $0x20] sm:$0xff] %v607
  %624 = vst [vmem:[#allocation2 + $0x28] sm:$0xff] %v608
  %625 = vst [vmem:[#allocation2 + $0x30] sm:$0xff] %v609
  %626 = vst [vmem:[#allocation2 + $0x38] sm:$0xff] %v610
  %627 = vst [vmem:[#allocation2 + $0x40] sm:$0xff] %v611
  %628 = vst [vmem:[#allocation2 + $0x48] sm:$0xff] %v612
  %629 = vst [vmem:[#allocation2 + $0x50] sm:$0xff] %v613
  %630 = vst [vmem:[#allocation2 + $0x58] sm:$0xff] %v614
  %631 = vst [vmem:[#allocation2 + $0x60] sm:$0xff] %v615
  %632 = vst [vmem:[#allocation2 + $0x68] sm:$0xff] %v616
  %633 = vst [vmem:[#allocation2 + $0x70] sm:$0xff] %v617
  %634 = vst [vmem:[#allocation2 + $0x78] sm:$0xff] %v618
  // Predicated region
  $region26: #{_lambda_.6} parent=0 // pred_check
    %p635 = pneg %p21
  $region27: #{_lambda_.6} parent=0 // pred_check_branch
    %637 = sbr.rel (%p635) target = $region29
  $region28: #{_lambda_.6} parent=0 // pred_region
    %v638 = vld [vmem:[#allocation2] sm:$0xff]
    %v639 = vld [vmem:[#allocation2 + $0x8] sm:$0xff]
    %v640 = vld [vmem:[#allocation2 + $0x10] sm:$0xff]
    %v641 = vld [vmem:[#allocation2 + $0x18] sm:$0xff]
    %v642 = vld [vmem:[#allocation2 + $0x20] sm:$0xff]
    %v643 = vld [vmem:[#allocation2 + $0x28] sm:$0xff]
    %v644 = vld [vmem:[#allocation2 + $0x30] sm:$0xff]
    %v645 = vld [vmem:[#allocation2 + $0x38] sm:$0xff]
    %v646 = vld [vmem:[#allocation2 + $0x40] sm:$0xff]
    %v647 = vld [vmem:[#allocation2 + $0x48] sm:$0xff]
    %v648 = vld [vmem:[#allocation2 + $0x50] sm:$0xff]
    %v649 = vld [vmem:[#allocation2 + $0x58] sm:$0xff]
    %v650 = vld [vmem:[#allocation2 + $0x60] sm:$0xff]
    %v651 = vld [vmem:[#allocation2 + $0x68] sm:$0xff]
    %v652 = vld [vmem:[#allocation2 + $0x70] sm:$0xff]
    %v653 = vld [vmem:[#allocation2 + $0x78] sm:$0xff]
    %v654 = vld [vmem:[%s2] sm:$0x1]
    %v656 = vlaneseq
    %v657 = vshrl.u32 %v656, 7
    %v658 = vsub.s32 0, %v657
    %v659 = vrot.slane %v654, %v658
    %v661 = vadd.f32 %v638, %v659
    %v662 = vadd.f32 %v639, %v659
    %v663 = vadd.f32 %v640, %v659
    %v664 = vadd.f32 %v641, %v659
    %v665 = vadd.f32 %v642, %v659
    %v666 = vadd.f32 %v643, %v659
    %v667 = vadd.f32 %v644, %v659
    %v668 = vadd.f32 %v645, %v659
    %v669 = vadd.f32 %v646, %v659
    %v670 = vadd.f32 %v647, %v659
    %v671 = vadd.f32 %v648, %v659
    %v672 = vadd.f32 %v649, %v659
    %v673 = vadd.f32 %v650, %v659
    %v674 = vadd.f32 %v651, %v659
    %v675 = vadd.f32 %v652, %v659
    %v676 = vadd.f32 %v653, %v659
    %v677 = vmax.f32 %v661, 0.0
    %v678 = vmax.f32 %v662, 0.0
    %v679 = vmax.f32 %v663, 0.0
    %v680 = vmax.f32 %v664, 0.0
    %v681 = vmax.f32 %v665, 0.0
    %v682 = vmax.f32 %v666, 0.0
    %v683 = vmax.f32 %v667, 0.0
    %v684 = vmax.f32 %v668, 0.0
    %v685 = vmax.f32 %v669, 0.0
    %v686 = vmax.f32 %v670, 0.0
    %v687 = vmax.f32 %v671, 0.0
    %v688 = vmax.f32 %v672, 0.0
    %v689 = vmax.f32 %v673, 0.0
    %v690 = vmax.f32 %v674, 0.0
    %v691 = vmax.f32 %v675, 0.0
    %v692 = vmax.f32 %v676, 0.0
    %v693 = vpack.c.bf16 %v678, %v677
    %v694 = vpack.c.bf16 %v680, %v679
    %v695 = vpack.c.bf16 %v682, %v681
    %v696 = vpack.c.bf16 %v684, %v683
    %v697 = vpack.c.bf16 %v686, %v685
    %v698 = vpack.c.bf16 %v688, %v687
    %v699 = vpack.c.bf16 %v690, %v689
    %v700 = vpack.c.bf16 %v692, %v691
    %v701 = vld [vmem:[%s3] sm:$0xf]
    %v702 = vld [vmem:[%s3 + $0x4] sm:$0xf]
    %v703 = vld [vmem:[%s3 + $0x8] sm:$0xf]
    %v704 = vld [vmem:[%s3 + $0xc] sm:$0xf]
    %v705 = vld [vmem:[%s3 + $0x10] sm:$0xf]
    %v706 = vld [vmem:[%s3 + $0x14] sm:$0xf]
    %v707 = vld [vmem:[%s3 + $0x18] sm:$0xf]
    %v708 = vld [vmem:[%s3 + $0x1c] sm:$0xf]
    %v709 = vld [vmem:[%s3 + $0x20] sm:$0xf]
    %v710 = vld [vmem:[%s3 + $0x24] sm:$0xf]
    %v711 = vld [vmem:[%s3 + $0x28] sm:$0xf]
    %v712 = vld [vmem:[%s3 + $0x2c] sm:$0xf]
    %v713 = vld [vmem:[%s3 + $0x30] sm:$0xf]
    %v714 = vld [vmem:[%s3 + $0x34] sm:$0xf]
    %v715 = vld [vmem:[%s3 + $0x38] sm:$0xf]
    %v716 = vld [vmem:[%s3 + $0x3c] sm:$0xf]
    %v717 = vld [vmem:[%s4] sm:$0x1]
    %v719 = vlaneseq
    %v720 = vshrl.u32 %v719, 7
    %v721 = vsub.s32 0, %v720
    %v722 = vrot.slane %v717, %v721
    %v740 = vunpack.c.l.b16 %v701
    %v741 = vunpack.c.l.b16 %v702
    %v742 = vunpack.c.l.b16 %v703
    %v743 = vunpack.c.l.b16 %v704
    %v744 = vunpack.c.l.b16 %v705
    %v745 = vunpack.c.l.b16 %v706
    %v746 = vunpack.c.l.b16 %v707
    %v747 = vunpack.c.l.b16 %v708
    %v748 = vunpack.c.l.b16 %v709
    %v749 = vunpack.c.l.b16 %v710
    %v750 = vunpack.c.l.b16 %v711
    %v751 = vunpack.c.l.b16 %v712
    %v752 = vunpack.c.l.b16 %v713
    %v753 = vunpack.c.l.b16 %v714
    %v754 = vunpack.c.l.b16 %v715
    %v755 = vunpack.c.l.b16 %v716
    %v756 = vpack.c.b16 %v741, %v740
    %v757 = vpack.c.b16 %v743, %v742
    %v758 = vpack.c.b16 %v745, %v744
    %v759 = vpack.c.b16 %v747, %v746
    %v760 = vpack.c.b16 %v749, %v748
    %v761 = vpack.c.b16 %v751, %v750
    %v762 = vpack.c.b16 %v753, %v752
    %v763 = vpack.c.b16 %v755, %v754
    %772 = vmatprep.subr.bf16.mxu0 0
    %773 = vmatpush1.bf16.msra.mxu0 %v763
    %774 = vmatprep.subr.bf16.mxu0 0
    %775 = vmatpush1.bf16.msra.mxu0 %v762
    %776 = vmatprep.subr.bf16.mxu0 0
    %777 = vmatpush1.bf16.msra.mxu0 %v761
    %778 = vmatprep.subr.bf16.mxu0 0
    %779 = vmatpush1.bf16.msra.mxu0 %v760
    %780 = vmatprep.subr.bf16.mxu0 0
    %781 = vmatpush1.bf16.msra.mxu0 %v759
    %782 = vmatprep.subr.bf16.mxu0 0
    %783 = vmatpush1.bf16.msra.mxu0 %v758
    %784 = vmatprep.subr.bf16.mxu0 0
    %785 = vmatpush1.bf16.msra.mxu0 %v757
    %786 = vmatprep.subr.bf16.mxu0 0
    %787 = vmatpush1.bf16.msra.mxu0 %v756
    %788 = vmatprep.subr.bf16.mxu0 0
    %789 = vmatpush2.bf16.msra.mxu0 0
    %790 = vmatprep.subr.bf16.mxu0 0
    %791 = vmatpush2.bf16.msra.mxu0 0
    %792 = vmatprep.subr.bf16.mxu0 0
    %793 = vmatpush2.bf16.msra.mxu0 0
    %794 = vmatprep.subr.bf16.mxu0 0
    %795 = vmatpush2.bf16.msra.mxu0 0
    %796 = vmatprep.subr.bf16.mxu0 0
    %797 = vmatpush2.bf16.msra.mxu0 0
    %798 = vmatprep.subr.bf16.mxu0 0
    %799 = vmatpush2.bf16.msra.mxu0 0
    %800 = vmatprep.subr.bf16.mxu0 0
    %801 = vmatpush2.bf16.msra.mxu0 0
    %802 = vmatprep.subr.bf16.mxu0 0
    %803 = vmatpush2.bf16.msra.mxu0 0
    %804 = vmatprep.mubr.bf16.mxu0 0
    %805 = vmatmul.mubr.bf16.gmra.mxu0 %v693
    %v806 = vpop.f32.mrf.mxu0
    %v807 = vadd.f32 %v722, %v806
    %v808 = vpop.f32.mrf.mxu0
    %v809 = vpop.f32.mrf.mxu0
    %v810 = vadd.f32 %v722, %v809
    %v811 = vpop.f32.mrf.mxu0
    %812 = vmatprep.mubr.bf16.mxu0 0
    %813 = vmatmul.mubr.bf16.gmra.mxu0 %v694
    %v814 = vpop.f32.mrf.mxu0
    %v815 = vadd.f32 %v722, %v814
    %v816 = vpop.f32.mrf.mxu0
    %v817 = vpop.f32.mrf.mxu0
    %v818 = vadd.f32 %v722, %v817
    %v819 = vpop.f32.mrf.mxu0
    %820 = vmatprep.mubr.bf16.mxu0 0
    %821 = vmatmul.mubr.bf16.gmra.mxu0 %v695
    %v822 = vpop.f32.mrf.mxu0
    %v823 = vadd.f32 %v722, %v822
    %v824 = vpop.f32.mrf.mxu0
    %v825 = vpop.f32.mrf.mxu0
    %v826 = vadd.f32 %v722, %v825
    %v827 = vpop.f32.mrf.mxu0
    %828 = vmatprep.mubr.bf16.mxu0 0
    %829 = vmatmul.mubr.bf16.gmra.mxu0 %v696
    %v830 = vpop.f32.mrf.mxu0
    %v831 = vadd.f32 %v722, %v830
    %v832 = vpop.f32.mrf.mxu0
    %v833 = vpop.f32.mrf.mxu0
    %v834 = vadd.f32 %v722, %v833
    %v835 = vpop.f32.mrf.mxu0
    %836 = vmatprep.mubr.bf16.mxu0 0
    %837 = vmatmul.mubr.bf16.gmra.mxu0 %v697
    %v838 = vpop.f32.mrf.mxu0
    %v839 = vadd.f32 %v722, %v838
    %v840 = vpop.f32.mrf.mxu0
    %v841 = vpop.f32.mrf.mxu0
    %v842 = vadd.f32 %v722, %v841
    %v843 = vpop.f32.mrf.mxu0
    %844 = vmatprep.mubr.bf16.mxu0 0
    %845 = vmatmul.mubr.bf16.gmra.mxu0 %v698
    %v846 = vpop.f32.mrf.mxu0
    %v847 = vadd.f32 %v722, %v846
    %v848 = vpop.f32.mrf.mxu0
    %v849 = vpop.f32.mrf.mxu0
    %v850 = vadd.f32 %v722, %v849
    %v851 = vpop.f32.mrf.mxu0
    %852 = vmatprep.mubr.bf16.mxu0 0
    %853 = vmatmul.mubr.bf16.gmra.mxu0 %v699
    %v854 = vpop.f32.mrf.mxu0
    %v855 = vadd.f32 %v722, %v854
    %v856 = vpop.f32.mrf.mxu0
    %v857 = vpop.f32.mrf.mxu0
    %v858 = vadd.f32 %v722, %v857
    %v859 = vpop.f32.mrf.mxu0
    %860 = vmatprep.mubr.bf16.mxu0 0
    %861 = vmatmul.mubr.bf16.gmra.mxu0 %v700
    %v862 = vpop.f32.mrf.mxu0
    %v863 = vadd.f32 %v722, %v862
    %v864 = vpop.f32.mrf.mxu0
    %v865 = vpop.f32.mrf.mxu0
    %v866 = vadd.f32 %v722, %v865
    %v867 = vpop.f32.mrf.mxu0
    %868 = vdwg.mxu0
    %869 = vst [vmem:[%s5] sm:$0xff] %v807
    %870 = vst [vmem:[%s5 + $0x8] sm:$0xff] %v810
    %871 = vst [vmem:[%s5 + $0x10] sm:$0xff] %v815
    %872 = vst [vmem:[%s5 + $0x18] sm:$0xff] %v818
    %873 = vst [vmem:[%s5 + $0x20] sm:$0xff] %v823
    %874 = vst [vmem:[%s5 + $0x28] sm:$0xff] %v826
    %875 = vst [vmem:[%s5 + $0x30] sm:$0xff] %v831
    %876 = vst [vmem:[%s5 + $0x38] sm:$0xff] %v834
    %877 = vst [vmem:[%s5 + $0x40] sm:$0xff] %v839
    %878 = vst [vmem:[%s5 + $0x48] sm:$0xff] %v842
    %879 = vst [vmem:[%s5 + $0x50] sm:$0xff] %v847
    %880 = vst [vmem:[%s5 + $0x58] sm:$0xff] %v850
    %881 = vst [vmem:[%s5 + $0x60] sm:$0xff] %v855
    %882 = vst [vmem:[%s5 + $0x68] sm:$0xff] %v858
    %883 = vst [vmem:[%s5 + $0x70] sm:$0xff] %v863
    %884 = vst [vmem:[%s5 + $0x78] sm:$0xff] %v866
  $region29: #{_lambda_.6} parent=0 // pred_fallthru
    _
  // Predicated region
  $region30: #{_lambda_.6} parent=0 // pred_check
    _
  $region31: #{_lambda_.6} parent=0 // pred_check_branch
    %886 = sbr.rel (0) target = $region33
  $region32: #{_lambda_.6} parent=0 // pred_region
    _
  $region33: #{_lambda_.6} parent=0 // pred_fallthru
    _
  // Predicated region
  $region34: #{_lambda_.6} parent=0 // pred_check
    _
  $region35: #{_lambda_.6} parent=0 // pred_check_branch
    %888 = sbr.rel (0) target = $region37
  $region36: #{_lambda_.6} parent=0 // pred_region
    _
  $region37: #{_lambda_.6} parent=0 // pred_fallthru
    _

// kernel: _lambda_.7
$region0: #{_lambda_.7}
  #allocation0 [shape = 'u32[]', space=smem, size = 0x4, offset = 0x4, fixed_abs, tag = 'smem constant byte address 0x4 - core index']
  #allocation1 [shape = 'u32[144,128]{1,0:T(1,128)}', space=vmem, size = 0x12000, scoped, tag = 'internal scratch']
  %s0 = inlined_call_operand.vmem [shape: bf16[2,8,128], index: 0, kind: input, shape index: {}]
  %s1 = inlined_call_operand.vmem [shape: bf16[2,128,128], index: 1, kind: input, shape index: {}]
  %s2 = inlined_call_operand.vmem [shape: bf16[128,128], index: 2, kind: input, shape index: {}]
  %s3 = inlined_call_operand.vmem [shape: f32[1,128], index: 3, kind: input, shape index: {}]
  %s4 = inlined_call_operand.vmem [shape: bf16[128,128], index: 4, kind: input, shape index: {}]
  %s5 = inlined_call_operand.vmem [shape: f32[1,128], index: 5, kind: input, shape index: {}]
  %s6 = inlined_call_operand.vmem [shape: bf16[128,128], index: 6, kind: input, shape index: {}]
  %s7 = inlined_call_operand.vmem [shape: f32[1,128], index: 7, kind: input, shape index: {}]
  %s8 = inlined_call_operand.vmem [shape: f32[2,8,128], index: 8, kind: output, shape index: {}]
  %s9 = sld [smem:[#allocation0]]
  $region65: #{_lambda_.7} parent=0
    _
  %s11 = ssub.s32 1, %s9
  %s12 = scalar_select 0, %s11, %s9
  loop: start=0, step=1, limit=4
  $region2: #{_lambda_.7} parent=0 // loop_pre_header
    _
  $region3: #{_lambda_.7} parent=0 // loop_header
    %s14 = sphi 0, %s18
    %p15 = scmp.ge.s32.totalorder %s14, 4
    %s24 = sphi 0, %s26
    %s27 = sphi 0, %s24
    %s28 = sphi 0, %s27
    %s44 = sphi 0, %s28
    %s50 = sphi 0, %s52
    %s53 = sphi 0, %s50
    %s54 = sphi 0, %s53
    %s70 = sphi 0, %s54
    %s74 = sphi 0, %s74
    %s76 = sphi 0, %s74
    %s77 = sphi 0, %s76
    %s91 = sphi 0, %s77
    %s95 = sphi 0, %s95
    %s97 = sphi 0, %s95
    %s98 = sphi 0, %s97
    %s112 = sphi 0, %s98
    %s116 = sphi 0, %s116
    %s118 = sphi 0, %s116
    %s119 = sphi 0, %s118
    %s133 = sphi 0, %s119
    %s137 = sphi 0, %s137
    %s139 = sphi 0, %s137
    %s140 = sphi 0, %s139
    %s154 = sphi 0, %s140
    %s158 = sphi 0, %s158
    %s160 = sphi 0, %s158
    %s161 = sphi 0, %s160
    %s175 = sphi 0, %s161
    %s179 = sphi 0, %s179
    %s181 = sphi 0, %s179
    %s182 = sphi 0, %s181
    %s196 = sphi 0, %s182
    %s202 = sphi 0, %s204
    %s205 = sphi 0, %s202
    %s206 = sphi 0, %s205
    %s222 = sphi 0, %s206
  $region4: #{_lambda_.7} parent=0 // loop_header_branch
    %17 = sbr.rel (%p15) target = $region8
  $region5: #{_lambda_.7} parent=0 // loop_body
    %s19 = ssub.s32 %s14, 1
    %s20 = ssub.s32 %s14, 2
    %s21 = sadd.s32 %s14, 1
    %s22 = ssub.s32 %s14, %s21
    %p23 = scmp.eq.s32.totalorder %s22, 0
    %s25 = sadd.s32 %s24, 1
    %s26 = scalar_select %p23, %s24, %s25
    %p29 = pneg %p23
    %p30 = scmp.eq.s32.totalorder %s14, 1
    %p31 = por %p29, %p30
    %p32 = scmp.ne.s32.totalorder %s24, %s27
    %p33 = scmp.eq.s32.totalorder %s14, 0
    %p34 = por %p32, %p33
    %p35 = scmp.ne.s32.totalorder %s24, %s27
    %p36 = scmp.eq.s32.totalorder %s19, 1
    %p37 = por %p35, %p36
    %p38 = scmp.ne.s32.totalorder %s27, %s28
    %p39 = scmp.eq.s32.totalorder %s19, 0
    %p40 = por %p38, %p39
    %p41 = scmp.ne.s32.totalorder %s27, %s28
    %p42 = scmp.eq.s32.totalorder %s20, 1
    %p43 = por %p41, %p42
    %p45 = scmp.ne.s32.totalorder %s28, %s44
    %p46 = scmp.eq.s32.totalorder %s20, 0
    %p47 = por %p45, %p46
    %s48 = ssub.s32 %s14, %s21
    %p49 = scmp.eq.s32.totalorder %s48, 0
    %s51 = sadd.s32 %s50, 1
    %s52 = scalar_select %p49, %s50, %s51
    %p55 = pneg %p49
    %p56 = scmp.eq.s32.totalorder %s14, 1
    %p57 = por %p55, %p56
    %p58 = scmp.ne.s32.totalorder %s50, %s53
    %p59 = scmp.eq.s32.totalorder %s14, 0
    %p60 = por %p58, %p59
    %p61 = scmp.ne.s32.totalorder %s50, %s53
    %p62 = scmp.eq.s32.totalorder %s19, 1
    %p63 = por %p61, %p62
    %p64 = scmp.ne.s32.totalorder %s53, %s54
    %p65 = scmp.eq.s32.totalorder %s19, 0
    %p66 = por %p64, %p65
    %p67 = scmp.ne.s32.totalorder %s53, %s54
    %p68 = scmp.eq.s32.totalorder %s20, 1
    %p69 = por %p67, %p68
    %p71 = scmp.ne.s32.totalorder %s54, %s70
    %p72 = scmp.eq.s32.totalorder %s20, 0
    %p73 = por %p71, %p72
    %s75 = sadd.s32 %s74, 1
    %p78 = scmp.eq.s32.totalorder %s14, 1
    %p79 = scmp.ne.s32.totalorder %s74, %s76
    %p80 = scmp.eq.s32.totalorder %s14, 0
    %p81 = por %p79, %p80
    %p82 = scmp.ne.s32.totalorder %s74, %s76
    %p83 = scmp.eq.s32.totalorder %s19, 1
    %p84 = por %p82, %p83
    %p85 = scmp.ne.s32.totalorder %s76, %s77
    %p86 = scmp.eq.s32.totalorder %s19, 0
    %p87 = por %p85, %p86
    %p88 = scmp.ne.s32.totalorder %s76, %s77
    %p89 = scmp.eq.s32.totalorder %s20, 1
    %p90 = por %p88, %p89
    %p92 = scmp.ne.s32.totalorder %s77, %s91
    %p93 = scmp.eq.s32.totalorder %s20, 0
    %p94 = por %p92, %p93
    %s96 = sadd.s32 %s95, 1
    %p99 = scmp.eq.s32.totalorder %s14, 1
    %p100 = scmp.ne.s32.totalorder %s95, %s97
    %p101 = scmp.eq.s32.totalorder %s14, 0
    %p102 = por %p100, %p101
    %p103 = scmp.ne.s32.totalorder %s95, %s97
    %p104 = scmp.eq.s32.totalorder %s19, 1
    %p105 = por %p103, %p104
    %p106 = scmp.ne.s32.totalorder %s97, %s98
    %p107 = scmp.eq.s32.totalorder %s19, 0
    %p108 = por %p106, %p107
    %p109 = scmp.ne.s32.totalorder %s97, %s98
    %p110 = scmp.eq.s32.totalorder %s20, 1
    %p111 = por %p109, %p110
    %p113 = scmp.ne.s32.totalorder %s98, %s112
    %p114 = scmp.eq.s32.totalorder %s20, 0
    %p115 = por %p113, %p114
    %s117 = sadd.s32 %s116, 1
    %p120 = scmp.eq.s32.totalorder %s14, 1
    %p121 = scmp.ne.s32.totalorder %s116, %s118
    %p122 = scmp.eq.s32.totalorder %s14, 0
    %p123 = por %p121, %p122
    %p124 = scmp.ne.s32.totalorder %s116, %s118
    %p125 = scmp.eq.s32.totalorder %s19, 1
    %p126 = por %p124, %p125
    %p127 = scmp.ne.s32.totalorder %s118, %s119
    %p128 = scmp.eq.s32.totalorder %s19, 0
    %p129 = por %p127, %p128
    %p130 = scmp.ne.s32.totalorder %s118, %s119
    %p131 = scmp.eq.s32.totalorder %s20, 1
    %p132 = por %p130, %p131
    %p134 = scmp.ne.s32.totalorder %s119, %s133
    %p135 = scmp.eq.s32.totalorder %s20, 0
    %p136 = por %p134, %p135
    %s138 = sadd.s32 %s137, 1
    %p141 = scmp.eq.s32.totalorder %s14, 1
    %p142 = scmp.ne.s32.totalorder %s137, %s139
    %p143 = scmp.eq.s32.totalorder %s14, 0
    %p144 = por %p142, %p143
    %p145 = scmp.ne.s32.totalorder %s137, %s139
    %p146 = scmp.eq.s32.totalorder %s19, 1
    %p147 = por %p145, %p146
    %p148 = scmp.ne.s32.totalorder %s139, %s140
    %p149 = scmp.eq.s32.totalorder %s19, 0
    %p150 = por %p148, %p149
    %p151 = scmp.ne.s32.totalorder %s139, %s140
    %p152 = scmp.eq.s32.totalorder %s20, 1
    %p153 = por %p151, %p152
    %p155 = scmp.ne.s32.totalorder %s140, %s154
    %p156 = scmp.eq.s32.totalorder %s20, 0
    %p157 = por %p155, %p156
    %s159 = sadd.s32 %s158, 1
    %p162 = scmp.eq.s32.totalorder %s14, 1
    %p163 = scmp.ne.s32.totalorder %s158, %s160
    %p164 = scmp.eq.s32.totalorder %s14, 0
    %p165 = por %p163, %p164
    %p166 = scmp.ne.s32.totalorder %s158, %s160
    %p167 = scmp.eq.s32.totalorder %s19, 1
    %p168 = por %p166, %p167
    %p169 = scmp.ne.s32.totalorder %s160, %s161
    %p170 = scmp.eq.s32.totalorder %s19, 0
    %p171 = por %p169, %p170
    %p172 = scmp.ne.s32.totalorder %s160, %s161
    %p173 = scmp.eq.s32.totalorder %s20, 1
    %p174 = por %p172, %p173
    %p176 = scmp.ne.s32.totalorder %s161, %s175
    %p177 = scmp.eq.s32.totalorder %s20, 0
    %p178 = por %p176, %p177
    %s180 = sadd.s32 %s179, 1
    %p183 = scmp.eq.s32.totalorder %s14, 1
    %p184 = scmp.ne.s32.totalorder %s179, %s181
    %p185 = scmp.eq.s32.totalorder %s14, 0
    %p186 = por %p184, %p185
    %p187 = scmp.ne.s32.totalorder %s179, %s181
    %p188 = scmp.eq.s32.totalorder %s19, 1
    %p189 = por %p187, %p188
    %p190 = scmp.ne.s32.totalorder %s181, %s182
    %p191 = scmp.eq.s32.totalorder %s19, 0
    %p192 = por %p190, %p191
    %p193 = scmp.ne.s32.totalorder %s181, %s182
    %p194 = scmp.eq.s32.totalorder %s20, 1
    %p195 = por %p193, %p194
    %p197 = scmp.ne.s32.totalorder %s182, %s196
    %p198 = scmp.eq.s32.totalorder %s20, 0
    %p199 = por %p197, %p198
    %s200 = ssub.s32 %s14, %s21
    %p201 = scmp.eq.s32.totalorder %s200, 0
    %s203 = sadd.s32 %s202, 1
    %s204 = scalar_select %p201, %s202, %s203
    %p207 = pneg %p201
    %p208 = scmp.eq.s32.totalorder %s14, 1
    %p209 = por %p207, %p208
    %p210 = scmp.ne.s32.totalorder %s202, %s205
    %p211 = scmp.eq.s32.totalorder %s14, 0
    %p212 = por %p210, %p211
    %p213 = scmp.ne.s32.totalorder %s202, %s205
    %p214 = scmp.eq.s32.totalorder %s19, 1
    %p215 = por %p213, %p214
    %p216 = scmp.ne.s32.totalorder %s205, %s206
    %p217 = scmp.eq.s32.totalorder %s19, 0
    %p218 = por %p216, %p217
    %p219 = scmp.ne.s32.totalorder %s205, %s206
    %p220 = scmp.eq.s32.totalorder %s20, 1
    %p221 = por %p219, %p220
    %p223 = scmp.ne.s32.totalorder %s206, %s222
    %p224 = scmp.eq.s32.totalorder %s20, 0
    %p225 = por %p223, %p224
    %p226 = scmp.le.s32.totalorder 1, %s14
    %p227 = scmp.lt.s32.totalorder %s14, 3
    %p228 = pnand %p226, %p227
    %p229 = pneg %p228
    // Predicated region
    $region9: #{_lambda_.7} parent=5 // pred_check
      _
    $region10: #{_lambda_.7} parent=5 // pred_check_branch
      %231 = sbr.rel (%p228) target = $region12
    $region11: #{_lambda_.7} parent=5 // pred_region
      %s232 = ssub.s32 %s14, 1
      // Predicated region
      $region13: #{_lambda_.7} parent=11 // pred_check
        %p233 = pneg %p87
      $region14: #{_lambda_.7} parent=11 // pred_check_branch
        %235 = sbr.rel (%p233) target = $region16
      $region15: #{_lambda_.7} parent=11 // pred_region
        _
      $region16: #{_lambda_.7} parent=11 // pred_fallthru
        _
      // Predicated region
      $region17: #{_lambda_.7} parent=11 // pred_check
        %p236 = pneg %p108
      $region18: #{_lambda_.7} parent=11 // pred_check_branch
        %238 = sbr.rel (%p236) target = $region20
      $region19: #{_lambda_.7} parent=11 // pred_region
        _
      $region20: #{_lambda_.7} parent=11 // pred_fallthru
        _
      // Predicated region
      $region21: #{_lambda_.7} parent=11 // pred_check
        %p239 = pneg %p129
      $region22: #{_lambda_.7} parent=11 // pred_check_branch
        %241 = sbr.rel (%p239) target = $region24
      $region23: #{_lambda_.7} parent=11 // pred_region
        _
      $region24: #{_lambda_.7} parent=11 // pred_fallthru
        _
      // Predicated region
      $region25: #{_lambda_.7} parent=11 // pred_check
        %p242 = pneg %p150
      $region26: #{_lambda_.7} parent=11 // pred_check_branch
        %244 = sbr.rel (%p242) target = $region28
      $region27: #{_lambda_.7} parent=11 // pred_region
        _
      $region28: #{_lambda_.7} parent=11 // pred_fallthru
        _
      // Predicated region
      $region29: #{_lambda_.7} parent=11 // pred_check
        %p245 = pneg %p171
      $region30: #{_lambda_.7} parent=11 // pred_check_branch
        %247 = sbr.rel (%p245) target = $region32
      $region31: #{_lambda_.7} parent=11 // pred_region
        _
      $region32: #{_lambda_.7} parent=11 // pred_fallthru
        _
      // Predicated region
      $region33: #{_lambda_.7} parent=11 // pred_check
        %p248 = pneg %p192
      $region34: #{_lambda_.7} parent=11 // pred_check_branch
        %250 = sbr.rel (%p248) target = $region36
      $region35: #{_lambda_.7} parent=11 // pred_region
        _
      $region36: #{_lambda_.7} parent=11 // pred_fallthru
        _
    $region12: #{_lambda_.7} parent=5 // pred_fallthru
      _
    %p251 = scmp.lt.s32.totalorder %s14, 2
    // Predicated region
    $region37: #{_lambda_.7} parent=5 // pred_check
      %p252 = pneg %p251
    $region38: #{_lambda_.7} parent=5 // pred_check_branch
      %254 = sbr.rel (%p252) target = $region40
    $region39: #{_lambda_.7} parent=5 // pred_region
      // Predicated region
      $region41: #{_lambda_.7} parent=39 // pred_check
        %p255 = pneg %p34
      $region42: #{_lambda_.7} parent=39 // pred_check_branch
        %257 = sbr.rel (%p255) target = $region44
      $region43: #{_lambda_.7} parent=39 // pred_region
        %p258 = scmp.lt.s32.totalorder %s14, 1
        %s259 = scalar_select %p258, %s14, 1
        %s260 = smul.addr %s259, 4
        %s261 = scalar_lea.vmem %s0, %s260
      $region44: #{_lambda_.7} parent=39 // pred_fallthru
        _
      // Predicated region
      $region45: #{_lambda_.7} parent=39 // pred_check
        %p262 = pneg %p60
      $region46: #{_lambda_.7} parent=39 // pred_check_branch
        %264 = sbr.rel (%p262) target = $region48
      $region47: #{_lambda_.7} parent=39 // pred_region
        %p265 = scmp.lt.s32.totalorder %s14, 1
        %s266 = scalar_select %p265, %s14, 1
        %s267 = smul.addr %s266, 16
        %s268 = smul.addr %s267, 4
        %s269 = scalar_lea.vmem %s1, %s268
      $region48: #{_lambda_.7} parent=39 // pred_fallthru
        _
    $region40: #{_lambda_.7} parent=5 // pred_fallthru
      _
    %p270 = scmp.le.s32.totalorder 1, %s14
    %p271 = scmp.lt.s32.totalorder %s14, 3
    %p272 = pnand %p270, %p271
    %p273 = pneg %p272
    // Predicated region
    $region49: #{_lambda_.7} parent=5 // pred_check
      _
    $region50: #{_lambda_.7} parent=5 // pred_check_branch
      %275 = sbr.rel (%p272) target = $region52
    $region51: #{_lambda_.7} parent=5 // pred_region
      %s276 = ssub.s32 %s14, 1
      %p277 = scmp.lt.s32.totalorder %s19, 1
      %s278 = scalar_select %p277, %s19, 1
      %s279 = smul.addr %s278, 4
      %s280 = scalar_lea.vmem %s0, %s279
      %p281 = pneg %p40
      %p282 = pneg %p37
      %p283 = scmp.lt.s32.totalorder %s19, 1
      %s284 = scalar_select %p283, %s19, 1
      %s285 = smul.addr %s284, 16
      %s286 = smul.addr %s285, 4
      %s287 = scalar_lea.vmem %s1, %s286
      %p288 = pneg %p66
      %p289 = pneg %p63
      %p290 = pneg %p87
      %p291 = pneg %p84
      %p292 = pneg %p108
      %p293 = pneg %p105
      %p294 = pneg %p129
      %p295 = pneg %p126
      %p296 = pneg %p150
      %p297 = pneg %p147
      %p298 = pneg %p171
      %p299 = pneg %p168
      %p300 = pneg %p192
      %p301 = pneg %p189
      %p302 = pneg %p218
      %p303 = pneg %p215
      %p304 = scmp.lt.s32.totalorder %s19, 1
      %s305 = scalar_select %p304, %s19, 1
      %s306 = smul.addr %s305, 8
      %s307 = scalar_lea.vmem %s8, %s306
      %p308 = scmp.lt.s32.totalorder %s19, 1
      %s309 = scalar_select %p308, %s19, 1
      %s310 = smul.addr %s309, 4
      %s311 = scalar_lea.vmem %s0, %s310
      %p312 = scmp.lt.s32.totalorder %s19, 1
      %s313 = scalar_select %p312, %s19, 1
      %s314 = smul.addr %s313, 16
      %s315 = smul.addr %s314, 4
      %s316 = scalar_lea.vmem %s1, %s315
      %p317 = scmp.lt.s32.totalorder %s19, 1
      %s318 = scalar_select %p317, %s19, 1
      %s319 = smul.addr %s318, 8
      %s320 = scalar_lea.vmem %s8, %s319
      %v322 = vld [vmem:[%s311] sm:$0xf]
      %v323 = vld [vmem:[%s316] sm:$0xf]
      %v324 = vld [vmem:[%s316 + $0x4] sm:$0xf]
      %v325 = vld [vmem:[%s316 + $0x8] sm:$0xf]
      %v326 = vld [vmem:[%s316 + $0xc] sm:$0xf]
      %v327 = vld [vmem:[%s316 + $0x10] sm:$0xf]
      %v328 = vld [vmem:[%s316 + $0x14] sm:$0xf]
      %v329 = vld [vmem:[%s316 + $0x18] sm:$0xf]
      %v330 = vld [vmem:[%s316 + $0x1c] sm:$0xf]
      %v331 = vld [vmem:[%s316 + $0x20] sm:$0xf]
      %v332 = vld [vmem:[%s316 + $0x24] sm:$0xf]
      %v333 = vld [vmem:[%s316 + $0x28] sm:$0xf]
      %v334 = vld [vmem:[%s316 + $0x2c] sm:$0xf]
      %v335 = vld [vmem:[%s316 + $0x30] sm:$0xf]
      %v336 = vld [vmem:[%s316 + $0x34] sm:$0xf]
      %v337 = vld [vmem:[%s316 + $0x38] sm:$0xf]
      %v338 = vld [vmem:[%s316 + $0x3c] sm:$0xf]
      %v355 = vunpack.c.l.b16 %v323
      %v356 = vunpack.c.l.b16 %v324
      %v357 = vunpack.c.l.b16 %v325
      %v358 = vunpack.c.l.b16 %v326
      %v359 = vunpack.c.l.b16 %v327
      %v360 = vunpack.c.l.b16 %v328
      %v361 = vunpack.c.l.b16 %v329
      %v362 = vunpack.c.l.b16 %v330
      %v363 = vunpack.c.l.b16 %v331
      %v364 = vunpack.c.l.b16 %v332
      %v365 = vunpack.c.l.b16 %v333
      %v366 = vunpack.c.l.b16 %v334
      %v367 = vunpack.c.l.b16 %v335
      %v368 = vunpack.c.l.b16 %v336
      %v369 = vunpack.c.l.b16 %v337
      %v370 = vunpack.c.l.b16 %v338
      %v371 = vpack.c.b16 %v356, %v355
      %v372 = vpack.c.b16 %v358, %v357
      %v373 = vpack.c.b16 %v360, %v359
      %v374 = vpack.c.b16 %v362, %v361
      %v375 = vpack.c.b16 %v364, %v363
      %v376 = vpack.c.b16 %v366, %v365
      %v377 = vpack.c.b16 %v368, %v367
      %v378 = vpack.c.b16 %v370, %v369
      %387 = vmatprep.subr.bf16.mxu0 0
      %388 = vmatpush1.bf16.msra.mxu0 %v378
      %389 = vmatprep.subr.bf16.mxu0 0
      %390 = vmatpush1.bf16.msra.mxu0 %v377
      %391 = vmatprep.subr.bf16.mxu0 0
      %392 = vmatpush1.bf16.msra.mxu0 %v376
      %393 = vmatprep.subr.bf16.mxu0 0
      %394 = vmatpush1.bf16.msra.mxu0 %v375
      %395 = vmatprep.subr.bf16.mxu0 0
      %396 = vmatpush1.bf16.msra.mxu0 %v374
      %397 = vmatprep.subr.bf16.mxu0 0
      %398 = vmatpush1.bf16.msra.mxu0 %v373
      %399 = vmatprep.subr.bf16.mxu0 0
      %400 = vmatpush1.bf16.msra.mxu0 %v372
      %401 = vmatprep.subr.bf16.mxu0 0
      %402 = vmatpush1.bf16.msra.mxu0 %v371
      %403 = vmatprep.subr.bf16.mxu0 0
      %404 = vmatpush2.bf16.msra.mxu0 0
      %405 = vmatprep.subr.bf16.mxu0 0
      %406 = vmatpush2.bf16.msra.mxu0 0
      %407 = vmatprep.subr.bf16.mxu0 0
      %408 = vmatpush2.bf16.msra.mxu0 0
      %409 = vmatprep.subr.bf16.mxu0 0
      %410 = vmatpush2.bf16.msra.mxu0 0
      %411 = vmatprep.subr.bf16.mxu0 0
      %412 = vmatpush2.bf16.msra.mxu0 0
      %413 = vmatprep.subr.bf16.mxu0 0
      %414 = vmatpush2.bf16.msra.mxu0 0
      %415 = vmatprep.subr.bf16.mxu0 0
      %416 = vmatpush2.bf16.msra.mxu0 0
      %417 = vmatprep.subr.bf16.mxu0 0
      %418 = vmatpush2.bf16.msra.mxu0 0
      %419 = vmatprep.mubr.bf16.mxu0 0
      %420 = vmatmul.mubr.bf16.gmra.mxu0 %v322
      %v421 = vpop.f32.mrf.mxu0
      %v422 = vadd.f32 0.0, %v421
      %v423 = vpop.f32.mrf.mxu0
      %v424 = vpop.f32.mrf.mxu0
      %v425 = vpop.f32.mrf.mxu0
      %426 = vdwg.mxu0
      %v427 = vpack.c.bf16 %v422, %v422
      %v428 = vld [vmem:[%s2] sm:$0xf]
      %v429 = vld [vmem:[%s2 + $0x4] sm:$0xf]
      %v430 = vld [vmem:[%s2 + $0x8] sm:$0xf]
      %v431 = vld [vmem:[%s2 + $0xc] sm:$0xf]
      %v432 = vld [vmem:[%s2 + $0x10] sm:$0xf]
      %v433 = vld [vmem:[%s2 + $0x14] sm:$0xf]
      %v434 = vld [vmem:[%s2 + $0x18] sm:$0xf]
      %v435 = vld [vmem:[%s2 + $0x1c] sm:$0xf]
      %v436 = vld [vmem:[%s2 + $0x20] sm:$0xf]
      %v437 = vld [vmem:[%s2 + $0x24] sm:$0xf]
      %v438 = vld [vmem:[%s2 + $0x28] sm:$0xf]
      %v439 = vld [vmem:[%s2 + $0x2c] sm:$0xf]
      %v440 = vld [vmem:[%s2 + $0x30] sm:$0xf]
      %v441 = vld [vmem:[%s2 + $0x34] sm:$0xf]
      %v442 = vld [vmem:[%s2 + $0x38] sm:$0xf]
      %v443 = vld [vmem:[%s2 + $0x3c] sm:$0xf]
      %v444 = vld [vmem:[%s3] sm:$0x1]
      %v446 = vlaneseq
      %v447 = vshrl.u32 %v446, 7
      %v448 = vsub.s32 0, %v447
      %v449 = vrot.slane %v444, %v448
      %v467 = vunpack.c.l.b16 %v428
      %v468 = vunpack.c.l.b16 %v429
      %v469 = vunpack.c.l.b16 %v430
      %v470 = vunpack.c.l.b16 %v431
      %v471 = vunpack.c.l.b16 %v432
      %v472 = vunpack.c.l.b16 %v433
      %v473 = vunpack.c.l.b16 %v434
      %v474 = vunpack.c.l.b16 %v435
      %v475 = vunpack.c.l.b16 %v436
      %v476 = vunpack.c.l.b16 %v437
      %v477 = vunpack.c.l.b16 %v438
      %v478 = vunpack.c.l.b16 %v439
      %v479 = vunpack.c.l.b16 %v440
      %v480 = vunpack.c.l.b16 %v441
      %v481 = vunpack.c.l.b16 %v442
      %v482 = vunpack.c.l.b16 %v443
      %v483 = vpack.c.b16 %v468, %v467
      %v484 = vpack.c.b16 %v470, %v469
      %v485 = vpack.c.b16 %v472, %v471
      %v486 = vpack.c.b16 %v474, %v473
      %v487 = vpack.c.b16 %v476, %v475
      %v488 = vpack.c.b16 %v478, %v477
      %v489 = vpack.c.b16 %v480, %v479
      %v490 = vpack.c.b16 %v482, %v481
      %499 = vmatprep.subr.bf16.mxu0 0
      %500 = vmatpush1.bf16.msra.mxu0 %v490
      %501 = vmatprep.subr.bf16.mxu0 0
      %502 = vmatpush1.bf16.msra.mxu0 %v489
      %503 = vmatprep.subr.bf16.mxu0 0
      %504 = vmatpush1.bf16.msra.mxu0 %v488
      %505 = vmatprep.subr.bf16.mxu0 0
      %506 = vmatpush1.bf16.msra.mxu0 %v487
      %507 = vmatprep.subr.bf16.mxu0 0
      %508 = vmatpush1.bf16.msra.mxu0 %v486
      %509 = vmatprep.subr.bf16.mxu0 0
      %510 = vmatpush1.bf16.msra.mxu0 %v485
      %511 = vmatprep.subr.bf16.mxu0 0
      %512 = vmatpush1.bf16.msra.mxu0 %v484
      %513 = vmatprep.subr.bf16.mxu0 0
      %514 = vmatpush1.bf16.msra.mxu0 %v483
      %515 = vmatprep.subr.bf16.mxu0 0
      %516 = vmatpush2.bf16.msra.mxu0 0
      %517 = vmatprep.subr.bf16.mxu0 0
      %518 = vmatpush2.bf16.msra.mxu0 0
      %519 = vmatprep.subr.bf16.mxu0 0
      %520 = vmatpush2.bf16.msra.mxu0 0
      %521 = vmatprep.subr.bf16.mxu0 0
      %522 = vmatpush2.bf16.msra.mxu0 0
      %523 = vmatprep.subr.bf16.mxu0 0
      %524 = vmatpush2.bf16.msra.mxu0 0
      %525 = vmatprep.subr.bf16.mxu0 0
      %526 = vmatpush2.bf16.msra.mxu0 0
      %527 = vmatprep.subr.bf16.mxu0 0
      %528 = vmatpush2.bf16.msra.mxu0 0
      %529 = vmatprep.subr.bf16.mxu0 0
      %530 = vmatpush2.bf16.msra.mxu0 0
      %531 = vmatprep.mubr.bf16.mxu0 0
      %532 = vmatmul.mubr.bf16.gmra.mxu0 %v427
      %v533 = vpop.f32.mrf.mxu0
      %v534 = vadd.f32 %v449, %v533
      %v535 = vpop.f32.mrf.mxu0
      %v536 = vpop.f32.mrf.mxu0
      %v537 = vpop.f32.mrf.mxu0
      %538 = vdwg.mxu0
      %v539 = vmax.f32 %v534, 0.0
      %v540 = vpack.c.bf16 %v539, %v539
      %v541 = vld [vmem:[%s4] sm:$0xf]
      %v542 = vld [vmem:[%s4 + $0x4] sm:$0xf]
      %v543 = vld [vmem:[%s4 + $0x8] sm:$0xf]
      %v544 = vld [vmem:[%s4 + $0xc] sm:$0xf]
      %v545 = vld [vmem:[%s4 + $0x10] sm:$0xf]
      %v546 = vld [vmem:[%s4 + $0x14] sm:$0xf]
      %v547 = vld [vmem:[%s4 + $0x18] sm:$0xf]
      %v548 = vld [vmem:[%s4 + $0x1c] sm:$0xf]
      %v549 = vld [vmem:[%s4 + $0x20] sm:$0xf]
      %v550 = vld [vmem:[%s4 + $0x24] sm:$0xf]
      %v551 = vld [vmem:[%s4 + $0x28] sm:$0xf]
      %v552 = vld [vmem:[%s4 + $0x2c] sm:$0xf]
      %v553 = vld [vmem:[%s4 + $0x30] sm:$0xf]
      %v554 = vld [vmem:[%s4 + $0x34] sm:$0xf]
      %v555 = vld [vmem:[%s4 + $0x38] sm:$0xf]
      %v556 = vld [vmem:[%s4 + $0x3c] sm:$0xf]
      %v557 = vld [vmem:[%s5] sm:$0x1]
      %v559 = vlaneseq
      %v560 = vshrl.u32 %v559, 7
      %v561 = vsub.s32 0, %v560
      %v562 = vrot.slane %v557, %v561
      %v580 = vunpack.c.l.b16 %v541
      %v581 = vunpack.c.l.b16 %v542
      %v582 = vunpack.c.l.b16 %v543
      %v583 = vunpack.c.l.b16 %v544
      %v584 = vunpack.c.l.b16 %v545
      %v585 = vunpack.c.l.b16 %v546
      %v586 = vunpack.c.l.b16 %v547
      %v587 = vunpack.c.l.b16 %v548
      %v588 = vunpack.c.l.b16 %v549
      %v589 = vunpack.c.l.b16 %v550
      %v590 = vunpack.c.l.b16 %v551
      %v591 = vunpack.c.l.b16 %v552
      %v592 = vunpack.c.l.b16 %v553
      %v593 = vunpack.c.l.b16 %v554
      %v594 = vunpack.c.l.b16 %v555
      %v595 = vunpack.c.l.b16 %v556
      %v596 = vpack.c.b16 %v581, %v580
      %v597 = vpack.c.b16 %v583, %v582
      %v598 = vpack.c.b16 %v585, %v584
      %v599 = vpack.c.b16 %v587, %v586
      %v600 = vpack.c.b16 %v589, %v588
      %v601 = vpack.c.b16 %v591, %v590
      %v602 = vpack.c.b16 %v593, %v592
      %v603 = vpack.c.b16 %v595, %v594
      %612 = vmatprep.subr.bf16.mxu0 0
      %613 = vmatpush1.bf16.msra.mxu0 %v603
      %614 = vmatprep.subr.bf16.mxu0 0
      %615 = vmatpush1.bf16.msra.mxu0 %v602
      %616 = vmatprep.subr.bf16.mxu0 0
      %617 = vmatpush1.bf16.msra.mxu0 %v601
      %618 = vmatprep.subr.bf16.mxu0 0
      %619 = vmatpush1.bf16.msra.mxu0 %v600
      %620 = vmatprep.subr.bf16.mxu0 0
      %621 = vmatpush1.bf16.msra.mxu0 %v599
      %622 = vmatprep.subr.bf16.mxu0 0
      %623 = vmatpush1.bf16.msra.mxu0 %v598
      %624 = vmatprep.subr.bf16.mxu0 0
      %625 = vmatpush1.bf16.msra.mxu0 %v597
      %626 = vmatprep.subr.bf16.mxu0 0
      %627 = vmatpush1.bf16.msra.mxu0 %v596
      %628 = vmatprep.subr.bf16.mxu0 0
      %629 = vmatpush2.bf16.msra.mxu0 0
      %630 = vmatprep.subr.bf16.mxu0 0
      %631 = vmatpush2.bf16.msra.mxu0 0
      %632 = vmatprep.subr.bf16.mxu0 0
      %633 = vmatpush2.bf16.msra.mxu0 0
      %634 = vmatprep.subr.bf16.mxu0 0
      %635 = vmatpush2.bf16.msra.mxu0 0
      %636 = vmatprep.subr.bf16.mxu0 0
      %637 = vmatpush2.bf16.msra.mxu0 0
      %638 = vmatprep.subr.bf16.mxu0 0
      %639 = vmatpush2.bf16.msra.mxu0 0
      %640 = vmatprep.subr.bf16.mxu0 0
      %641 = vmatpush2.bf16.msra.mxu0 0
      %642 = vmatprep.subr.bf16.mxu0 0
      %643 = vmatpush2.bf16.msra.mxu0 0
      %644 = vmatprep.mubr.bf16.mxu0 0
      %645 = vmatmul.mubr.bf16.gmra.mxu0 %v540
      %v646 = vpop.f32.mrf.mxu0
      %v647 = vadd.f32 %v562, %v646
      %v648 = vpop.f32.mrf.mxu0
      %v649 = vpop.f32.mrf.mxu0
      %v650 = vpop.f32.mrf.mxu0
      %651 = vdwg.mxu0
      %v652 = vmax.f32 %v647, 0.0
      %v653 = vpack.c.bf16 %v652, %v652
      %v654 = vld [vmem:[%s6] sm:$0xf]
      %v655 = vld [vmem:[%s6 + $0x4] sm:$0xf]
      %v656 = vld [vmem:[%s6 + $0x8] sm:$0xf]
      %v657 = vld [vmem:[%s6 + $0xc] sm:$0xf]
      %v658 = vld [vmem:[%s6 + $0x10] sm:$0xf]
      %v659 = vld [vmem:[%s6 + $0x14] sm:$0xf]
      %v660 = vld [vmem:[%s6 + $0x18] sm:$0xf]
      %v661 = vld [vmem:[%s6 + $0x1c] sm:$0xf]
      %v662 = vld [vmem:[%s6 + $0x20] sm:$0xf]
      %v663 = vld [vmem:[%s6 + $0x24] sm:$0xf]
      %v664 = vld [vmem:[%s6 + $0x28] sm:$0xf]
      %v665 = vld [vmem:[%s6 + $0x2c] sm:$0xf]
      %v666 = vld [vmem:[%s6 + $0x30] sm:$0xf]
      %v667 = vld [vmem:[%s6 + $0x34] sm:$0xf]
      %v668 = vld [vmem:[%s6 + $0x38] sm:$0xf]
      %v669 = vld [vmem:[%s6 + $0x3c] sm:$0xf]
      %v670 = vld [vmem:[%s7] sm:$0x1]
      %v672 = vlaneseq
      %v673 = vshrl.u32 %v672, 7
      %v674 = vsub.s32 0, %v673
      %v675 = vrot.slane %v670, %v674
      %v693 = vunpack.c.l.b16 %v654
      %v694 = vunpack.c.l.b16 %v655
      %v695 = vunpack.c.l.b16 %v656
      %v696 = vunpack.c.l.b16 %v657
      %v697 = vunpack.c.l.b16 %v658
      %v698 = vunpack.c.l.b16 %v659
      %v699 = vunpack.c.l.b16 %v660
      %v700 = vunpack.c.l.b16 %v661
      %v701 = vunpack.c.l.b16 %v662
      %v702 = vunpack.c.l.b16 %v663
      %v703 = vunpack.c.l.b16 %v664
      %v704 = vunpack.c.l.b16 %v665
      %v705 = vunpack.c.l.b16 %v666
      %v706 = vunpack.c.l.b16 %v667
      %v707 = vunpack.c.l.b16 %v668
      %v708 = vunpack.c.l.b16 %v669
      %v709 = vpack.c.b16 %v694, %v693
      %v710 = vpack.c.b16 %v696, %v695
      %v711 = vpack.c.b16 %v698, %v697
      %v712 = vpack.c.b16 %v700, %v699
      %v713 = vpack.c.b16 %v702, %v701
      %v714 = vpack.c.b16 %v704, %v703
      %v715 = vpack.c.b16 %v706, %v705
      %v716 = vpack.c.b16 %v708, %v707
      %725 = vmatprep.subr.bf16.mxu0 0
      %726 = vmatpush1.bf16.msra.mxu0 %v716
      %727 = vmatprep.subr.bf16.mxu0 0
      %728 = vmatpush1.bf16.msra.mxu0 %v715
      %729 = vmatprep.subr.bf16.mxu0 0
      %730 = vmatpush1.bf16.msra.mxu0 %v714
      %731 = vmatprep.subr.bf16.mxu0 0
      %732 = vmatpush1.bf16.msra.mxu0 %v713
      %733 = vmatprep.subr.bf16.mxu0 0
      %734 = vmatpush1.bf16.msra.mxu0 %v712
      %735 = vmatprep.subr.bf16.mxu0 0
      %736 = vmatpush1.bf16.msra.mxu0 %v711
      %737 = vmatprep.subr.bf16.mxu0 0
      %738 = vmatpush1.bf16.msra.mxu0 %v710
      %739 = vmatprep.subr.bf16.mxu0 0
      %740 = vmatpush1.bf16.msra.mxu0 %v709
      %741 = vmatprep.subr.bf16.mxu0 0
      %742 = vmatpush2.bf16.msra.mxu0 0
      %743 = vmatprep.subr.bf16.mxu0 0
      %744 = vmatpush2.bf16.msra.mxu0 0
      %745 = vmatprep.subr.bf16.mxu0 0
      %746 = vmatpush2.bf16.msra.mxu0 0
      %747 = vmatprep.subr.bf16.mxu0 0
      %748 = vmatpush2.bf16.msra.mxu0 0
      %749 = vmatprep.subr.bf16.mxu0 0
      %750 = vmatpush2.bf16.msra.mxu0 0
      %751 = vmatprep.subr.bf16.mxu0 0
      %752 = vmatpush2.bf16.msra.mxu0 0
      %753 = vmatprep.subr.bf16.mxu0 0
      %754 = vmatpush2.bf16.msra.mxu0 0
      %755 = vmatprep.subr.bf16.mxu0 0
      %756 = vmatpush2.bf16.msra.mxu0 0
      %757 = vmatprep.mubr.bf16.mxu0 0
      %758 = vmatmul.mubr.bf16.gmra.mxu0 %v653
      %v759 = vpop.f32.mrf.mxu0
      %v760 = vadd.f32 %v675, %v759
      %v761 = vpop.f32.mrf.mxu0
      %v762 = vpop.f32.mrf.mxu0
      %v763 = vpop.f32.mrf.mxu0
      %764 = vdwg.mxu0
      %765 = vst [vmem:[%s320] sm:$0xff] %v760
      %p766 = scmp.lt.s32.totalorder %s19, 1
      %s767 = scalar_select %p766, %s19, 1
      %s768 = smul.addr %s767, 8
      %s769 = scalar_lea.vmem %s8, %s768
      // Predicated region
      $region53: #{_lambda_.7} parent=51 // pred_check
        %p770 = pneg %p215
      $region54: #{_lambda_.7} parent=51 // pred_check_branch
        %772 = sbr.rel (%p770) target = $region56
      $region55: #{_lambda_.7} parent=51 // pred_region
        _
      $region56: #{_lambda_.7} parent=51 // pred_fallthru
        _
    $region52: #{_lambda_.7} parent=5 // pred_fallthru
      _
    %p773 = scmp.le.s32.totalorder 2, %s14
    // Predicated region
    $region57: #{_lambda_.7} parent=5 // pred_check
      %p774 = pneg %p773
    $region58: #{_lambda_.7} parent=5 // pred_check_branch
      %776 = sbr.rel (%p774) target = $region60
    $region59: #{_lambda_.7} parent=5 // pred_region
      %s777 = ssub.s32 %s14, 2
      // Predicated region
      $region61: #{_lambda_.7} parent=59 // pred_check
        %p778 = pneg %p221
      $region62: #{_lambda_.7} parent=59 // pred_check_branch
        %780 = sbr.rel (%p778) target = $region64
      $region63: #{_lambda_.7} parent=59 // pred_region
        %p781 = scmp.lt.s32.totalorder %s20, 1
        %s782 = scalar_select %p781, %s20, 1
        %s783 = smul.addr %s782, 8
        %s784 = scalar_lea.vmem %s8, %s783
      $region64: #{_lambda_.7} parent=59 // pred_fallthru
        _
    $region60: #{_lambda_.7} parent=5 // pred_fallthru
      _
  $region6: #{_lambda_.7} parent=0 // loop_footer
    %s18 = sadd.s32 1, %s14
  $region7: #{_lambda_.7} parent=0 // loop_footer_branch
    %13 = sbr.rel target = $region3
  $region8: #{_lambda_.7} parent=0 // loop_exit
    _

</llo_original>
